<compile_context>
chip_gen: v7x
topology: tpu7x:2x2x1
jax: 0.10.0
libtpu: 0.0.40
codegen_flags: <defaults>
</compile_context>

<pallas_src>
from functools import partial

import jax
import jax.numpy as jnp
from jax import lax
from jax.experimental import pallas as pl
from jax.experimental.pallas import tpu as pltpu


# ----------------------------------------------------------------------------
# Single fused kernel: gather -> layer_size x (wide conv + tanh -> attention
# -> w-ap pooling) -> all-AP -> linear head, for the WHOLE batch.
# ----------------------------------------------------------------------------
def _abcnn2_fused_kernel(idx1_ref, idx2_ref,        # SMEM int32 (B,l1),(B,l2)
                         tbl1_ref, tbl2_ref,        # VMEM (n_drug,1,E),(n_prot,1,E)
                         wm_ref, bm_ref,            # (layers*width,2E,2E),(layers,1,2E)
                         band1_ref, band2_ref,      # (l1,l1c),(l2,l2c)
                         w1_ref, w2_ref, fb_ref,    # (E,2),(E,2),(1,2)
                         o_ref,                     # (B,2)
                         *, batch, width, layer_size, l1, l2):
    e = w1_ref.shape[0]
    two_e = 2 * e
    l1c, l2c = l1 + width - 1, l2 + width - 1       # wide-conv output lengths
    lmax = max(l1, l2)
    lc = lmax + width - 1                           # merged conv-output rows / batch
    lp = lmax + 2 * (width - 1)                     # merged padded rows / batch
    n_out = (batch - 1) * lp + lc                   # rows of the batch-stacked conv

    # --- 1. embedding gather, fused in-kernel ------------------------------
    # Indices live in SMEM; tables are VMEM-resident with rows on the leading
    # dim, so each gather is a dynamic leading-dim row load.  The per-batch
    # blocks put the drug tower in lanes [0,E) and the protein tower in lanes
    # [E,2E); rows beyond each sequence length are zero.
    def gather_block(tbl_ref, idx_ref, b, length):
        rows = [tbl_ref[idx_ref[b, j]] for j in range(length)]      # (1, E) each
        if lmax > length:
            rows.append(jnp.zeros((lmax - length, e), jnp.float32))
        return jnp.concatenate(rows, axis=0)                        # (lmax, E)

    xblks = [
        jnp.concatenate([gather_block(tbl1_ref, idx1_ref, b, l1),
                         gather_block(tbl2_ref, idx2_ref, b, l2)], axis=-1)
        for b in range(batch)                                       # (lmax, 2E)
    ]

    zpad = jnp.zeros((width - 1, two_e), jnp.float32)
    p1_rows = [None] * batch
    p2_rows = [None] * batch

    for li in range(layer_size):
        # --- 2. wide conv + tanh, towers AND batch merged ------------------
        # Zero padding is value-level concatenation (no pad matmul); the conv
        # is `width` block-diagonal (n_out,2E)x(2E,2E) matmuls for the whole
        # batch + both towers (5 MXU pushes/layer instead of width*2*B = 20).
        parts = []
        for b in range(batch):
            parts += [zpad, xblks[b], zpad]
        xp_all = jnp.concatenate(parts, axis=0)                     # (B*lp, 2E)

        acc = jnp.zeros((n_out, two_e), jnp.float32)
        for k in range(width):
            acc = acc + jnp.dot(xp_all[k:k + n_out, :], wm_ref[li * width + k],
                                preferred_element_type=jnp.float32)
        conv = jnp.tanh(acc + bm_ref[li])                           # (n_out, 2E)

        for b in range(batch):
            base = b * lp
            c1 = conv[base:base + l1c, 0:e]                         # (l1c, E)
            c2 = conv[base:base + l2c, e:two_e]                     # (l2c, E)

            # --- 3. match-score attention, both orientations ---------------
            # A_ij = 1/(1+||c1_i-c2_j||).  Augmented operands give the squared
            # distance matrix in one matmul per orientation, so the attention
            # sums for BOTH towers are lane-direction reductions (no (1,l) ->
            # (l,1) transpose, no sublane reduce).
            sq1 = jnp.sum(c1 * c1, axis=-1, keepdims=True)          # (l1c,1)
            sq2 = jnp.sum(c2 * c2, axis=-1, keepdims=True)          # (l2c,1)
            one1 = jnp.ones((l1c, 1), jnp.float32)
            one2 = jnp.ones((l2c, 1), jnp.float32)
            d12 = lax.dot_general(
                jnp.concatenate([-2.0 * c1, sq1, one1], axis=-1),
                jnp.concatenate([c2, one2, sq2], axis=-1),
                (((1,), (1,)), ((), ())),
                preferred_element_type=jnp.float32)                 # (l1c,l2c)
            d21 = lax.dot_general(
                jnp.concatenate([-2.0 * c2, sq2, one2], axis=-1),
                jnp.concatenate([c1, one1, sq1], axis=-1),
                (((1,), (1,)), ((), ())),
                preferred_element_type=jnp.float32)                 # (l2c,l1c)
            # approx=True: EUP slot has slack; ~1e-3 rel error vs exact 1/x.
            attn12 = pl.reciprocal(1.0 + jnp.sqrt(jnp.maximum(d12, 0.0)),
                                   approx=True)
            attn21 = pl.reciprocal(1.0 + jnp.sqrt(jnp.maximum(d21, 0.0)),
                                   approx=True)
            a1 = jnp.sum(attn12, axis=-1, keepdims=True)            # (l1c,1)
            a2 = jnp.sum(attn21, axis=-1, keepdims=True)            # (l2c,1)

            # --- 4. width-w attention-weighted sum pooling (banded matmul) --
            x1n = jnp.dot(band1_ref[...], c1 * a1,
                          preferred_element_type=jnp.float32)       # (l1, E)
            x2n = jnp.dot(band2_ref[...], c2 * a2,
                          preferred_element_type=jnp.float32)       # (l2, E)

            if li + 1 < layer_size:
                # re-pack into the merged (lmax, 2E) block for the next layer
                x1b = x1n if l1 == lmax else jnp.concatenate(
                    [x1n, jnp.zeros((lmax - l1, e), jnp.float32)], axis=0)
                x2b = x2n if l2 == lmax else jnp.concatenate(
                    [x2n, jnp.zeros((lmax - l2, e), jnp.float32)], axis=0)
                xblks[b] = jnp.concatenate([x1b, x2b], axis=-1)
            else:
                # --- 5. AllAP: mean over the sequence ------------------------
                p1_rows[b] = jnp.mean(x1n, axis=0, keepdims=True)   # (1, E)
                p2_rows[b] = jnp.mean(x2n, axis=0, keepdims=True)   # (1, E)

    # --- 6. linear head for the whole batch, single output store -----------
    # fc weight pre-split at init so cat(p1, p2) @ W is two matmuls.
    p1 = jnp.concatenate(p1_rows, axis=0)                           # (B, E)
    p2 = jnp.concatenate(p2_rows, axis=0)                           # (B, E)
    o_ref[...] = (jnp.dot(p1, w1_ref[...], preferred_element_type=jnp.float32)
                  + jnp.dot(p2, w2_ref[...], preferred_element_type=jnp.float32)
                  + fb_ref[...])


# ----------------------------------------------------------------------------
# Forward pass: exactly one pallas_call, no surrounding XLA glue ops.
# ----------------------------------------------------------------------------
def model_forward(params, drug_idx, protein_idx, *, filter_width, layer_size):
    """drug_idx: (B, drug_len) int32, protein_idx: (B, protein_len) int32."""
    B, l1 = drug_idx.shape
    _, l2 = protein_idx.shape

    kernel = partial(_abcnn2_fused_kernel, batch=B, width=filter_width,
                     layer_size=layer_size, l1=l1, l2=l2)

    smem_spec = pl.BlockSpec(memory_space=pltpu.MemorySpace.SMEM)

    def vmem_full(a):
        n = a.ndim
        return pl.BlockSpec(a.shape, lambda i, _n=n: (0,) * _n)

    args = (drug_idx, protein_idx,
            params["embd_drug"], params["embd_protein"],
            params["conv_w"], params["conv_b"],
            params["band_drug"], params["band_protein"],
            params["fc_w1"], params["fc_w2"], params["fc_b"])

    in_specs = [smem_spec, smem_spec] + [vmem_full(a) for a in args[2:]]

    return pl.pallas_call(
        kernel,
        out_shape=jax.ShapeDtypeStruct((B, 2), jnp.float32),
        grid=(1,),
        in_specs=in_specs,
        out_specs=pl.BlockSpec((B, 2), lambda i: (0, 0)),
        compiler_params=pltpu.CompilerParams(
            # Single grid step; at larger B reintroduce a batch axis and mark
            # it CORE_PARALLEL for v7x.  Working set (<2 MiB) is far below the
            # default scoped-VMEM limit on all generations.
            dimension_semantics=("arbitrary",),
        ),
    )(*args)


# ----------------------------------------------------------------------------
# Params: all weight munging done ONCE here (nothing per forward call).
# ----------------------------------------------------------------------------
def init_params(key, *, drug_length, protein_length, n_drug, n_protein,
                embd_dim, filter_width, layer_size):
    E, w = embd_dim, filter_width
    ks = jax.random.split(key, 8)
    scale = 0.1

    # Per-tower conv weights in (layer, tap, E_in, E_out) layout, merged once
    # into a block-diagonal (layer*tap, 2E, 2E) form so both towers share one
    # MXU push per tap inside the kernel.
    # TODO(synk): porting real PyTorch Conv2d(1,E,(w,E)) weights (E_out,1,w,E_in)
    # requires transposing into this (tap, E_in, E_out) layout first.
    wc = scale * jax.random.normal(ks[2], (layer_size, w, E, E), jnp.float32)
    wp = scale * jax.random.normal(ks[4], (layer_size, w, E, E), jnp.float32)
    wm = jnp.zeros((layer_size, w, 2 * E, 2 * E), jnp.float32)
    wm = wm.at[:, :, :E, :E].set(wc).at[:, :, E:, E:].set(wp)
    bc = scale * jax.random.normal(ks[3], (layer_size, 1, E), jnp.float32)
    bp = scale * jax.random.normal(ks[5], (layer_size, 1, E), jnp.float32)

    def band(l_out, l_in):
        # row j has ones in columns j .. j+w-1 (w-ap window sum as one matmul)
        r = jnp.arange(l_out)[:, None]
        c = jnp.arange(l_in)[None, :]
        return ((c >= r) & (c < r + w)).astype(jnp.float32)

    fc_w = scale * jax.random.normal(ks[6], (2 * E, 2), jnp.float32)

    return {
        # Embedding tables stored (N, 1, E): in-kernel row gathers index the
        # leading dim directly.
        "embd_drug": scale * jax.random.normal(ks[0], (n_drug, 1, E), jnp.float32),
        "embd_protein": scale * jax.random.normal(ks[1], (n_protein, 1, E), jnp.float32),
        "conv_w": wm.reshape(layer_size * w, 2 * E, 2 * E),
        "conv_b": jnp.concatenate([bc, bp], axis=-1),        # (layer, 1, 2E)
        "band_drug": band(drug_length, drug_length + w - 1),
        "band_protein": band(protein_length, protein_length + w - 1),
        "fc_w1": fc_w[:E],                                   # (E, 2)
        "fc_w2": fc_w[E:],                                   # (E, 2)
        "fc_b": scale * jax.random.normal(ks[7], (1, 2), jnp.float32),
    }


if __name__ == "__main__":
    # Small, module-consistent shapes.
    batch = 2
    drug_length, protein_length = 12, 16
    n_drug, n_protein = 64, 25
    embd_dim, filter_width, layer_size = 20, 5, 1

    key = jax.random.PRNGKey(0)
    k_p, k_d, k_pr = jax.random.split(key, 3)

    params = init_params(
        k_p, drug_length=drug_length, protein_length=protein_length,
        n_drug=n_drug, n_protein=n_protein, embd_dim=embd_dim,
        filter_width=filter_width, layer_size=layer_size)

    drug = jax.random.randint(k_d, (batch, drug_length), 0, n_drug, dtype=jnp.int32)
    protein = jax.random.randint(k_pr, (batch, protein_length), 0, n_protein,
                                 dtype=jnp.int32)

    logits = model_forward(params, drug, protein,
                           filter_width=filter_width, layer_size=layer_size)
    logits = jax.block_until_ready(logits)
    assert logits.shape == (batch, 2), logits.shape
    assert bool(jnp.all(jnp.isfinite(logits)))
    print("KERNEL_OK")
</pallas_src>

<mosaic_0001>
module attributes {stable_mosaic.version = 11 : i64} {
  func.func @_abcnn2_fused_kernel(%arg0: i32, %arg1: memref<2x12xi32, #tpu.memory_space<smem>>, %arg2: memref<2x16xi32, #tpu.memory_space<smem>>, %arg3: memref<64x1x20xf32, #tpu.memory_space<vmem>>, %arg4: memref<25x1x20xf32, #tpu.memory_space<vmem>>, %arg5: memref<5x40x40xf32, #tpu.memory_space<vmem>>, %arg6: memref<1x1x40xf32, #tpu.memory_space<vmem>>, %arg7: memref<12x16xf32, #tpu.memory_space<vmem>>, %arg8: memref<16x20xf32, #tpu.memory_space<vmem>>, %arg9: memref<20x2xf32, #tpu.memory_space<vmem>>, %arg10: memref<20x2xf32, #tpu.memory_space<vmem>>, %arg11: memref<1x2xf32, #tpu.memory_space<vmem>>, %arg12: memref<2x2xf32, #tpu.memory_space<vmem>>) attributes {dimension_semantics = [#tpu.dimension_semantics<arbitrary>], iteration_bounds = array<i64: 1>, scalar_prefetch = 0 : i64, scratch_operands = 0 : i64, tpu.core_type = #tpu.core_type<tc>, window_params = [{transform_indices = @transform_0, window_bounds = array<i64: 2, 12>}, {transform_indices = @transform_1, window_bounds = array<i64: 2, 16>}, {pipeline_mode = #tpu.pipeline_mode<synchronous>, transform_indices = @transform_2, window_bounds = array<i64: 64, 1, 20>}, {pipeline_mode = #tpu.pipeline_mode<synchronous>, transform_indices = @transform_3, window_bounds = array<i64: 25, 1, 20>}, {pipeline_mode = #tpu.pipeline_mode<synchronous>, transform_indices = @transform_4, window_bounds = array<i64: 5, 40, 40>}, {pipeline_mode = #tpu.pipeline_mode<synchronous>, transform_indices = @transform_5, window_bounds = array<i64: 1, 1, 40>}, {pipeline_mode = #tpu.pipeline_mode<synchronous>, transform_indices = @transform_6, window_bounds = array<i64: 12, 16>}, {pipeline_mode = #tpu.pipeline_mode<synchronous>, transform_indices = @transform_7, window_bounds = array<i64: 16, 20>}, {pipeline_mode = #tpu.pipeline_mode<synchronous>, transform_indices = @transform_8, window_bounds = array<i64: 20, 2>}, {pipeline_mode = #tpu.pipeline_mode<synchronous>, transform_indices = @transform_9, window_bounds = array<i64: 20, 2>}, {pipeline_mode = #tpu.pipeline_mode<synchronous>, transform_indices = @transform_10, window_bounds = array<i64: 1, 2>}, {pipeline_mode = #tpu.pipeline_mode<synchronous>, transform_indices = @transform_11, window_bounds = array<i64: 2, 2>}]} {
    %c0 = arith.constant 0 : index
    %c0_0 = arith.constant 0 : index
    %0 = memref.load %arg1[%c0, %c0_0] : memref<2x12xi32, #tpu.memory_space<smem>>
    %1 = arith.index_cast %0 : i32 to index
    %c0_1 = arith.constant 0 : index
    %c0_2 = arith.constant 0 : index
    %2 = vector.load %arg3[%1, %c0_1, %c0_2] : memref<64x1x20xf32, #tpu.memory_space<vmem>>, vector<1x1x20xf32>
    %3 = vector.shape_cast %2 : vector<1x1x20xf32> to vector<1x20xf32>
    %c0_3 = arith.constant 0 : index
    %c1 = arith.constant 1 : index
    %4 = memref.load %arg1[%c0_3, %c1] : memref<2x12xi32, #tpu.memory_space<smem>>
    %5 = arith.index_cast %4 : i32 to index
    %c0_4 = arith.constant 0 : index
    %c0_5 = arith.constant 0 : index
    %6 = vector.load %arg3[%5, %c0_4, %c0_5] : memref<64x1x20xf32, #tpu.memory_space<vmem>>, vector<1x1x20xf32>
    %7 = vector.shape_cast %6 : vector<1x1x20xf32> to vector<1x20xf32>
    %c0_6 = arith.constant 0 : index
    %c2 = arith.constant 2 : index
    %8 = memref.load %arg1[%c0_6, %c2] : memref<2x12xi32, #tpu.memory_space<smem>>
    %9 = arith.index_cast %8 : i32 to index
    %c0_7 = arith.constant 0 : index
    %c0_8 = arith.constant 0 : index
    %10 = vector.load %arg3[%9, %c0_7, %c0_8] : memref<64x1x20xf32, #tpu.memory_space<vmem>>, vector<1x1x20xf32>
    %11 = vector.shape_cast %10 : vector<1x1x20xf32> to vector<1x20xf32>
    %c0_9 = arith.constant 0 : index
    %c3 = arith.constant 3 : index
    %12 = memref.load %arg1[%c0_9, %c3] : memref<2x12xi32, #tpu.memory_space<smem>>
    %13 = arith.index_cast %12 : i32 to index
    %c0_10 = arith.constant 0 : index
    %c0_11 = arith.constant 0 : index
    %14 = vector.load %arg3[%13, %c0_10, %c0_11] : memref<64x1x20xf32, #tpu.memory_space<vmem>>, vector<1x1x20xf32>
    %15 = vector.shape_cast %14 : vector<1x1x20xf32> to vector<1x20xf32>
    %c0_12 = arith.constant 0 : index
    %c4 = arith.constant 4 : index
    %16 = memref.load %arg1[%c0_12, %c4] : memref<2x12xi32, #tpu.memory_space<smem>>
    %17 = arith.index_cast %16 : i32 to index
    %c0_13 = arith.constant 0 : index
    %c0_14 = arith.constant 0 : index
    %18 = vector.load %arg3[%17, %c0_13, %c0_14] : memref<64x1x20xf32, #tpu.memory_space<vmem>>, vector<1x1x20xf32>
    %19 = vector.shape_cast %18 : vector<1x1x20xf32> to vector<1x20xf32>
    %c0_15 = arith.constant 0 : index
    %c5 = arith.constant 5 : index
    %20 = memref.load %arg1[%c0_15, %c5] : memref<2x12xi32, #tpu.memory_space<smem>>
    %21 = arith.index_cast %20 : i32 to index
    %c0_16 = arith.constant 0 : index
    %c0_17 = arith.constant 0 : index
    %22 = vector.load %arg3[%21, %c0_16, %c0_17] : memref<64x1x20xf32, #tpu.memory_space<vmem>>, vector<1x1x20xf32>
    %23 = vector.shape_cast %22 : vector<1x1x20xf32> to vector<1x20xf32>
    %c0_18 = arith.constant 0 : index
    %c6 = arith.constant 6 : index
    %24 = memref.load %arg1[%c0_18, %c6] : memref<2x12xi32, #tpu.memory_space<smem>>
    %25 = arith.index_cast %24 : i32 to index
    %c0_19 = arith.constant 0 : index
    %c0_20 = arith.constant 0 : index
    %26 = vector.load %arg3[%25, %c0_19, %c0_20] : memref<64x1x20xf32, #tpu.memory_space<vmem>>, vector<1x1x20xf32>
    %27 = vector.shape_cast %26 : vector<1x1x20xf32> to vector<1x20xf32>
    %c0_21 = arith.constant 0 : index
    %c7 = arith.constant 7 : index
    %28 = memref.load %arg1[%c0_21, %c7] : memref<2x12xi32, #tpu.memory_space<smem>>
    %29 = arith.index_cast %28 : i32 to index
    %c0_22 = arith.constant 0 : index
    %c0_23 = arith.constant 0 : index
    %30 = vector.load %arg3[%29, %c0_22, %c0_23] : memref<64x1x20xf32, #tpu.memory_space<vmem>>, vector<1x1x20xf32>
    %31 = vector.shape_cast %30 : vector<1x1x20xf32> to vector<1x20xf32>
    %c0_24 = arith.constant 0 : index
    %c8 = arith.constant 8 : index
    %32 = memref.load %arg1[%c0_24, %c8] : memref<2x12xi32, #tpu.memory_space<smem>>
    %33 = arith.index_cast %32 : i32 to index
    %c0_25 = arith.constant 0 : index
    %c0_26 = arith.constant 0 : index
    %34 = vector.load %arg3[%33, %c0_25, %c0_26] : memref<64x1x20xf32, #tpu.memory_space<vmem>>, vector<1x1x20xf32>
    %35 = vector.shape_cast %34 : vector<1x1x20xf32> to vector<1x20xf32>
    %c0_27 = arith.constant 0 : index
    %c9 = arith.constant 9 : index
    %36 = memref.load %arg1[%c0_27, %c9] : memref<2x12xi32, #tpu.memory_space<smem>>
    %37 = arith.index_cast %36 : i32 to index
    %c0_28 = arith.constant 0 : index
    %c0_29 = arith.constant 0 : index
    %38 = vector.load %arg3[%37, %c0_28, %c0_29] : memref<64x1x20xf32, #tpu.memory_space<vmem>>, vector<1x1x20xf32>
    %39 = vector.shape_cast %38 : vector<1x1x20xf32> to vector<1x20xf32>
    %c0_30 = arith.constant 0 : index
    %c10 = arith.constant 10 : index
    %40 = memref.load %arg1[%c0_30, %c10] : memref<2x12xi32, #tpu.memory_space<smem>>
    %41 = arith.index_cast %40 : i32 to index
    %c0_31 = arith.constant 0 : index
    %c0_32 = arith.constant 0 : index
    %42 = vector.load %arg3[%41, %c0_31, %c0_32] : memref<64x1x20xf32, #tpu.memory_space<vmem>>, vector<1x1x20xf32>
    %43 = vector.shape_cast %42 : vector<1x1x20xf32> to vector<1x20xf32>
    %c0_33 = arith.constant 0 : index
    %c11 = arith.constant 11 : index
    %44 = memref.load %arg1[%c0_33, %c11] : memref<2x12xi32, #tpu.memory_space<smem>>
    %45 = arith.index_cast %44 : i32 to index
    %c0_34 = arith.constant 0 : index
    %c0_35 = arith.constant 0 : index
    %46 = vector.load %arg3[%45, %c0_34, %c0_35] : memref<64x1x20xf32, #tpu.memory_space<vmem>>, vector<1x1x20xf32>
    %47 = vector.shape_cast %46 : vector<1x1x20xf32> to vector<1x20xf32>
    %cst = arith.constant 0.000000e+00 : f32
    %48 = vector.broadcast %cst : f32 to vector<4x20xf32>
    %49 = tpu.concatenate %3, %7, %11, %15, %19, %23, %27, %31, %35, %39, %43, %47, %48 in 0 : vector<1x20xf32>, vector<1x20xf32>, vector<1x20xf32>, vector<1x20xf32>, vector<1x20xf32>, vector<1x20xf32>, vector<1x20xf32>, vector<1x20xf32>, vector<1x20xf32>, vector<1x20xf32>, vector<1x20xf32>, vector<1x20xf32>, vector<4x20xf32> -> vector<16x20xf32>
    %c0_36 = arith.constant 0 : index
    %c0_37 = arith.constant 0 : index
    %50 = memref.load %arg2[%c0_36, %c0_37] : memref<2x16xi32, #tpu.memory_space<smem>>
    %51 = arith.index_cast %50 : i32 to index
    %c0_38 = arith.constant 0 : index
    %c0_39 = arith.constant 0 : index
    %52 = vector.load %arg4[%51, %c0_38, %c0_39] : memref<25x1x20xf32, #tpu.memory_space<vmem>>, vector<1x1x20xf32>
    %53 = vector.shape_cast %52 : vector<1x1x20xf32> to vector<1x20xf32>
    %c0_40 = arith.constant 0 : index
    %c1_41 = arith.constant 1 : index
    %54 = memref.load %arg2[%c0_40, %c1_41] : memref<2x16xi32, #tpu.memory_space<smem>>
    %55 = arith.index_cast %54 : i32 to index
    %c0_42 = arith.constant 0 : index
    %c0_43 = arith.constant 0 : index
    %56 = vector.load %arg4[%55, %c0_42, %c0_43] : memref<25x1x20xf32, #tpu.memory_space<vmem>>, vector<1x1x20xf32>
    %57 = vector.shape_cast %56 : vector<1x1x20xf32> to vector<1x20xf32>
    %c0_44 = arith.constant 0 : index
    %c2_45 = arith.constant 2 : index
    %58 = memref.load %arg2[%c0_44, %c2_45] : memref<2x16xi32, #tpu.memory_space<smem>>
    %59 = arith.index_cast %58 : i32 to index
    %c0_46 = arith.constant 0 : index
    %c0_47 = arith.constant 0 : index
    %60 = vector.load %arg4[%59, %c0_46, %c0_47] : memref<25x1x20xf32, #tpu.memory_space<vmem>>, vector<1x1x20xf32>
    %61 = vector.shape_cast %60 : vector<1x1x20xf32> to vector<1x20xf32>
    %c0_48 = arith.constant 0 : index
    %c3_49 = arith.constant 3 : index
    %62 = memref.load %arg2[%c0_48, %c3_49] : memref<2x16xi32, #tpu.memory_space<smem>>
    %63 = arith.index_cast %62 : i32 to index
    %c0_50 = arith.constant 0 : index
    %c0_51 = arith.constant 0 : index
    %64 = vector.load %arg4[%63, %c0_50, %c0_51] : memref<25x1x20xf32, #tpu.memory_space<vmem>>, vector<1x1x20xf32>
    %65 = vector.shape_cast %64 : vector<1x1x20xf32> to vector<1x20xf32>
    %c0_52 = arith.constant 0 : index
    %c4_53 = arith.constant 4 : index
    %66 = memref.load %arg2[%c0_52, %c4_53] : memref<2x16xi32, #tpu.memory_space<smem>>
    %67 = arith.index_cast %66 : i32 to index
    %c0_54 = arith.constant 0 : index
    %c0_55 = arith.constant 0 : index
    %68 = vector.load %arg4[%67, %c0_54, %c0_55] : memref<25x1x20xf32, #tpu.memory_space<vmem>>, vector<1x1x20xf32>
    %69 = vector.shape_cast %68 : vector<1x1x20xf32> to vector<1x20xf32>
    %c0_56 = arith.constant 0 : index
    %c5_57 = arith.constant 5 : index
    %70 = memref.load %arg2[%c0_56, %c5_57] : memref<2x16xi32, #tpu.memory_space<smem>>
    %71 = arith.index_cast %70 : i32 to index
    %c0_58 = arith.constant 0 : index
    %c0_59 = arith.constant 0 : index
    %72 = vector.load %arg4[%71, %c0_58, %c0_59] : memref<25x1x20xf32, #tpu.memory_space<vmem>>, vector<1x1x20xf32>
    %73 = vector.shape_cast %72 : vector<1x1x20xf32> to vector<1x20xf32>
    %c0_60 = arith.constant 0 : index
    %c6_61 = arith.constant 6 : index
    %74 = memref.load %arg2[%c0_60, %c6_61] : memref<2x16xi32, #tpu.memory_space<smem>>
    %75 = arith.index_cast %74 : i32 to index
    %c0_62 = arith.constant 0 : index
    %c0_63 = arith.constant 0 : index
    %76 = vector.load %arg4[%75, %c0_62, %c0_63] : memref<25x1x20xf32, #tpu.memory_space<vmem>>, vector<1x1x20xf32>
    %77 = vector.shape_cast %76 : vector<1x1x20xf32> to vector<1x20xf32>
    %c0_64 = arith.constant 0 : index
    %c7_65 = arith.constant 7 : index
    %78 = memref.load %arg2[%c0_64, %c7_65] : memref<2x16xi32, #tpu.memory_space<smem>>
    %79 = arith.index_cast %78 : i32 to index
    %c0_66 = arith.constant 0 : index
    %c0_67 = arith.constant 0 : index
    %80 = vector.load %arg4[%79, %c0_66, %c0_67] : memref<25x1x20xf32, #tpu.memory_space<vmem>>, vector<1x1x20xf32>
    %81 = vector.shape_cast %80 : vector<1x1x20xf32> to vector<1x20xf32>
    %c0_68 = arith.constant 0 : index
    %c8_69 = arith.constant 8 : index
    %82 = memref.load %arg2[%c0_68, %c8_69] : memref<2x16xi32, #tpu.memory_space<smem>>
    %83 = arith.index_cast %82 : i32 to index
    %c0_70 = arith.constant 0 : index
    %c0_71 = arith.constant 0 : index
    %84 = vector.load %arg4[%83, %c0_70, %c0_71] : memref<25x1x20xf32, #tpu.memory_space<vmem>>, vector<1x1x20xf32>
    %85 = vector.shape_cast %84 : vector<1x1x20xf32> to vector<1x20xf32>
    %c0_72 = arith.constant 0 : index
    %c9_73 = arith.constant 9 : index
    %86 = memref.load %arg2[%c0_72, %c9_73] : memref<2x16xi32, #tpu.memory_space<smem>>
    %87 = arith.index_cast %86 : i32 to index
    %c0_74 = arith.constant 0 : index
    %c0_75 = arith.constant 0 : index
    %88 = vector.load %arg4[%87, %c0_74, %c0_75] : memref<25x1x20xf32, #tpu.memory_space<vmem>>, vector<1x1x20xf32>
    %89 = vector.shape_cast %88 : vector<1x1x20xf32> to vector<1x20xf32>
    %c0_76 = arith.constant 0 : index
    %c10_77 = arith.constant 10 : index
    %90 = memref.load %arg2[%c0_76, %c10_77] : memref<2x16xi32, #tpu.memory_space<smem>>
    %91 = arith.index_cast %90 : i32 to index
    %c0_78 = arith.constant 0 : index
    %c0_79 = arith.constant 0 : index
    %92 = vector.load %arg4[%91, %c0_78, %c0_79] : memref<25x1x20xf32, #tpu.memory_space<vmem>>, vector<1x1x20xf32>
    %93 = vector.shape_cast %92 : vector<1x1x20xf32> to vector<1x20xf32>
    %c0_80 = arith.constant 0 : index
    %c11_81 = arith.constant 11 : index
    %94 = memref.load %arg2[%c0_80, %c11_81] : memref<2x16xi32, #tpu.memory_space<smem>>
    %95 = arith.index_cast %94 : i32 to index
    %c0_82 = arith.constant 0 : index
    %c0_83 = arith.constant 0 : index
    %96 = vector.load %arg4[%95, %c0_82, %c0_83] : memref<25x1x20xf32, #tpu.memory_space<vmem>>, vector<1x1x20xf32>
    %97 = vector.shape_cast %96 : vector<1x1x20xf32> to vector<1x20xf32>
    %c0_84 = arith.constant 0 : index
    %c12 = arith.constant 12 : index
    %98 = memref.load %arg2[%c0_84, %c12] : memref<2x16xi32, #tpu.memory_space<smem>>
    %99 = arith.index_cast %98 : i32 to index
    %c0_85 = arith.constant 0 : index
    %c0_86 = arith.constant 0 : index
    %100 = vector.load %arg4[%99, %c0_85, %c0_86] : memref<25x1x20xf32, #tpu.memory_space<vmem>>, vector<1x1x20xf32>
    %101 = vector.shape_cast %100 : vector<1x1x20xf32> to vector<1x20xf32>
    %c0_87 = arith.constant 0 : index
    %c13 = arith.constant 13 : index
    %102 = memref.load %arg2[%c0_87, %c13] : memref<2x16xi32, #tpu.memory_space<smem>>
    %103 = arith.index_cast %102 : i32 to index
    %c0_88 = arith.constant 0 : index
    %c0_89 = arith.constant 0 : index
    %104 = vector.load %arg4[%103, %c0_88, %c0_89] : memref<25x1x20xf32, #tpu.memory_space<vmem>>, vector<1x1x20xf32>
    %105 = vector.shape_cast %104 : vector<1x1x20xf32> to vector<1x20xf32>
    %c0_90 = arith.constant 0 : index
    %c14 = arith.constant 14 : index
    %106 = memref.load %arg2[%c0_90, %c14] : memref<2x16xi32, #tpu.memory_space<smem>>
    %107 = arith.index_cast %106 : i32 to index
    %c0_91 = arith.constant 0 : index
    %c0_92 = arith.constant 0 : index
    %108 = vector.load %arg4[%107, %c0_91, %c0_92] : memref<25x1x20xf32, #tpu.memory_space<vmem>>, vector<1x1x20xf32>
    %109 = vector.shape_cast %108 : vector<1x1x20xf32> to vector<1x20xf32>
    %c0_93 = arith.constant 0 : index
    %c15 = arith.constant 15 : index
    %110 = memref.load %arg2[%c0_93, %c15] : memref<2x16xi32, #tpu.memory_space<smem>>
    %111 = arith.index_cast %110 : i32 to index
    %c0_94 = arith.constant 0 : index
    %c0_95 = arith.constant 0 : index
    %112 = vector.load %arg4[%111, %c0_94, %c0_95] : memref<25x1x20xf32, #tpu.memory_space<vmem>>, vector<1x1x20xf32>
    %113 = vector.shape_cast %112 : vector<1x1x20xf32> to vector<1x20xf32>
    %114 = tpu.concatenate %53, %57, %61, %65, %69, %73, %77, %81, %85, %89, %93, %97, %101, %105, %109, %113 in 0 : vector<1x20xf32>, vector<1x20xf32>, vector<1x20xf32>, vector<1x20xf32>, vector<1x20xf32>, vector<1x20xf32>, vector<1x20xf32>, vector<1x20xf32>, vector<1x20xf32>, vector<1x20xf32>, vector<1x20xf32>, vector<1x20xf32>, vector<1x20xf32>, vector<1x20xf32>, vector<1x20xf32>, vector<1x20xf32> -> vector<16x20xf32>
    %115 = tpu.concatenate %49, %114 in 1 : vector<16x20xf32>, vector<16x20xf32> -> vector<16x40xf32>
    %c1_96 = arith.constant 1 : index
    %c0_97 = arith.constant 0 : index
    %116 = memref.load %arg1[%c1_96, %c0_97] : memref<2x12xi32, #tpu.memory_space<smem>>
    %117 = arith.index_cast %116 : i32 to index
    %c0_98 = arith.constant 0 : index
    %c0_99 = arith.constant 0 : index
    %118 = vector.load %arg3[%117, %c0_98, %c0_99] : memref<64x1x20xf32, #tpu.memory_space<vmem>>, vector<1x1x20xf32>
    %119 = vector.shape_cast %118 : vector<1x1x20xf32> to vector<1x20xf32>
    %c1_100 = arith.constant 1 : index
    %c1_101 = arith.constant 1 : index
    %120 = memref.load %arg1[%c1_100, %c1_101] : memref<2x12xi32, #tpu.memory_space<smem>>
    %121 = arith.index_cast %120 : i32 to index
    %c0_102 = arith.constant 0 : index
    %c0_103 = arith.constant 0 : index
    %122 = vector.load %arg3[%121, %c0_102, %c0_103] : memref<64x1x20xf32, #tpu.memory_space<vmem>>, vector<1x1x20xf32>
    %123 = vector.shape_cast %122 : vector<1x1x20xf32> to vector<1x20xf32>
    %c1_104 = arith.constant 1 : index
    %c2_105 = arith.constant 2 : index
    %124 = memref.load %arg1[%c1_104, %c2_105] : memref<2x12xi32, #tpu.memory_space<smem>>
    %125 = arith.index_cast %124 : i32 to index
    %c0_106 = arith.constant 0 : index
    %c0_107 = arith.constant 0 : index
    %126 = vector.load %arg3[%125, %c0_106, %c0_107] : memref<64x1x20xf32, #tpu.memory_space<vmem>>, vector<1x1x20xf32>
    %127 = vector.shape_cast %126 : vector<1x1x20xf32> to vector<1x20xf32>
    %c1_108 = arith.constant 1 : index
    %c3_109 = arith.constant 3 : index
    %128 = memref.load %arg1[%c1_108, %c3_109] : memref<2x12xi32, #tpu.memory_space<smem>>
    %129 = arith.index_cast %128 : i32 to index
    %c0_110 = arith.constant 0 : index
    %c0_111 = arith.constant 0 : index
    %130 = vector.load %arg3[%129, %c0_110, %c0_111] : memref<64x1x20xf32, #tpu.memory_space<vmem>>, vector<1x1x20xf32>
    %131 = vector.shape_cast %130 : vector<1x1x20xf32> to vector<1x20xf32>
    %c1_112 = arith.constant 1 : index
    %c4_113 = arith.constant 4 : index
    %132 = memref.load %arg1[%c1_112, %c4_113] : memref<2x12xi32, #tpu.memory_space<smem>>
    %133 = arith.index_cast %132 : i32 to index
    %c0_114 = arith.constant 0 : index
    %c0_115 = arith.constant 0 : index
    %134 = vector.load %arg3[%133, %c0_114, %c0_115] : memref<64x1x20xf32, #tpu.memory_space<vmem>>, vector<1x1x20xf32>
    %135 = vector.shape_cast %134 : vector<1x1x20xf32> to vector<1x20xf32>
    %c1_116 = arith.constant 1 : index
    %c5_117 = arith.constant 5 : index
    %136 = memref.load %arg1[%c1_116, %c5_117] : memref<2x12xi32, #tpu.memory_space<smem>>
    %137 = arith.index_cast %136 : i32 to index
    %c0_118 = arith.constant 0 : index
    %c0_119 = arith.constant 0 : index
    %138 = vector.load %arg3[%137, %c0_118, %c0_119] : memref<64x1x20xf32, #tpu.memory_space<vmem>>, vector<1x1x20xf32>
    %139 = vector.shape_cast %138 : vector<1x1x20xf32> to vector<1x20xf32>
    %c1_120 = arith.constant 1 : index
    %c6_121 = arith.constant 6 : index
    %140 = memref.load %arg1[%c1_120, %c6_121] : memref<2x12xi32, #tpu.memory_space<smem>>
    %141 = arith.index_cast %140 : i32 to index
    %c0_122 = arith.constant 0 : index
    %c0_123 = arith.constant 0 : index
    %142 = vector.load %arg3[%141, %c0_122, %c0_123] : memref<64x1x20xf32, #tpu.memory_space<vmem>>, vector<1x1x20xf32>
    %143 = vector.shape_cast %142 : vector<1x1x20xf32> to vector<1x20xf32>
    %c1_124 = arith.constant 1 : index
    %c7_125 = arith.constant 7 : index
    %144 = memref.load %arg1[%c1_124, %c7_125] : memref<2x12xi32, #tpu.memory_space<smem>>
    %145 = arith.index_cast %144 : i32 to index
    %c0_126 = arith.constant 0 : index
    %c0_127 = arith.constant 0 : index
    %146 = vector.load %arg3[%145, %c0_126, %c0_127] : memref<64x1x20xf32, #tpu.memory_space<vmem>>, vector<1x1x20xf32>
    %147 = vector.shape_cast %146 : vector<1x1x20xf32> to vector<1x20xf32>
    %c1_128 = arith.constant 1 : index
    %c8_129 = arith.constant 8 : index
    %148 = memref.load %arg1[%c1_128, %c8_129] : memref<2x12xi32, #tpu.memory_space<smem>>
    %149 = arith.index_cast %148 : i32 to index
    %c0_130 = arith.constant 0 : index
    %c0_131 = arith.constant 0 : index
    %150 = vector.load %arg3[%149, %c0_130, %c0_131] : memref<64x1x20xf32, #tpu.memory_space<vmem>>, vector<1x1x20xf32>
    %151 = vector.shape_cast %150 : vector<1x1x20xf32> to vector<1x20xf32>
    %c1_132 = arith.constant 1 : index
    %c9_133 = arith.constant 9 : index
    %152 = memref.load %arg1[%c1_132, %c9_133] : memref<2x12xi32, #tpu.memory_space<smem>>
    %153 = arith.index_cast %152 : i32 to index
    %c0_134 = arith.constant 0 : index
    %c0_135 = arith.constant 0 : index
    %154 = vector.load %arg3[%153, %c0_134, %c0_135] : memref<64x1x20xf32, #tpu.memory_space<vmem>>, vector<1x1x20xf32>
    %155 = vector.shape_cast %154 : vector<1x1x20xf32> to vector<1x20xf32>
    %c1_136 = arith.constant 1 : index
    %c10_137 = arith.constant 10 : index
    %156 = memref.load %arg1[%c1_136, %c10_137] : memref<2x12xi32, #tpu.memory_space<smem>>
    %157 = arith.index_cast %156 : i32 to index
    %c0_138 = arith.constant 0 : index
    %c0_139 = arith.constant 0 : index
    %158 = vector.load %arg3[%157, %c0_138, %c0_139] : memref<64x1x20xf32, #tpu.memory_space<vmem>>, vector<1x1x20xf32>
    %159 = vector.shape_cast %158 : vector<1x1x20xf32> to vector<1x20xf32>
    %c1_140 = arith.constant 1 : index
    %c11_141 = arith.constant 11 : index
    %160 = memref.load %arg1[%c1_140, %c11_141] : memref<2x12xi32, #tpu.memory_space<smem>>
    %161 = arith.index_cast %160 : i32 to index
    %c0_142 = arith.constant 0 : index
    %c0_143 = arith.constant 0 : index
    %162 = vector.load %arg3[%161, %c0_142, %c0_143] : memref<64x1x20xf32, #tpu.memory_space<vmem>>, vector<1x1x20xf32>
    %163 = vector.shape_cast %162 : vector<1x1x20xf32> to vector<1x20xf32>
    %cst_144 = arith.constant 0.000000e+00 : f32
    %164 = vector.broadcast %cst_144 : f32 to vector<4x20xf32>
    %165 = tpu.concatenate %119, %123, %127, %131, %135, %139, %143, %147, %151, %155, %159, %163, %164 in 0 : vector<1x20xf32>, vector<1x20xf32>, vector<1x20xf32>, vector<1x20xf32>, vector<1x20xf32>, vector<1x20xf32>, vector<1x20xf32>, vector<1x20xf32>, vector<1x20xf32>, vector<1x20xf32>, vector<1x20xf32>, vector<1x20xf32>, vector<4x20xf32> -> vector<16x20xf32>
    %c1_145 = arith.constant 1 : index
    %c0_146 = arith.constant 0 : index
    %166 = memref.load %arg2[%c1_145, %c0_146] : memref<2x16xi32, #tpu.memory_space<smem>>
    %167 = arith.index_cast %166 : i32 to index
    %c0_147 = arith.constant 0 : index
    %c0_148 = arith.constant 0 : index
    %168 = vector.load %arg4[%167, %c0_147, %c0_148] : memref<25x1x20xf32, #tpu.memory_space<vmem>>, vector<1x1x20xf32>
    %169 = vector.shape_cast %168 : vector<1x1x20xf32> to vector<1x20xf32>
    %c1_149 = arith.constant 1 : index
    %c1_150 = arith.constant 1 : index
    %170 = memref.load %arg2[%c1_149, %c1_150] : memref<2x16xi32, #tpu.memory_space<smem>>
    %171 = arith.index_cast %170 : i32 to index
    %c0_151 = arith.constant 0 : index
    %c0_152 = arith.constant 0 : index
    %172 = vector.load %arg4[%171, %c0_151, %c0_152] : memref<25x1x20xf32, #tpu.memory_space<vmem>>, vector<1x1x20xf32>
    %173 = vector.shape_cast %172 : vector<1x1x20xf32> to vector<1x20xf32>
    %c1_153 = arith.constant 1 : index
    %c2_154 = arith.constant 2 : index
    %174 = memref.load %arg2[%c1_153, %c2_154] : memref<2x16xi32, #tpu.memory_space<smem>>
    %175 = arith.index_cast %174 : i32 to index
    %c0_155 = arith.constant 0 : index
    %c0_156 = arith.constant 0 : index
    %176 = vector.load %arg4[%175, %c0_155, %c0_156] : memref<25x1x20xf32, #tpu.memory_space<vmem>>, vector<1x1x20xf32>
    %177 = vector.shape_cast %176 : vector<1x1x20xf32> to vector<1x20xf32>
    %c1_157 = arith.constant 1 : index
    %c3_158 = arith.constant 3 : index
    %178 = memref.load %arg2[%c1_157, %c3_158] : memref<2x16xi32, #tpu.memory_space<smem>>
    %179 = arith.index_cast %178 : i32 to index
    %c0_159 = arith.constant 0 : index
    %c0_160 = arith.constant 0 : index
    %180 = vector.load %arg4[%179, %c0_159, %c0_160] : memref<25x1x20xf32, #tpu.memory_space<vmem>>, vector<1x1x20xf32>
    %181 = vector.shape_cast %180 : vector<1x1x20xf32> to vector<1x20xf32>
    %c1_161 = arith.constant 1 : index
    %c4_162 = arith.constant 4 : index
    %182 = memref.load %arg2[%c1_161, %c4_162] : memref<2x16xi32, #tpu.memory_space<smem>>
    %183 = arith.index_cast %182 : i32 to index
    %c0_163 = arith.constant 0 : index
    %c0_164 = arith.constant 0 : index
    %184 = vector.load %arg4[%183, %c0_163, %c0_164] : memref<25x1x20xf32, #tpu.memory_space<vmem>>, vector<1x1x20xf32>
    %185 = vector.shape_cast %184 : vector<1x1x20xf32> to vector<1x20xf32>
    %c1_165 = arith.constant 1 : index
    %c5_166 = arith.constant 5 : index
    %186 = memref.load %arg2[%c1_165, %c5_166] : memref<2x16xi32, #tpu.memory_space<smem>>
    %187 = arith.index_cast %186 : i32 to index
    %c0_167 = arith.constant 0 : index
    %c0_168 = arith.constant 0 : index
    %188 = vector.load %arg4[%187, %c0_167, %c0_168] : memref<25x1x20xf32, #tpu.memory_space<vmem>>, vector<1x1x20xf32>
    %189 = vector.shape_cast %188 : vector<1x1x20xf32> to vector<1x20xf32>
    %c1_169 = arith.constant 1 : index
    %c6_170 = arith.constant 6 : index
    %190 = memref.load %arg2[%c1_169, %c6_170] : memref<2x16xi32, #tpu.memory_space<smem>>
    %191 = arith.index_cast %190 : i32 to index
    %c0_171 = arith.constant 0 : index
    %c0_172 = arith.constant 0 : index
    %192 = vector.load %arg4[%191, %c0_171, %c0_172] : memref<25x1x20xf32, #tpu.memory_space<vmem>>, vector<1x1x20xf32>
    %193 = vector.shape_cast %192 : vector<1x1x20xf32> to vector<1x20xf32>
    %c1_173 = arith.constant 1 : index
    %c7_174 = arith.constant 7 : index
    %194 = memref.load %arg2[%c1_173, %c7_174] : memref<2x16xi32, #tpu.memory_space<smem>>
    %195 = arith.index_cast %194 : i32 to index
    %c0_175 = arith.constant 0 : index
    %c0_176 = arith.constant 0 : index
    %196 = vector.load %arg4[%195, %c0_175, %c0_176] : memref<25x1x20xf32, #tpu.memory_space<vmem>>, vector<1x1x20xf32>
    %197 = vector.shape_cast %196 : vector<1x1x20xf32> to vector<1x20xf32>
    %c1_177 = arith.constant 1 : index
    %c8_178 = arith.constant 8 : index
    %198 = memref.load %arg2[%c1_177, %c8_178] : memref<2x16xi32, #tpu.memory_space<smem>>
    %199 = arith.index_cast %198 : i32 to index
    %c0_179 = arith.constant 0 : index
    %c0_180 = arith.constant 0 : index
    %200 = vector.load %arg4[%199, %c0_179, %c0_180] : memref<25x1x20xf32, #tpu.memory_space<vmem>>, vector<1x1x20xf32>
    %201 = vector.shape_cast %200 : vector<1x1x20xf32> to vector<1x20xf32>
    %c1_181 = arith.constant 1 : index
    %c9_182 = arith.constant 9 : index
    %202 = memref.load %arg2[%c1_181, %c9_182] : memref<2x16xi32, #tpu.memory_space<smem>>
    %203 = arith.index_cast %202 : i32 to index
    %c0_183 = arith.constant 0 : index
    %c0_184 = arith.constant 0 : index
    %204 = vector.load %arg4[%203, %c0_183, %c0_184] : memref<25x1x20xf32, #tpu.memory_space<vmem>>, vector<1x1x20xf32>
    %205 = vector.shape_cast %204 : vector<1x1x20xf32> to vector<1x20xf32>
    %c1_185 = arith.constant 1 : index
    %c10_186 = arith.constant 10 : index
    %206 = memref.load %arg2[%c1_185, %c10_186] : memref<2x16xi32, #tpu.memory_space<smem>>
    %207 = arith.index_cast %206 : i32 to index
    %c0_187 = arith.constant 0 : index
    %c0_188 = arith.constant 0 : index
    %208 = vector.load %arg4[%207, %c0_187, %c0_188] : memref<25x1x20xf32, #tpu.memory_space<vmem>>, vector<1x1x20xf32>
    %209 = vector.shape_cast %208 : vector<1x1x20xf32> to vector<1x20xf32>
    %c1_189 = arith.constant 1 : index
    %c11_190 = arith.constant 11 : index
    %210 = memref.load %arg2[%c1_189, %c11_190] : memref<2x16xi32, #tpu.memory_space<smem>>
    %211 = arith.index_cast %210 : i32 to index
    %c0_191 = arith.constant 0 : index
    %c0_192 = arith.constant 0 : index
    %212 = vector.load %arg4[%211, %c0_191, %c0_192] : memref<25x1x20xf32, #tpu.memory_space<vmem>>, vector<1x1x20xf32>
    %213 = vector.shape_cast %212 : vector<1x1x20xf32> to vector<1x20xf32>
    %c1_193 = arith.constant 1 : index
    %c12_194 = arith.constant 12 : index
    %214 = memref.load %arg2[%c1_193, %c12_194] : memref<2x16xi32, #tpu.memory_space<smem>>
    %215 = arith.index_cast %214 : i32 to index
    %c0_195 = arith.constant 0 : index
    %c0_196 = arith.constant 0 : index
    %216 = vector.load %arg4[%215, %c0_195, %c0_196] : memref<25x1x20xf32, #tpu.memory_space<vmem>>, vector<1x1x20xf32>
    %217 = vector.shape_cast %216 : vector<1x1x20xf32> to vector<1x20xf32>
    %c1_197 = arith.constant 1 : index
    %c13_198 = arith.constant 13 : index
    %218 = memref.load %arg2[%c1_197, %c13_198] : memref<2x16xi32, #tpu.memory_space<smem>>
    %219 = arith.index_cast %218 : i32 to index
    %c0_199 = arith.constant 0 : index
    %c0_200 = arith.constant 0 : index
    %220 = vector.load %arg4[%219, %c0_199, %c0_200] : memref<25x1x20xf32, #tpu.memory_space<vmem>>, vector<1x1x20xf32>
    %221 = vector.shape_cast %220 : vector<1x1x20xf32> to vector<1x20xf32>
    %c1_201 = arith.constant 1 : index
    %c14_202 = arith.constant 14 : index
    %222 = memref.load %arg2[%c1_201, %c14_202] : memref<2x16xi32, #tpu.memory_space<smem>>
    %223 = arith.index_cast %222 : i32 to index
    %c0_203 = arith.constant 0 : index
    %c0_204 = arith.constant 0 : index
    %224 = vector.load %arg4[%223, %c0_203, %c0_204] : memref<25x1x20xf32, #tpu.memory_space<vmem>>, vector<1x1x20xf32>
    %225 = vector.shape_cast %224 : vector<1x1x20xf32> to vector<1x20xf32>
    %c1_205 = arith.constant 1 : index
    %c15_206 = arith.constant 15 : index
    %226 = memref.load %arg2[%c1_205, %c15_206] : memref<2x16xi32, #tpu.memory_space<smem>>
    %227 = arith.index_cast %226 : i32 to index
    %c0_207 = arith.constant 0 : index
    %c0_208 = arith.constant 0 : index
    %228 = vector.load %arg4[%227, %c0_207, %c0_208] : memref<25x1x20xf32, #tpu.memory_space<vmem>>, vector<1x1x20xf32>
    %229 = vector.shape_cast %228 : vector<1x1x20xf32> to vector<1x20xf32>
    %230 = tpu.concatenate %169, %173, %177, %181, %185, %189, %193, %197, %201, %205, %209, %213, %217, %221, %225, %229 in 0 : vector<1x20xf32>, vector<1x20xf32>, vector<1x20xf32>, vector<1x20xf32>, vector<1x20xf32>, vector<1x20xf32>, vector<1x20xf32>, vector<1x20xf32>, vector<1x20xf32>, vector<1x20xf32>, vector<1x20xf32>, vector<1x20xf32>, vector<1x20xf32>, vector<1x20xf32>, vector<1x20xf32>, vector<1x20xf32> -> vector<16x20xf32>
    %231 = tpu.concatenate %165, %230 in 1 : vector<16x20xf32>, vector<16x20xf32> -> vector<16x40xf32>
    %cst_209 = arith.constant 0.000000e+00 : f32
    %232 = vector.broadcast %cst_209 : f32 to vector<4x40xf32>
    %233 = tpu.concatenate %232, %115, %232, %232, %231, %232 in 0 : vector<4x40xf32>, vector<16x40xf32>, vector<4x40xf32>, vector<4x40xf32>, vector<16x40xf32>, vector<4x40xf32> -> vector<48x40xf32>
    %cst_210 = arith.constant 0.000000e+00 : f32
    %234 = vector.broadcast %cst_210 : f32 to vector<44x40xf32>
    %235 = vector.extract_strided_slice %233 {offsets = [0, 0], sizes = [44, 40], strides = [1, 1]} : vector<48x40xf32> to vector<44x40xf32>
    %c0_211 = arith.constant 0 : index
    %c0_212 = arith.constant 0 : index
    %c0_213 = arith.constant 0 : index
    %236 = vector.load %arg5[%c0_211, %c0_212, %c0_213] : memref<5x40x40xf32, #tpu.memory_space<vmem>>, vector<1x40x40xf32>
    %237 = vector.shape_cast %236 : vector<1x40x40xf32> to vector<40x40xf32>
    %cst_214 = arith.constant dense<0.000000e+00> : vector<44x40xf32>
    %238 = tpu.matmul %235, %237, %cst_214 {dimension_numbers = #tpu.dot_dimension_numbers<[1], [0], [0], [1], [0, 0, 1, 1], [], []>} : vector<44x40xf32>, vector<40x40xf32>, vector<44x40xf32> -> vector<44x40xf32>
    %239 = arith.addf %234, %238 : vector<44x40xf32>
    %240 = vector.extract_strided_slice %233 {offsets = [1, 0], sizes = [44, 40], strides = [1, 1]} : vector<48x40xf32> to vector<44x40xf32>
    %c1_215 = arith.constant 1 : index
    %c0_216 = arith.constant 0 : index
    %c0_217 = arith.constant 0 : index
    %241 = vector.load %arg5[%c1_215, %c0_216, %c0_217] : memref<5x40x40xf32, #tpu.memory_space<vmem>>, vector<1x40x40xf32>
    %242 = vector.shape_cast %241 : vector<1x40x40xf32> to vector<40x40xf32>
    %cst_218 = arith.constant dense<0.000000e+00> : vector<44x40xf32>
    %243 = tpu.matmul %240, %242, %cst_218 {dimension_numbers = #tpu.dot_dimension_numbers<[1], [0], [0], [1], [0, 0, 1, 1], [], []>} : vector<44x40xf32>, vector<40x40xf32>, vector<44x40xf32> -> vector<44x40xf32>
    %244 = arith.addf %239, %243 : vector<44x40xf32>
    %245 = vector.extract_strided_slice %233 {offsets = [2, 0], sizes = [44, 40], strides = [1, 1]} : vector<48x40xf32> to vector<44x40xf32>
    %c2_219 = arith.constant 2 : index
    %c0_220 = arith.constant 0 : index
    %c0_221 = arith.constant 0 : index
    %246 = vector.load %arg5[%c2_219, %c0_220, %c0_221] : memref<5x40x40xf32, #tpu.memory_space<vmem>>, vector<1x40x40xf32>
    %247 = vector.shape_cast %246 : vector<1x40x40xf32> to vector<40x40xf32>
    %cst_222 = arith.constant dense<0.000000e+00> : vector<44x40xf32>
    %248 = tpu.matmul %245, %247, %cst_222 {dimension_numbers = #tpu.dot_dimension_numbers<[1], [0], [0], [1], [0, 0, 1, 1], [], []>} : vector<44x40xf32>, vector<40x40xf32>, vector<44x40xf32> -> vector<44x40xf32>
    %249 = arith.addf %244, %248 : vector<44x40xf32>
    %250 = vector.extract_strided_slice %233 {offsets = [3, 0], sizes = [44, 40], strides = [1, 1]} : vector<48x40xf32> to vector<44x40xf32>
    %c3_223 = arith.constant 3 : index
    %c0_224 = arith.constant 0 : index
    %c0_225 = arith.constant 0 : index
    %251 = vector.load %arg5[%c3_223, %c0_224, %c0_225] : memref<5x40x40xf32, #tpu.memory_space<vmem>>, vector<1x40x40xf32>
    %252 = vector.shape_cast %251 : vector<1x40x40xf32> to vector<40x40xf32>
    %cst_226 = arith.constant dense<0.000000e+00> : vector<44x40xf32>
    %253 = tpu.matmul %250, %252, %cst_226 {dimension_numbers = #tpu.dot_dimension_numbers<[1], [0], [0], [1], [0, 0, 1, 1], [], []>} : vector<44x40xf32>, vector<40x40xf32>, vector<44x40xf32> -> vector<44x40xf32>
    %254 = arith.addf %249, %253 : vector<44x40xf32>
    %255 = vector.extract_strided_slice %233 {offsets = [4, 0], sizes = [44, 40], strides = [1, 1]} : vector<48x40xf32> to vector<44x40xf32>
    %c4_227 = arith.constant 4 : index
    %c0_228 = arith.constant 0 : index
    %c0_229 = arith.constant 0 : index
    %256 = vector.load %arg5[%c4_227, %c0_228, %c0_229] : memref<5x40x40xf32, #tpu.memory_space<vmem>>, vector<1x40x40xf32>
    %257 = vector.shape_cast %256 : vector<1x40x40xf32> to vector<40x40xf32>
    %cst_230 = arith.constant dense<0.000000e+00> : vector<44x40xf32>
    %258 = tpu.matmul %255, %257, %cst_230 {dimension_numbers = #tpu.dot_dimension_numbers<[1], [0], [0], [1], [0, 0, 1, 1], [], []>} : vector<44x40xf32>, vector<40x40xf32>, vector<44x40xf32> -> vector<44x40xf32>
    %259 = arith.addf %254, %258 : vector<44x40xf32>
    %c0_231 = arith.constant 0 : index
    %c0_232 = arith.constant 0 : index
    %c0_233 = arith.constant 0 : index
    %260 = vector.load %arg6[%c0_231, %c0_232, %c0_233] : memref<1x1x40xf32, #tpu.memory_space<vmem>>, vector<1x1x40xf32>
    %261 = vector.shape_cast %260 : vector<1x1x40xf32> to vector<1x40xf32>
    %262 = vector.broadcast %261 : vector<1x40xf32> to vector<44x40xf32>
    %263 = arith.addf %259, %262 : vector<44x40xf32>
    %264 = math.tanh %263 : vector<44x40xf32>
    %265 = vector.extract_strided_slice %264 {offsets = [0, 0], sizes = [16, 20], strides = [1, 1]} : vector<44x40xf32> to vector<16x20xf32>
    %266 = vector.extract_strided_slice %264 {offsets = [0, 20], sizes = [20, 20], strides = [1, 1]} : vector<44x40xf32> to vector<20x20xf32>
    %267 = arith.mulf %265, %265 : vector<16x20xf32>
    %cst_234 = arith.constant dense<0.000000e+00> : vector<16xf32>
    %268 = vector.multi_reduction <add>, %267, %cst_234 [1] : vector<16x20xf32> to vector<16xf32>
    %269 = vector.shape_cast %268 : vector<16xf32> to vector<16x1xf32>
    %270 = arith.mulf %266, %266 : vector<20x20xf32>
    %cst_235 = arith.constant dense<0.000000e+00> : vector<20xf32>
    %271 = vector.multi_reduction <add>, %270, %cst_235 [1] : vector<20x20xf32> to vector<20xf32>
    %272 = vector.shape_cast %271 : vector<20xf32> to vector<20x1xf32>
    %cst_236 = arith.constant 1.000000e+00 : f32
    %273 = vector.broadcast %cst_236 : f32 to vector<16x1xf32>
    %cst_237 = arith.constant 1.000000e+00 : f32
    %274 = vector.broadcast %cst_237 : f32 to vector<20x1xf32>
    %cst_238 = arith.constant -2.000000e+00 : f32
    %275 = vector.broadcast %cst_238 : f32 to vector<16x20xf32>
    %276 = arith.mulf %275, %265 : vector<16x20xf32>
    %277 = tpu.concatenate %276, %269, %273 in 1 : vector<16x20xf32>, vector<16x1xf32>, vector<16x1xf32> -> vector<16x22xf32>
    %278 = tpu.concatenate %266, %274, %272 in 1 : vector<20x20xf32>, vector<20x1xf32>, vector<20x1xf32> -> vector<20x22xf32>
    %cst_239 = arith.constant dense<0.000000e+00> : vector<16x20xf32>
    %279 = tpu.matmul %277, %278, %cst_239 {dimension_numbers = #tpu.dot_dimension_numbers<[1], [1], [0], [0], [0, 0, 1, 0], [], []>} : vector<16x22xf32>, vector<20x22xf32>, vector<16x20xf32> -> vector<16x20xf32>
    %cst_240 = arith.constant -2.000000e+00 : f32
    %280 = vector.broadcast %cst_240 : f32 to vector<20x20xf32>
    %281 = arith.mulf %280, %266 : vector<20x20xf32>
    %282 = tpu.concatenate %281, %272, %274 in 1 : vector<20x20xf32>, vector<20x1xf32>, vector<20x1xf32> -> vector<20x22xf32>
    %283 = tpu.concatenate %265, %273, %269 in 1 : vector<16x20xf32>, vector<16x1xf32>, vector<16x1xf32> -> vector<16x22xf32>
    %cst_241 = arith.constant dense<0.000000e+00> : vector<20x16xf32>
    %284 = tpu.matmul %282, %283, %cst_241 {dimension_numbers = #tpu.dot_dimension_numbers<[1], [1], [0], [0], [0, 0, 1, 0], [], []>} : vector<20x22xf32>, vector<16x22xf32>, vector<20x16xf32> -> vector<20x16xf32>
    %cst_242 = arith.constant 0.000000e+00 : f32
    %285 = vector.broadcast %cst_242 : f32 to vector<16x20xf32>
    %286 = arith.maximumf %279, %285 : vector<16x20xf32>
    %287 = math.sqrt %286 : vector<16x20xf32>
    %cst_243 = arith.constant 1.000000e+00 : f32
    %288 = vector.broadcast %cst_243 : f32 to vector<16x20xf32>
    %289 = arith.addf %288, %287 : vector<16x20xf32>
    %290 = tpu.reciprocal %289 {approx = true} : vector<16x20xf32> -> vector<16x20xf32>
    %cst_244 = arith.constant 0.000000e+00 : f32
    %291 = vector.broadcast %cst_244 : f32 to vector<20x16xf32>
    %292 = arith.maximumf %284, %291 : vector<20x16xf32>
    %293 = math.sqrt %292 : vector<20x16xf32>
    %cst_245 = arith.constant 1.000000e+00 : f32
    %294 = vector.broadcast %cst_245 : f32 to vector<20x16xf32>
    %295 = arith.addf %294, %293 : vector<20x16xf32>
    %296 = tpu.reciprocal %295 {approx = true} : vector<20x16xf32> -> vector<20x16xf32>
    %cst_246 = arith.constant dense<0.000000e+00> : vector<16xf32>
    %297 = vector.multi_reduction <add>, %290, %cst_246 [1] : vector<16x20xf32> to vector<16xf32>
    %298 = vector.shape_cast %297 : vector<16xf32> to vector<16x1xf32>
    %cst_247 = arith.constant dense<0.000000e+00> : vector<20xf32>
    %299 = vector.multi_reduction <add>, %296, %cst_247 [1] : vector<20x16xf32> to vector<20xf32>
    %300 = vector.shape_cast %299 : vector<20xf32> to vector<20x1xf32>
    %c0_248 = arith.constant 0 : index
    %c0_249 = arith.constant 0 : index
    %301 = vector.load %arg7[%c0_248, %c0_249] : memref<12x16xf32, #tpu.memory_space<vmem>>, vector<12x16xf32>
    %302 = vector.broadcast %298 : vector<16x1xf32> to vector<16x20xf32>
    %303 = arith.mulf %265, %302 : vector<16x20xf32>
    %cst_250 = arith.constant dense<0.000000e+00> : vector<12x20xf32>
    %304 = tpu.matmul %301, %303, %cst_250 {dimension_numbers = #tpu.dot_dimension_numbers<[1], [0], [0], [1], [0, 0, 1, 1], [], []>} : vector<12x16xf32>, vector<16x20xf32>, vector<12x20xf32> -> vector<12x20xf32>
    %c0_251 = arith.constant 0 : index
    %c0_252 = arith.constant 0 : index
    %305 = vector.load %arg8[%c0_251, %c0_252] : memref<16x20xf32, #tpu.memory_space<vmem>>, vector<16x20xf32>
    %306 = vector.broadcast %300 : vector<20x1xf32> to vector<20x20xf32>
    %307 = arith.mulf %266, %306 : vector<20x20xf32>
    %cst_253 = arith.constant dense<0.000000e+00> : vector<16x20xf32>
    %308 = tpu.matmul %305, %307, %cst_253 {dimension_numbers = #tpu.dot_dimension_numbers<[1], [0], [0], [1], [0, 0, 1, 1], [], []>} : vector<16x20xf32>, vector<20x20xf32>, vector<16x20xf32> -> vector<16x20xf32>
    %cst_254 = arith.constant dense<0.000000e+00> : vector<20xf32>
    %309 = vector.multi_reduction <add>, %304, %cst_254 [0] : vector<12x20xf32> to vector<20xf32>
    %310 = vector.shape_cast %309 : vector<20xf32> to vector<1x20xf32>
    %cst_255 = arith.constant 1.200000e+01 : f32
    %311 = vector.broadcast %cst_255 : f32 to vector<1x20xf32>
    %312 = arith.divf %310, %311 : vector<1x20xf32>
    %cst_256 = arith.constant dense<0.000000e+00> : vector<20xf32>
    %313 = vector.multi_reduction <add>, %308, %cst_256 [0] : vector<16x20xf32> to vector<20xf32>
    %314 = vector.shape_cast %313 : vector<20xf32> to vector<1x20xf32>
    %cst_257 = arith.constant 1.600000e+01 : f32
    %315 = vector.broadcast %cst_257 : f32 to vector<1x20xf32>
    %316 = arith.divf %314, %315 : vector<1x20xf32>
    %317 = vector.extract_strided_slice %264 {offsets = [24, 0], sizes = [16, 20], strides = [1, 1]} : vector<44x40xf32> to vector<16x20xf32>
    %318 = vector.extract_strided_slice %264 {offsets = [24, 20], sizes = [20, 20], strides = [1, 1]} : vector<44x40xf32> to vector<20x20xf32>
    %319 = arith.mulf %317, %317 : vector<16x20xf32>
    %cst_258 = arith.constant dense<0.000000e+00> : vector<16xf32>
    %320 = vector.multi_reduction <add>, %319, %cst_258 [1] : vector<16x20xf32> to vector<16xf32>
    %321 = vector.shape_cast %320 : vector<16xf32> to vector<16x1xf32>
    %322 = arith.mulf %318, %318 : vector<20x20xf32>
    %cst_259 = arith.constant dense<0.000000e+00> : vector<20xf32>
    %323 = vector.multi_reduction <add>, %322, %cst_259 [1] : vector<20x20xf32> to vector<20xf32>
    %324 = vector.shape_cast %323 : vector<20xf32> to vector<20x1xf32>
    %cst_260 = arith.constant 1.000000e+00 : f32
    %325 = vector.broadcast %cst_260 : f32 to vector<16x1xf32>
    %cst_261 = arith.constant 1.000000e+00 : f32
    %326 = vector.broadcast %cst_261 : f32 to vector<20x1xf32>
    %cst_262 = arith.constant -2.000000e+00 : f32
    %327 = vector.broadcast %cst_262 : f32 to vector<16x20xf32>
    %328 = arith.mulf %327, %317 : vector<16x20xf32>
    %329 = tpu.concatenate %328, %321, %325 in 1 : vector<16x20xf32>, vector<16x1xf32>, vector<16x1xf32> -> vector<16x22xf32>
    %330 = tpu.concatenate %318, %326, %324 in 1 : vector<20x20xf32>, vector<20x1xf32>, vector<20x1xf32> -> vector<20x22xf32>
    %cst_263 = arith.constant dense<0.000000e+00> : vector<16x20xf32>
    %331 = tpu.matmul %329, %330, %cst_263 {dimension_numbers = #tpu.dot_dimension_numbers<[1], [1], [0], [0], [0, 0, 1, 0], [], []>} : vector<16x22xf32>, vector<20x22xf32>, vector<16x20xf32> -> vector<16x20xf32>
    %cst_264 = arith.constant -2.000000e+00 : f32
    %332 = vector.broadcast %cst_264 : f32 to vector<20x20xf32>
    %333 = arith.mulf %332, %318 : vector<20x20xf32>
    %334 = tpu.concatenate %333, %324, %326 in 1 : vector<20x20xf32>, vector<20x1xf32>, vector<20x1xf32> -> vector<20x22xf32>
    %335 = tpu.concatenate %317, %325, %321 in 1 : vector<16x20xf32>, vector<16x1xf32>, vector<16x1xf32> -> vector<16x22xf32>
    %cst_265 = arith.constant dense<0.000000e+00> : vector<20x16xf32>
    %336 = tpu.matmul %334, %335, %cst_265 {dimension_numbers = #tpu.dot_dimension_numbers<[1], [1], [0], [0], [0, 0, 1, 0], [], []>} : vector<20x22xf32>, vector<16x22xf32>, vector<20x16xf32> -> vector<20x16xf32>
    %cst_266 = arith.constant 0.000000e+00 : f32
    %337 = vector.broadcast %cst_266 : f32 to vector<16x20xf32>
    %338 = arith.maximumf %331, %337 : vector<16x20xf32>
    %339 = math.sqrt %338 : vector<16x20xf32>
    %cst_267 = arith.constant 1.000000e+00 : f32
    %340 = vector.broadcast %cst_267 : f32 to vector<16x20xf32>
    %341 = arith.addf %340, %339 : vector<16x20xf32>
    %342 = tpu.reciprocal %341 {approx = true} : vector<16x20xf32> -> vector<16x20xf32>
    %cst_268 = arith.constant 0.000000e+00 : f32
    %343 = vector.broadcast %cst_268 : f32 to vector<20x16xf32>
    %344 = arith.maximumf %336, %343 : vector<20x16xf32>
    %345 = math.sqrt %344 : vector<20x16xf32>
    %cst_269 = arith.constant 1.000000e+00 : f32
    %346 = vector.broadcast %cst_269 : f32 to vector<20x16xf32>
    %347 = arith.addf %346, %345 : vector<20x16xf32>
    %348 = tpu.reciprocal %347 {approx = true} : vector<20x16xf32> -> vector<20x16xf32>
    %cst_270 = arith.constant dense<0.000000e+00> : vector<16xf32>
    %349 = vector.multi_reduction <add>, %342, %cst_270 [1] : vector<16x20xf32> to vector<16xf32>
    %350 = vector.shape_cast %349 : vector<16xf32> to vector<16x1xf32>
    %cst_271 = arith.constant dense<0.000000e+00> : vector<20xf32>
    %351 = vector.multi_reduction <add>, %348, %cst_271 [1] : vector<20x16xf32> to vector<20xf32>
    %352 = vector.shape_cast %351 : vector<20xf32> to vector<20x1xf32>
    %c0_272 = arith.constant 0 : index
    %c0_273 = arith.constant 0 : index
    %353 = vector.load %arg7[%c0_272, %c0_273] : memref<12x16xf32, #tpu.memory_space<vmem>>, vector<12x16xf32>
    %354 = vector.broadcast %350 : vector<16x1xf32> to vector<16x20xf32>
    %355 = arith.mulf %317, %354 : vector<16x20xf32>
    %cst_274 = arith.constant dense<0.000000e+00> : vector<12x20xf32>
    %356 = tpu.matmul %353, %355, %cst_274 {dimension_numbers = #tpu.dot_dimension_numbers<[1], [0], [0], [1], [0, 0, 1, 1], [], []>} : vector<12x16xf32>, vector<16x20xf32>, vector<12x20xf32> -> vector<12x20xf32>
    %c0_275 = arith.constant 0 : index
    %c0_276 = arith.constant 0 : index
    %357 = vector.load %arg8[%c0_275, %c0_276] : memref<16x20xf32, #tpu.memory_space<vmem>>, vector<16x20xf32>
    %358 = vector.broadcast %352 : vector<20x1xf32> to vector<20x20xf32>
    %359 = arith.mulf %318, %358 : vector<20x20xf32>
    %cst_277 = arith.constant dense<0.000000e+00> : vector<16x20xf32>
    %360 = tpu.matmul %357, %359, %cst_277 {dimension_numbers = #tpu.dot_dimension_numbers<[1], [0], [0], [1], [0, 0, 1, 1], [], []>} : vector<16x20xf32>, vector<20x20xf32>, vector<16x20xf32> -> vector<16x20xf32>
    %cst_278 = arith.constant dense<0.000000e+00> : vector<20xf32>
    %361 = vector.multi_reduction <add>, %356, %cst_278 [0] : vector<12x20xf32> to vector<20xf32>
    %362 = vector.shape_cast %361 : vector<20xf32> to vector<1x20xf32>
    %cst_279 = arith.constant 1.200000e+01 : f32
    %363 = vector.broadcast %cst_279 : f32 to vector<1x20xf32>
    %364 = arith.divf %362, %363 : vector<1x20xf32>
    %cst_280 = arith.constant dense<0.000000e+00> : vector<20xf32>
    %365 = vector.multi_reduction <add>, %360, %cst_280 [0] : vector<16x20xf32> to vector<20xf32>
    %366 = vector.shape_cast %365 : vector<20xf32> to vector<1x20xf32>
    %cst_281 = arith.constant 1.600000e+01 : f32
    %367 = vector.broadcast %cst_281 : f32 to vector<1x20xf32>
    %368 = arith.divf %366, %367 : vector<1x20xf32>
    %369 = tpu.concatenate %312, %364 in 0 : vector<1x20xf32>, vector<1x20xf32> -> vector<2x20xf32>
    %370 = tpu.concatenate %316, %368 in 0 : vector<1x20xf32>, vector<1x20xf32> -> vector<2x20xf32>
    %c0_282 = arith.constant 0 : index
    %c0_283 = arith.constant 0 : index
    %371 = vector.load %arg9[%c0_282, %c0_283] : memref<20x2xf32, #tpu.memory_space<vmem>>, vector<20x2xf32>
    %cst_284 = arith.constant dense<0.000000e+00> : vector<2x2xf32>
    %372 = tpu.matmul %369, %371, %cst_284 {dimension_numbers = #tpu.dot_dimension_numbers<[1], [0], [0], [1], [0, 0, 1, 1], [], []>} : vector<2x20xf32>, vector<20x2xf32>, vector<2x2xf32> -> vector<2x2xf32>
    %c0_285 = arith.constant 0 : index
    %c0_286 = arith.constant 0 : index
    %373 = vector.load %arg10[%c0_285, %c0_286] : memref<20x2xf32, #tpu.memory_space<vmem>>, vector<20x2xf32>
    %cst_287 = arith.constant dense<0.000000e+00> : vector<2x2xf32>
    %374 = tpu.matmul %370, %373, %cst_287 {dimension_numbers = #tpu.dot_dimension_numbers<[1], [0], [0], [1], [0, 0, 1, 1], [], []>} : vector<2x20xf32>, vector<20x2xf32>, vector<2x2xf32> -> vector<2x2xf32>
    %375 = arith.addf %372, %374 : vector<2x2xf32>
    %c0_288 = arith.constant 0 : index
    %c0_289 = arith.constant 0 : index
    %376 = vector.load %arg11[%c0_288, %c0_289] : memref<1x2xf32, #tpu.memory_space<vmem>>, vector<1x2xf32>
    %377 = vector.broadcast %376 : vector<1x2xf32> to vector<2x2xf32>
    %378 = arith.addf %375, %377 : vector<2x2xf32>
    %c0_290 = arith.constant 0 : index
    %c0_291 = arith.constant 0 : index
    %379 = vector.load %arg12[%c0_290, %c0_291] : memref<2x2xf32, #tpu.memory_space<vmem>>, vector<2x2xf32>
    tpu.vector_store %arg12[%c0_290, %c0_291], %378 {strides = array<i32>} : memref<2x2xf32, #tpu.memory_space<vmem>>, vector<2x2xf32>,
    return
  }
  func.func @transform_0(%arg0: i32) -> (i32, i32) {
    %c0_i32 = arith.constant 0 : i32
    %c0_i32_0 = arith.constant 0 : i32
    %c0_i32_1 = arith.constant 0 : i32
    return %c0_i32, %c0_i32_0 : i32, i32
  }
  func.func @transform_1(%arg0: i32) -> (i32, i32) {
    %c0_i32 = arith.constant 0 : i32
    %c0_i32_0 = arith.constant 0 : i32
    %c0_i32_1 = arith.constant 0 : i32
    return %c0_i32, %c0_i32_0 : i32, i32
  }
  func.func @transform_2(%arg0: i32) -> (i32, i32, i32) {
    %c0_i32 = arith.constant 0 : i32
    %c0_i32_0 = arith.constant 0 : i32
    %c0_i32_1 = arith.constant 0 : i32
    %c0_i32_2 = arith.constant 0 : i32
    return %c0_i32, %c0_i32_0, %c0_i32_1 : i32, i32, i32
  }
  func.func @transform_3(%arg0: i32) -> (i32, i32, i32) {
    %c0_i32 = arith.constant 0 : i32
    %c0_i32_0 = arith.constant 0 : i32
    %c0_i32_1 = arith.constant 0 : i32
    %c0_i32_2 = arith.constant 0 : i32
    return %c0_i32, %c0_i32_0, %c0_i32_1 : i32, i32, i32
  }
  func.func @transform_4(%arg0: i32) -> (i32, i32, i32) {
    %c0_i32 = arith.constant 0 : i32
    %c0_i32_0 = arith.constant 0 : i32
    %c0_i32_1 = arith.constant 0 : i32
    %c0_i32_2 = arith.constant 0 : i32
    return %c0_i32, %c0_i32_0, %c0_i32_1 : i32, i32, i32
  }
  func.func @transform_5(%arg0: i32) -> (i32, i32, i32) {
    %c0_i32 = arith.constant 0 : i32
    %c0_i32_0 = arith.constant 0 : i32
    %c0_i32_1 = arith.constant 0 : i32
    %c0_i32_2 = arith.constant 0 : i32
    return %c0_i32, %c0_i32_0, %c0_i32_1 : i32, i32, i32
  }
  func.func @transform_6(%arg0: i32) -> (i32, i32) {
    %c0_i32 = arith.constant 0 : i32
    %c0_i32_0 = arith.constant 0 : i32
    %c0_i32_1 = arith.constant 0 : i32
    return %c0_i32, %c0_i32_0 : i32, i32
  }
  func.func @transform_7(%arg0: i32) -> (i32, i32) {
    %c0_i32 = arith.constant 0 : i32
    %c0_i32_0 = arith.constant 0 : i32
    %c0_i32_1 = arith.constant 0 : i32
    return %c0_i32, %c0_i32_0 : i32, i32
  }
  func.func @transform_8(%arg0: i32) -> (i32, i32) {
    %c0_i32 = arith.constant 0 : i32
    %c0_i32_0 = arith.constant 0 : i32
    %c0_i32_1 = arith.constant 0 : i32
    return %c0_i32, %c0_i32_0 : i32, i32
  }
  func.func @transform_9(%arg0: i32) -> (i32, i32) {
    %c0_i32 = arith.constant 0 : i32
    %c0_i32_0 = arith.constant 0 : i32
    %c0_i32_1 = arith.constant 0 : i32
    return %c0_i32, %c0_i32_0 : i32, i32
  }
  func.func @transform_10(%arg0: i32) -> (i32, i32) {
    %c0_i32 = arith.constant 0 : i32
    %c0_i32_0 = arith.constant 0 : i32
    %c0_i32_1 = arith.constant 0 : i32
    return %c0_i32, %c0_i32_0 : i32, i32
  }
  func.func @transform_11(%arg0: i32) -> (i32, i32) {
    %c0_i32 = arith.constant 0 : i32
    %c0_i32_0 = arith.constant 0 : i32
    %c0_i32_1 = arith.constant 0 : i32
    return %c0_i32, %c0_i32_0 : i32, i32
  }
}

</mosaic_0001>

<llo_original>
// kernel: tpu_custom_call.1
$region0: #{tpu_custom_call.1}
  #allocation0 [shape = 'u32[]', space=smem, size = 0x4, offset = 0x4, fixed_abs, tag = 'smem constant byte address 0x4 - core index']
  #allocation1 [shape = 'u32[144,128]{1,0:T(1,128)}', space=vmem, size = 0x12000, scoped, tag = 'internal scratch']
  %s0 = inlined_call_operand.vmem [shape: s32[2,12], index: 0, kind: input, shape index: {}]
  %s1 = inlined_call_operand.vmem [shape: s32[2,16], index: 1, kind: input, shape index: {}]
  %s2 = inlined_call_operand.vmem [shape: f32[64,1,20], index: 2, kind: input, shape index: {}]
  %s3 = inlined_call_operand.vmem [shape: f32[25,1,20], index: 3, kind: input, shape index: {}]
  %s4 = inlined_call_operand.hbm [shape: f32[5,40,40], index: 4, kind: input, shape index: {}]
  %s5 = inlined_call_operand.vmem [shape: f32[1,1,40], index: 5, kind: input, shape index: {}]
  %s6 = inlined_call_operand.vmem [shape: f32[12,16], index: 6, kind: input, shape index: {}]
  %s7 = inlined_call_operand.vmem [shape: f32[16,20], index: 7, kind: input, shape index: {}]
  %s8 = inlined_call_operand.vmem [shape: f32[20,2], index: 8, kind: input, shape index: {}]
  %s9 = inlined_call_operand.vmem [shape: f32[20,2], index: 9, kind: input, shape index: {}]
  %s10 = inlined_call_operand.vmem [shape: f32[1,2], index: 10, kind: input, shape index: {}]
  %s11 = inlined_call_operand.hbm [shape: f32[2,2], index: 11, kind: output, shape index: {}]
  %s12 = sld [smem:[#allocation0]]
  $region66: #{tpu_custom_call.1} parent=0
    _
  %s14 = ssub.s32 1, %s12
  %s15 = scalar_select 0, %s14, %s12
  $region1: #{tpu_custom_call.1} parent=0
    #allocation2 [shape = 'u8[1024]{0}', space=smem, size = 0x400, scoped, tag = 'input window, operand 0, single buffered']
    #allocation3 [shape = 's32[1]{0}', space=sflag, size = 0x4, scoped, tag = 'scoped memory for tpu_custom_call.1']
    #allocation4 [shape = 's32[1]{0}', space=sflag, size = 0x4, scoped, tag = 'scoped memory for tpu_custom_call.1']
    #allocation5 [shape = 's32[1]{0}', space=sflag, size = 0x4, scoped, tag = 'scoped memory for tpu_custom_call.1']
    #allocation6 [shape = 'u8[1024]{0}', space=smem, size = 0x400, scoped, tag = 'input window, operand 1, single buffered']
    #allocation7 [shape = 's32[1]{0}', space=sflag, size = 0x4, scoped, tag = 'scoped memory for tpu_custom_call.1']
    #allocation8 [shape = 'u8[102400]{0}', space=vmem, size = 0x19000, scoped, tag = 'input window, operand 4, single buffered']
    #allocation9 [shape = 'u8[1024]{0}', space=vmem, size = 0x400, scoped, tag = 'output window, operand 0, single buffered']
    %16 = vsyncpa [#allocation5], 0
    %17 = vsyncpa [#allocation7], 0
    %18 = vsyncpa [#allocation3], 0
    %19 = vsyncpa [#allocation4], 0
    // Predicated region
    $region2: #{tpu_custom_call.1} parent=1 // pred_check
      _
    $region3: #{tpu_custom_call.1} parent=1 // pred_check_branch
      %21 = sbr.rel (0) target = $region5
    $region4: #{tpu_custom_call.1} parent=1 // pred_region
      %s23 = ssub.s32 32, 32
      %24 = vsyncadd [#allocation5], %s23
      %s26 = sshll.u32 %s0, 4
      %s27 = int_to_ptr.vmem [resolvable:$true] %s26
      %29 = dma.vmem_to_smem %s27, 32, [#allocation2], [#allocation5]
    $region5: #{tpu_custom_call.1} parent=1 // pred_fallthru
      _
    // Predicated region
    $region6: #{tpu_custom_call.1} parent=1 // pred_check
      _
    $region7: #{tpu_custom_call.1} parent=1 // pred_check_branch
      %31 = sbr.rel (0) target = $region9
    $region8: #{tpu_custom_call.1} parent=1 // pred_region
      %s33 = ssub.s32 32, 32
      %34 = vsyncadd [#allocation7], %s33
      %s36 = sshll.u32 %s1, 4
      %s37 = int_to_ptr.vmem [resolvable:$true] %s36
      %39 = dma.vmem_to_smem %s37, 32, [#allocation6], [#allocation7]
    $region9: #{tpu_custom_call.1} parent=1 // pred_fallthru
      _
    // Predicated region
    $region10: #{tpu_custom_call.1} parent=1 // pred_check
      _
    $region11: #{tpu_custom_call.1} parent=1 // pred_check_branch
      %41 = sbr.rel (0) target = $region13
    $region12: #{tpu_custom_call.1} parent=1 // pred_region
      _
    $region13: #{tpu_custom_call.1} parent=1 // pred_fallthru
      _
    // Predicated region
    $region14: #{tpu_custom_call.1} parent=1 // pred_check
      _
    $region15: #{tpu_custom_call.1} parent=1 // pred_check_branch
      %43 = sbr.rel (0) target = $region17
    $region16: #{tpu_custom_call.1} parent=1 // pred_region
      _
    $region17: #{tpu_custom_call.1} parent=1 // pred_fallthru
      _
    // Predicated region
    $region18: #{tpu_custom_call.1} parent=1 // pred_check
      _
    $region19: #{tpu_custom_call.1} parent=1 // pred_check_branch
      %45 = sbr.rel (0) target = $region21
    $region20: #{tpu_custom_call.1} parent=1 // pred_region
      %s47 = ssub.s32 3200, 3200
      %48 = vsyncadd [#allocation3], %s47
      %s49 = sshll.u32 [#allocation8], 4
      %s50 = int_to_ptr.vmem [resolvable:$true] %s49
      %55 = dma.hbm_to_vmem [thread:$0]  %s4, 3200, %s50, [#allocation3], 128, 128, 8
    $region21: #{tpu_custom_call.1} parent=1 // pred_fallthru
      _
    // Predicated region
    $region22: #{tpu_custom_call.1} parent=1 // pred_check
      _
    $region23: #{tpu_custom_call.1} parent=1 // pred_check_branch
      %57 = sbr.rel (0) target = $region25
    $region24: #{tpu_custom_call.1} parent=1 // pred_region
      _
    $region25: #{tpu_custom_call.1} parent=1 // pred_fallthru
      _
    // Predicated region
    $region26: #{tpu_custom_call.1} parent=1 // pred_check
      _
    $region27: #{tpu_custom_call.1} parent=1 // pred_check_branch
      %59 = sbr.rel (0) target = $region29
    $region28: #{tpu_custom_call.1} parent=1 // pred_region
      _
    $region29: #{tpu_custom_call.1} parent=1 // pred_fallthru
      _
    // Predicated region
    $region30: #{tpu_custom_call.1} parent=1 // pred_check
      _
    $region31: #{tpu_custom_call.1} parent=1 // pred_check_branch
      %61 = sbr.rel (0) target = $region33
    $region32: #{tpu_custom_call.1} parent=1 // pred_region
      _
    $region33: #{tpu_custom_call.1} parent=1 // pred_fallthru
      _
    // Predicated region
    $region34: #{tpu_custom_call.1} parent=1 // pred_check
      _
    $region35: #{tpu_custom_call.1} parent=1 // pred_check_branch
      %63 = sbr.rel (0) target = $region37
    $region36: #{tpu_custom_call.1} parent=1 // pred_region
      _
    $region37: #{tpu_custom_call.1} parent=1 // pred_fallthru
      _
    // Predicated region
    $region38: #{tpu_custom_call.1} parent=1 // pred_check
      _
    $region39: #{tpu_custom_call.1} parent=1 // pred_check_branch
      %65 = sbr.rel (0) target = $region41
    $region40: #{tpu_custom_call.1} parent=1 // pred_region
      _
    $region41: #{tpu_custom_call.1} parent=1 // pred_fallthru
      _
    // Predicated region
    $region42: #{tpu_custom_call.1} parent=1 // pred_check
      _
    $region43: #{tpu_custom_call.1} parent=1 // pred_check_branch
      %67 = sbr.rel (0) target = $region45
    $region44: #{tpu_custom_call.1} parent=1 // pred_region
      _
    $region45: #{tpu_custom_call.1} parent=1 // pred_fallthru
      _
    // Predicated region
    $region46: #{tpu_custom_call.1} parent=1 // pred_check
      _
    $region47: #{tpu_custom_call.1} parent=1 // pred_check_branch
      %69 = sbr.rel (0) target = $region49
    $region48: #{tpu_custom_call.1} parent=1 // pred_region
      %70 = dma.done [#allocation5], 32
    $region49: #{tpu_custom_call.1} parent=1 // pred_fallthru
      _
    // Predicated region
    $region50: #{tpu_custom_call.1} parent=1 // pred_check
      _
    $region51: #{tpu_custom_call.1} parent=1 // pred_check_branch
      %72 = sbr.rel (0) target = $region53
    $region52: #{tpu_custom_call.1} parent=1 // pred_region
      %73 = dma.done [#allocation7], 32
    $region53: #{tpu_custom_call.1} parent=1 // pred_fallthru
      _
    // Predicated region
    $region54: #{tpu_custom_call.1} parent=1 // pred_check
      _
    $region55: #{tpu_custom_call.1} parent=1 // pred_check_branch
      %75 = sbr.rel (0) target = $region57
    $region56: #{tpu_custom_call.1} parent=1 // pred_region
      %76 = dma.done [#allocation3], 3200
    $region57: #{tpu_custom_call.1} parent=1 // pred_fallthru
      _
    %77 = sfence
    %s78 = sld [smem:[#allocation2]]
    %s79 = scalar_lea.vmem %s2, %s78
    %v80 = vld [vmem:[%s79] sm:$0x1]
    %s81 = sld [smem:[#allocation2 + $0x1]]
    %s82 = scalar_lea.vmem %s2, %s81
    %v83 = vld [vmem:[%s82] sm:$0x1]
    %s84 = sld [smem:[#allocation2 + $0x2]]
    %s85 = scalar_lea.vmem %s2, %s84
    %v86 = vld [vmem:[%s85] sm:$0x1]
    %s87 = sld [smem:[#allocation2 + $0x3]]
    %s88 = scalar_lea.vmem %s2, %s87
    %v89 = vld [vmem:[%s88] sm:$0x1]
    %s90 = sld [smem:[#allocation2 + $0x4]]
    %s91 = scalar_lea.vmem %s2, %s90
    %v92 = vld [vmem:[%s91] sm:$0x1]
    %s93 = sld [smem:[#allocation2 + $0x5]]
    %s94 = scalar_lea.vmem %s2, %s93
    %v95 = vld [vmem:[%s94] sm:$0x1]
    %s96 = sld [smem:[#allocation2 + $0x6]]
    %s97 = scalar_lea.vmem %s2, %s96
    %v98 = vld [vmem:[%s97] sm:$0x1]
    %s99 = sld [smem:[#allocation2 + $0x7]]
    %s100 = scalar_lea.vmem %s2, %s99
    %v101 = vld [vmem:[%s100] sm:$0x1]
    %s102 = sld [smem:[#allocation2 + $0x8]]
    %s103 = scalar_lea.vmem %s2, %s102
    %v104 = vld [vmem:[%s103] sm:$0x1]
    %s105 = sld [smem:[#allocation2 + $0x9]]
    %s106 = scalar_lea.vmem %s2, %s105
    %v107 = vld [vmem:[%s106] sm:$0x1]
    %s108 = sld [smem:[#allocation2 + $0xa]]
    %s109 = scalar_lea.vmem %s2, %s108
    %v110 = vld [vmem:[%s109] sm:$0x1]
    %s111 = sld [smem:[#allocation2 + $0xb]]
    %s112 = scalar_lea.vmem %s2, %s111
    %v113 = vld [vmem:[%s112] sm:$0x1]
    %v115 = vlaneseq
    %v116 = vshrl.u32 %v115, 7
    %v117 = vsub.s32 0, %v116
    %v118 = vrot.slane %v83, %v117
    %v121 = vlaneseq
    %v122 = vshrl.u32 %v121, 7
    %v123 = vsub.s32 0, %v122
    %v124 = vrot.slane %v86, %v123
    %v127 = vlaneseq
    %v128 = vshrl.u32 %v127, 7
    %v129 = vsub.s32 0, %v128
    %v130 = vrot.slane %v89, %v129
    %v133 = vlaneseq
    %v134 = vshrl.u32 %v133, 7
    %v135 = vsub.s32 0, %v134
    %v136 = vrot.slane %v92, %v135
    %v139 = vlaneseq
    %v140 = vshrl.u32 %v139, 7
    %v141 = vsub.s32 0, %v140
    %v142 = vrot.slane %v95, %v141
    %v145 = vlaneseq
    %v146 = vshrl.u32 %v145, 7
    %v147 = vsub.s32 0, %v146
    %v148 = vrot.slane %v98, %v147
    %v151 = vlaneseq
    %v152 = vshrl.u32 %v151, 7
    %v153 = vsub.s32 0, %v152
    %v154 = vrot.slane %v101, %v153
    %v157 = vlaneseq
    %v158 = vshrl.u32 %v157, 7
    %v159 = vsub.s32 0, %v158
    %v160 = vrot.slane %v107, %v159
    %v163 = vlaneseq
    %v164 = vshrl.u32 %v163, 7
    %v165 = vsub.s32 0, %v164
    %v166 = vrot.slane %v110, %v165
    %v169 = vlaneseq
    %v170 = vshrl.u32 %v169, 7
    %v171 = vsub.s32 0, %v170
    %v172 = vrot.slane %v113, %v171
    %vm174 = vcmask 1040384
    %v175 = vsel %vm174, %v80, %v118
    %vm176 = vcmask 1041408
    %v177 = vsel %vm176, %v175, %v124
    %vm178 = vcmask 1042432
    %v179 = vsel %vm178, %v177, %v130
    %vm180 = vcmask 1043456
    %v181 = vsel %vm180, %v179, %v136
    %vm182 = vcmask 1044480
    %v183 = vsel %vm182, %v181, %v142
    %vm184 = vcmask 1045504
    %v185 = vsel %vm184, %v183, %v148
    %vm186 = vcmask 1046528
    %v187 = vsel %vm186, %v185, %v154
    %v188 = vsel %vm174, %v104, %v160
    %v189 = vsel %vm176, %v188, %v166
    %v190 = vsel %vm178, %v189, %v172
    %v191 = vsel %vm180, %v190, 0.0
    %s192 = sld [smem:[#allocation6]]
    %s193 = scalar_lea.vmem %s3, %s192
    %v194 = vld [vmem:[%s193] sm:$0x1]
    %s195 = sld [smem:[#allocation6 + $0x1]]
    %s196 = scalar_lea.vmem %s3, %s195
    %v197 = vld [vmem:[%s196] sm:$0x1]
    %s198 = sld [smem:[#allocation6 + $0x2]]
    %s199 = scalar_lea.vmem %s3, %s198
    %v200 = vld [vmem:[%s199] sm:$0x1]
    %s201 = sld [smem:[#allocation6 + $0x3]]
    %s202 = scalar_lea.vmem %s3, %s201
    %v203 = vld [vmem:[%s202] sm:$0x1]
    %s204 = sld [smem:[#allocation6 + $0x4]]
    %s205 = scalar_lea.vmem %s3, %s204
    %v206 = vld [vmem:[%s205] sm:$0x1]
    %s207 = sld [smem:[#allocation6 + $0x5]]
    %s208 = scalar_lea.vmem %s3, %s207
    %v209 = vld [vmem:[%s208] sm:$0x1]
    %s210 = sld [smem:[#allocation6 + $0x6]]
    %s211 = scalar_lea.vmem %s3, %s210
    %v212 = vld [vmem:[%s211] sm:$0x1]
    %s213 = sld [smem:[#allocation6 + $0x7]]
    %s214 = scalar_lea.vmem %s3, %s213
    %v215 = vld [vmem:[%s214] sm:$0x1]
    %s216 = sld [smem:[#allocation6 + $0x8]]
    %s217 = scalar_lea.vmem %s3, %s216
    %v218 = vld [vmem:[%s217] sm:$0x1]
    %s219 = sld [smem:[#allocation6 + $0x9]]
    %s220 = scalar_lea.vmem %s3, %s219
    %v221 = vld [vmem:[%s220] sm:$0x1]
    %s222 = sld [smem:[#allocation6 + $0xa]]
    %s223 = scalar_lea.vmem %s3, %s222
    %v224 = vld [vmem:[%s223] sm:$0x1]
    %s225 = sld [smem:[#allocation6 + $0xb]]
    %s226 = scalar_lea.vmem %s3, %s225
    %v227 = vld [vmem:[%s226] sm:$0x1]
    %s228 = sld [smem:[#allocation6 + $0xc]]
    %s229 = scalar_lea.vmem %s3, %s228
    %v230 = vld [vmem:[%s229] sm:$0x1]
    %s231 = sld [smem:[#allocation6 + $0xd]]
    %s232 = scalar_lea.vmem %s3, %s231
    %v233 = vld [vmem:[%s232] sm:$0x1]
    %s234 = sld [smem:[#allocation6 + $0xe]]
    %s235 = scalar_lea.vmem %s3, %s234
    %v236 = vld [vmem:[%s235] sm:$0x1]
    %s237 = sld [smem:[#allocation6 + $0xf]]
    %s238 = scalar_lea.vmem %s3, %s237
    %v239 = vld [vmem:[%s238] sm:$0x1]
    %v241 = vlaneseq
    %v242 = vshrl.u32 %v241, 7
    %v243 = vsub.s32 0, %v242
    %v244 = vrot.slane %v197, %v243
    %v247 = vlaneseq
    %v248 = vshrl.u32 %v247, 7
    %v249 = vsub.s32 0, %v248
    %v250 = vrot.slane %v200, %v249
    %v253 = vlaneseq
    %v254 = vshrl.u32 %v253, 7
    %v255 = vsub.s32 0, %v254
    %v256 = vrot.slane %v203, %v255
    %v259 = vlaneseq
    %v260 = vshrl.u32 %v259, 7
    %v261 = vsub.s32 0, %v260
    %v262 = vrot.slane %v206, %v261
    %v265 = vlaneseq
    %v266 = vshrl.u32 %v265, 7
    %v267 = vsub.s32 0, %v266
    %v268 = vrot.slane %v209, %v267
    %v271 = vlaneseq
    %v272 = vshrl.u32 %v271, 7
    %v273 = vsub.s32 0, %v272
    %v274 = vrot.slane %v212, %v273
    %v277 = vlaneseq
    %v278 = vshrl.u32 %v277, 7
    %v279 = vsub.s32 0, %v278
    %v280 = vrot.slane %v215, %v279
    %v283 = vlaneseq
    %v284 = vshrl.u32 %v283, 7
    %v285 = vsub.s32 0, %v284
    %v286 = vrot.slane %v221, %v285
    %v289 = vlaneseq
    %v290 = vshrl.u32 %v289, 7
    %v291 = vsub.s32 0, %v290
    %v292 = vrot.slane %v224, %v291
    %v295 = vlaneseq
    %v296 = vshrl.u32 %v295, 7
    %v297 = vsub.s32 0, %v296
    %v298 = vrot.slane %v227, %v297
    %v301 = vlaneseq
    %v302 = vshrl.u32 %v301, 7
    %v303 = vsub.s32 0, %v302
    %v304 = vrot.slane %v230, %v303
    %v307 = vlaneseq
    %v308 = vshrl.u32 %v307, 7
    %v309 = vsub.s32 0, %v308
    %v310 = vrot.slane %v233, %v309
    %v313 = vlaneseq
    %v314 = vshrl.u32 %v313, 7
    %v315 = vsub.s32 0, %v314
    %v316 = vrot.slane %v236, %v315
    %v319 = vlaneseq
    %v320 = vshrl.u32 %v319, 7
    %v321 = vsub.s32 0, %v320
    %v322 = vrot.slane %v239, %v321
    %v324 = vsel %vm174, %v194, %v244
    %v325 = vsel %vm176, %v324, %v250
    %v326 = vsel %vm178, %v325, %v256
    %v327 = vsel %vm180, %v326, %v262
    %v328 = vsel %vm182, %v327, %v268
    %v329 = vsel %vm184, %v328, %v274
    %v330 = vsel %vm186, %v329, %v280
    %v331 = vsel %vm174, %v218, %v286
    %v332 = vsel %vm176, %v331, %v292
    %v333 = vsel %vm178, %v332, %v298
    %v334 = vsel %vm180, %v333, %v304
    %v335 = vsel %vm182, %v334, %v310
    %v336 = vsel %vm184, %v335, %v316
    %v337 = vsel %vm186, %v336, %v322
    %340 = vrot.lane.b32.xlu0 %v330, 20
    %v341 = vpop.permute.xlu0 %340
    %342 = vrot.lane.b32.xlu0 %v337, 20
    %v343 = vpop.permute.xlu0 %342
    %vm346 = vcmask 162816
    %v347 = vsel %vm346, %v187, %v341
    %v348 = vsel %vm346, %v191, %v343
    %s349 = sld [smem:[#allocation2 + $0x80]]
    %s350 = scalar_lea.vmem %s2, %s349
    %v351 = vld [vmem:[%s350] sm:$0x1]
    %s352 = sld [smem:[#allocation2 + $0x81]]
    %s353 = scalar_lea.vmem %s2, %s352
    %v354 = vld [vmem:[%s353] sm:$0x1]
    %s355 = sld [smem:[#allocation2 + $0x82]]
    %s356 = scalar_lea.vmem %s2, %s355
    %v357 = vld [vmem:[%s356] sm:$0x1]
    %s358 = sld [smem:[#allocation2 + $0x83]]
    %s359 = scalar_lea.vmem %s2, %s358
    %v360 = vld [vmem:[%s359] sm:$0x1]
    %s361 = sld [smem:[#allocation2 + $0x84]]
    %s362 = scalar_lea.vmem %s2, %s361
    %v363 = vld [vmem:[%s362] sm:$0x1]
    %s364 = sld [smem:[#allocation2 + $0x85]]
    %s365 = scalar_lea.vmem %s2, %s364
    %v366 = vld [vmem:[%s365] sm:$0x1]
    %s367 = sld [smem:[#allocation2 + $0x86]]
    %s368 = scalar_lea.vmem %s2, %s367
    %v369 = vld [vmem:[%s368] sm:$0x1]
    %s370 = sld [smem:[#allocation2 + $0x87]]
    %s371 = scalar_lea.vmem %s2, %s370
    %v372 = vld [vmem:[%s371] sm:$0x1]
    %s373 = sld [smem:[#allocation2 + $0x88]]
    %s374 = scalar_lea.vmem %s2, %s373
    %v375 = vld [vmem:[%s374] sm:$0x1]
    %s376 = sld [smem:[#allocation2 + $0x89]]
    %s377 = scalar_lea.vmem %s2, %s376
    %v378 = vld [vmem:[%s377] sm:$0x1]
    %s379 = sld [smem:[#allocation2 + $0x8a]]
    %s380 = scalar_lea.vmem %s2, %s379
    %v381 = vld [vmem:[%s380] sm:$0x1]
    %s382 = sld [smem:[#allocation2 + $0x8b]]
    %s383 = scalar_lea.vmem %s2, %s382
    %v384 = vld [vmem:[%s383] sm:$0x1]
    %v386 = vlaneseq
    %v387 = vshrl.u32 %v386, 7
    %v388 = vsub.s32 0, %v387
    %v389 = vrot.slane %v354, %v388
    %v392 = vlaneseq
    %v393 = vshrl.u32 %v392, 7
    %v394 = vsub.s32 0, %v393
    %v395 = vrot.slane %v357, %v394
    %v398 = vlaneseq
    %v399 = vshrl.u32 %v398, 7
    %v400 = vsub.s32 0, %v399
    %v401 = vrot.slane %v360, %v400
    %v404 = vlaneseq
    %v405 = vshrl.u32 %v404, 7
    %v406 = vsub.s32 0, %v405
    %v407 = vrot.slane %v363, %v406
    %v410 = vlaneseq
    %v411 = vshrl.u32 %v410, 7
    %v412 = vsub.s32 0, %v411
    %v413 = vrot.slane %v366, %v412
    %v416 = vlaneseq
    %v417 = vshrl.u32 %v416, 7
    %v418 = vsub.s32 0, %v417
    %v419 = vrot.slane %v369, %v418
    %v422 = vlaneseq
    %v423 = vshrl.u32 %v422, 7
    %v424 = vsub.s32 0, %v423
    %v425 = vrot.slane %v372, %v424
    %v428 = vlaneseq
    %v429 = vshrl.u32 %v428, 7
    %v430 = vsub.s32 0, %v429
    %v431 = vrot.slane %v378, %v430
    %v434 = vlaneseq
    %v435 = vshrl.u32 %v434, 7
    %v436 = vsub.s32 0, %v435
    %v437 = vrot.slane %v381, %v436
    %v440 = vlaneseq
    %v441 = vshrl.u32 %v440, 7
    %v442 = vsub.s32 0, %v441
    %v443 = vrot.slane %v384, %v442
    %v445 = vsel %vm174, %v351, %v389
    %v446 = vsel %vm176, %v445, %v395
    %v447 = vsel %vm178, %v446, %v401
    %v448 = vsel %vm180, %v447, %v407
    %v449 = vsel %vm182, %v448, %v413
    %v450 = vsel %vm184, %v449, %v419
    %v451 = vsel %vm186, %v450, %v425
    %v452 = vsel %vm174, %v375, %v431
    %v453 = vsel %vm176, %v452, %v437
    %v454 = vsel %vm178, %v453, %v443
    %v455 = vsel %vm180, %v454, 0.0
    %s456 = sld [smem:[#allocation6 + $0x80]]
    %s457 = scalar_lea.vmem %s3, %s456
    %v458 = vld [vmem:[%s457] sm:$0x1]
    %s459 = sld [smem:[#allocation6 + $0x81]]
    %s460 = scalar_lea.vmem %s3, %s459
    %v461 = vld [vmem:[%s460] sm:$0x1]
    %s462 = sld [smem:[#allocation6 + $0x82]]
    %s463 = scalar_lea.vmem %s3, %s462
    %v464 = vld [vmem:[%s463] sm:$0x1]
    %s465 = sld [smem:[#allocation6 + $0x83]]
    %s466 = scalar_lea.vmem %s3, %s465
    %v467 = vld [vmem:[%s466] sm:$0x1]
    %s468 = sld [smem:[#allocation6 + $0x84]]
    %s469 = scalar_lea.vmem %s3, %s468
    %v470 = vld [vmem:[%s469] sm:$0x1]
    %s471 = sld [smem:[#allocation6 + $0x85]]
    %s472 = scalar_lea.vmem %s3, %s471
    %v473 = vld [vmem:[%s472] sm:$0x1]
    %s474 = sld [smem:[#allocation6 + $0x86]]
    %s475 = scalar_lea.vmem %s3, %s474
    %v476 = vld [vmem:[%s475] sm:$0x1]
    %s477 = sld [smem:[#allocation6 + $0x87]]
    %s478 = scalar_lea.vmem %s3, %s477
    %v479 = vld [vmem:[%s478] sm:$0x1]
    %s480 = sld [smem:[#allocation6 + $0x88]]
    %s481 = scalar_lea.vmem %s3, %s480
    %v482 = vld [vmem:[%s481] sm:$0x1]
    %s483 = sld [smem:[#allocation6 + $0x89]]
    %s484 = scalar_lea.vmem %s3, %s483
    %v485 = vld [vmem:[%s484] sm:$0x1]
    %s486 = sld [smem:[#allocation6 + $0x8a]]
    %s487 = scalar_lea.vmem %s3, %s486
    %v488 = vld [vmem:[%s487] sm:$0x1]
    %s489 = sld [smem:[#allocation6 + $0x8b]]
    %s490 = scalar_lea.vmem %s3, %s489
    %v491 = vld [vmem:[%s490] sm:$0x1]
    %s492 = sld [smem:[#allocation6 + $0x8c]]
    %s493 = scalar_lea.vmem %s3, %s492
    %v494 = vld [vmem:[%s493] sm:$0x1]
    %s495 = sld [smem:[#allocation6 + $0x8d]]
    %s496 = scalar_lea.vmem %s3, %s495
    %v497 = vld [vmem:[%s496] sm:$0x1]
    %s498 = sld [smem:[#allocation6 + $0x8e]]
    %s499 = scalar_lea.vmem %s3, %s498
    %v500 = vld [vmem:[%s499] sm:$0x1]
    %s501 = sld [smem:[#allocation6 + $0x8f]]
    %s502 = scalar_lea.vmem %s3, %s501
    %v503 = vld [vmem:[%s502] sm:$0x1]
    %v505 = vlaneseq
    %v506 = vshrl.u32 %v505, 7
    %v507 = vsub.s32 0, %v506
    %v508 = vrot.slane %v461, %v507
    %v511 = vlaneseq
    %v512 = vshrl.u32 %v511, 7
    %v513 = vsub.s32 0, %v512
    %v514 = vrot.slane %v464, %v513
    %v517 = vlaneseq
    %v518 = vshrl.u32 %v517, 7
    %v519 = vsub.s32 0, %v518
    %v520 = vrot.slane %v467, %v519
    %v523 = vlaneseq
    %v524 = vshrl.u32 %v523, 7
    %v525 = vsub.s32 0, %v524
    %v526 = vrot.slane %v470, %v525
    %v529 = vlaneseq
    %v530 = vshrl.u32 %v529, 7
    %v531 = vsub.s32 0, %v530
    %v532 = vrot.slane %v473, %v531
    %v535 = vlaneseq
    %v536 = vshrl.u32 %v535, 7
    %v537 = vsub.s32 0, %v536
    %v538 = vrot.slane %v476, %v537
    %v541 = vlaneseq
    %v542 = vshrl.u32 %v541, 7
    %v543 = vsub.s32 0, %v542
    %v544 = vrot.slane %v479, %v543
    %v547 = vlaneseq
    %v548 = vshrl.u32 %v547, 7
    %v549 = vsub.s32 0, %v548
    %v550 = vrot.slane %v485, %v549
    %v553 = vlaneseq
    %v554 = vshrl.u32 %v553, 7
    %v555 = vsub.s32 0, %v554
    %v556 = vrot.slane %v488, %v555
    %v559 = vlaneseq
    %v560 = vshrl.u32 %v559, 7
    %v561 = vsub.s32 0, %v560
    %v562 = vrot.slane %v491, %v561
    %v565 = vlaneseq
    %v566 = vshrl.u32 %v565, 7
    %v567 = vsub.s32 0, %v566
    %v568 = vrot.slane %v494, %v567
    %v571 = vlaneseq
    %v572 = vshrl.u32 %v571, 7
    %v573 = vsub.s32 0, %v572
    %v574 = vrot.slane %v497, %v573
    %v577 = vlaneseq
    %v578 = vshrl.u32 %v577, 7
    %v579 = vsub.s32 0, %v578
    %v580 = vrot.slane %v500, %v579
    %v583 = vlaneseq
    %v584 = vshrl.u32 %v583, 7
    %v585 = vsub.s32 0, %v584
    %v586 = vrot.slane %v503, %v585
    %v588 = vsel %vm174, %v458, %v508
    %v589 = vsel %vm176, %v588, %v514
    %v590 = vsel %vm178, %v589, %v520
    %v591 = vsel %vm180, %v590, %v526
    %v592 = vsel %vm182, %v591, %v532
    %v593 = vsel %vm184, %v592, %v538
    %v594 = vsel %vm186, %v593, %v544
    %v595 = vsel %vm174, %v482, %v550
    %v596 = vsel %vm176, %v595, %v556
    %v597 = vsel %vm178, %v596, %v562
    %v598 = vsel %vm180, %v597, %v568
    %v599 = vsel %vm182, %v598, %v574
    %v600 = vsel %vm184, %v599, %v580
    %v601 = vsel %vm186, %v600, %v586
    %604 = vrot.lane.b32.xlu0 %v594, 20
    %v605 = vpop.permute.xlu0 %604
    %606 = vrot.lane.b32.xlu0 %v601, 20
    %v607 = vpop.permute.xlu0 %606
    %v610 = vsel %vm346, %v451, %v605
    %v611 = vsel %vm346, %v455, %v607
    %v614 = vrot.slane %v347, 4
    %v615 = vrot.slane %v348, 4
    %v616 = vsel %vm180, %v614, %v615
    %v621 = vrot.slane %v610, 4
    %v622 = vrot.slane %v611, 4
    %v623 = vsel %vm180, %v621, %v622
    %v626 = vsel %vm180, 0.0, %v614
    %v627 = vsel %vm180, %v615, 0.0
    %v628 = vsel %vm180, 0.0, %v621
    %v629 = vsel %vm180, %v622, 0.0
    %v630 = vld [vmem:[#allocation8] sm:$0xff]
    %v631 = vld [vmem:[#allocation8 + $0x8] sm:$0xff]
    %v632 = vld [vmem:[#allocation8 + $0x10] sm:$0xff]
    %v633 = vld [vmem:[#allocation8 + $0x18] sm:$0xff]
    %v634 = vld [vmem:[#allocation8 + $0x20] sm:$0xff]
    %s635 = scalar_lea.vmem [#allocation8], 40
    %v636 = vld [vmem:[%s635] sm:$0xff]
    %v637 = vld [vmem:[%s635 + $0x8] sm:$0xff]
    %v638 = vld [vmem:[%s635 + $0x10] sm:$0xff]
    %v639 = vld [vmem:[%s635 + $0x18] sm:$0xff]
    %v640 = vld [vmem:[%s635 + $0x20] sm:$0xff]
    %v645 = vrot.slane %v626, 1
    %v646 = vrot.slane %v616, 1
    %v647 = vsel %vm186, %v645, %v646
    %v648 = vrot.slane %v627, 1
    %v649 = vsel %vm186, %v646, %v648
    %v650 = vrot.slane %v628, 1
    %v651 = vsel %vm186, %v648, %v650
    %v652 = vrot.slane %v623, 1
    %v653 = vsel %vm186, %v650, %v652
    %v654 = vrot.slane %v629, 1
    %v655 = vsel %vm186, %v652, %v654
    %vm656 = vcmask 326656
    %v657 = vsel %vm656, %v647, 0
    %v659 = vsel %vm656, %v649, 0
    %v661 = vsel %vm656, %v651, 0
    %v663 = vsel %vm656, %v653, 0
    %v665 = vsel %vm656, %v655, 0
    %v667 = vsel %vm656, %v654, 0
    %669 = vmatprep.subr.mxu0 0.0
    %670 = vmatpush1.msra.mxu0 %v636
    %671 = vmatprep.subr.mxu0 0.0
    %672 = vmatpush1.msra.mxu0 %v637
    %673 = vmatprep.subr.mxu0 0.0
    %674 = vmatpush1.msra.mxu0 %v638
    %675 = vmatprep.subr.mxu0 0.0
    %676 = vmatpush1.msra.mxu0 %v639
    %677 = vmatprep.subr.mxu0 0.0
    %678 = vmatpush1.msra.mxu0 %v640
    %679 = vmatprep.subr.mxu0 0.0
    %680 = vmatpush1.msra.mxu0 0.0
    %681 = vmatprep.subr.mxu0 0.0
    %682 = vmatpush1.msra.mxu0 0.0
    %683 = vmatprep.subr.mxu0 0.0
    %684 = vmatpush1.msra.mxu0 0.0
    %685 = vmatprep.subr.mxu0 0.0
    %686 = vmatpush1.msra.mxu0 0.0
    %687 = vmatprep.subr.mxu0 0.0
    %688 = vmatpush1.msra.mxu0 0.0
    %689 = vmatprep.subr.mxu0 0.0
    %690 = vmatpush1.msra.mxu0 0.0
    %691 = vmatprep.subr.mxu0 0.0
    %692 = vmatpush1.msra.mxu0 0.0
    %693 = vmatprep.subr.mxu0 0.0
    %694 = vmatpush1.msra.mxu0 0.0
    %695 = vmatprep.subr.mxu0 0.0
    %696 = vmatpush1.msra.mxu0 0.0
    %697 = vmatprep.subr.mxu0 0.0
    %698 = vmatpush1.msra.mxu0 0.0
    %699 = vmatprep.subr.mxu0 0.0
    %700 = vmatpush1.msra.mxu0 0.0
    %701 = vmatprep.subr.mxu0 0.0
    %702 = vmatpush1.msra.mxu0 0.0
    %703 = vmatprep.subr.mxu0 0.0
    %704 = vmatpush1.msra.mxu0 0.0
    %705 = vmatprep.subr.mxu0 0.0
    %706 = vmatpush1.msra.mxu0 0.0
    %707 = vmatprep.subr.mxu0 0.0
    %708 = vmatpush1.msra.mxu0 0.0
    %709 = vmatprep.subr.mxu0 0.0
    %710 = vmatpush1.msra.mxu0 0.0
    %711 = vmatprep.subr.mxu0 0.0
    %712 = vmatpush1.msra.mxu0 0.0
    %713 = vmatprep.subr.mxu0 0.0
    %714 = vmatpush1.msra.mxu0 0.0
    %715 = vmatprep.subr.mxu0 0.0
    %716 = vmatpush1.msra.mxu0 0.0
    %717 = vmatprep.subr.mxu0 0.0
    %718 = vmatpush1.msra.mxu0 0.0
    %719 = vmatprep.subr.mxu0 0.0
    %720 = vmatpush1.msra.mxu0 0.0
    %721 = vmatprep.subr.mxu0 0.0
    %722 = vmatpush1.msra.mxu0 0.0
    %723 = vmatprep.subr.mxu0 0.0
    %724 = vmatpush1.msra.mxu0 0.0
    %725 = vmatprep.subr.mxu0 0.0
    %726 = vmatpush1.msra.mxu0 0.0
    %727 = vmatprep.subr.mxu0 0.0
    %728 = vmatpush1.msra.mxu0 0.0
    %729 = vmatprep.subr.mxu0 0.0
    %730 = vmatpush1.msra.mxu0 0.0
    %731 = vmatprep.subr.mxu0 0.0
    %732 = vmatpush1.msra.mxu0 0.0
    %733 = vmatprep.mubr.f32.mxu0 0.0
    %734 = vmatmul.mubr.f32.gmra.mrb[0].mxu0 %v657
    %v735 = vpop.f32.mrb[0].mxu0
    %v736 = vadd.f32 0.0, %v735
    %v737 = vpop.f32.mrb[0].mxu0
    %738 = vmatprep.mubr.f32.mxu0 0.0
    %739 = vmatmul.mubr.f32.gmra.mrb[0].mxu0 %v659
    %v740 = vpop.f32.mrb[0].mxu0
    %v741 = vadd.f32 0.0, %v740
    %v742 = vpop.f32.mrb[0].mxu0
    %743 = vmatprep.mubr.f32.mxu0 0.0
    %744 = vmatmul.mubr.f32.gmra.mrb[0].mxu0 %v661
    %v745 = vpop.f32.mrb[0].mxu0
    %v746 = vadd.f32 0.0, %v745
    %v747 = vpop.f32.mrb[0].mxu0
    %748 = vmatprep.mubr.f32.mxu0 0.0
    %749 = vmatmul.mubr.f32.gmra.mrb[0].mxu0 %v663
    %v750 = vpop.f32.mrb[0].mxu0
    %v751 = vadd.f32 0.0, %v750
    %v752 = vpop.f32.mrb[0].mxu0
    %753 = vmatprep.mubr.f32.mxu0 0.0
    %754 = vmatmul.mubr.f32.gmra.mrb[0].mxu0 %v665
    %v755 = vpop.f32.mrb[0].mxu0
    %v756 = vadd.f32 0.0, %v755
    %v757 = vpop.f32.mrb[0].mxu0
    %758 = vmatprep.mubr.f32.mxu0 0.0
    %759 = vmatmul.mubr.f32.gmra.mrb[0].mxu0 %v667
    %v760 = vpop.f32.mrb[0].mxu0
    %v761 = vadd.f32 0.0, %v760
    %v762 = vpop.f32.mrb[0].mxu0
    %763 = vdwg.mxu0
    %v764 = vsel %vm656, %v626, 0
    %v766 = vsel %vm656, %v616, 0
    %v768 = vsel %vm656, %v627, 0
    %v770 = vsel %vm656, %v628, 0
    %v772 = vsel %vm656, %v623, 0
    %v774 = vsel %vm656, %v629, 0
    %776 = vmatprep.subr.mxu0 0.0
    %777 = vmatpush1.msra.mxu0 %v630
    %778 = vmatprep.subr.mxu0 0.0
    %779 = vmatpush1.msra.mxu0 %v631
    %780 = vmatprep.subr.mxu0 0.0
    %781 = vmatpush1.msra.mxu0 %v632
    %782 = vmatprep.subr.mxu0 0.0
    %783 = vmatpush1.msra.mxu0 %v633
    %784 = vmatprep.subr.mxu0 0.0
    %785 = vmatpush1.msra.mxu0 %v634
    %786 = vmatprep.subr.mxu0 0.0
    %787 = vmatpush1.msra.mxu0 0.0
    %788 = vmatprep.subr.mxu0 0.0
    %789 = vmatpush1.msra.mxu0 0.0
    %790 = vmatprep.subr.mxu0 0.0
    %791 = vmatpush1.msra.mxu0 0.0
    %792 = vmatprep.subr.mxu0 0.0
    %793 = vmatpush1.msra.mxu0 0.0
    %794 = vmatprep.subr.mxu0 0.0
    %795 = vmatpush1.msra.mxu0 0.0
    %796 = vmatprep.subr.mxu0 0.0
    %797 = vmatpush1.msra.mxu0 0.0
    %798 = vmatprep.subr.mxu0 0.0
    %799 = vmatpush1.msra.mxu0 0.0
    %800 = vmatprep.subr.mxu0 0.0
    %801 = vmatpush1.msra.mxu0 0.0
    %802 = vmatprep.subr.mxu0 0.0
    %803 = vmatpush1.msra.mxu0 0.0
    %804 = vmatprep.subr.mxu0 0.0
    %805 = vmatpush1.msra.mxu0 0.0
    %806 = vmatprep.subr.mxu0 0.0
    %807 = vmatpush1.msra.mxu0 0.0
    %808 = vmatprep.subr.mxu0 0.0
    %809 = vmatpush1.msra.mxu0 0.0
    %810 = vmatprep.subr.mxu0 0.0
    %811 = vmatpush1.msra.mxu0 0.0
    %812 = vmatprep.subr.mxu0 0.0
    %813 = vmatpush1.msra.mxu0 0.0
    %814 = vmatprep.subr.mxu0 0.0
    %815 = vmatpush1.msra.mxu0 0.0
    %816 = vmatprep.subr.mxu0 0.0
    %817 = vmatpush1.msra.mxu0 0.0
    %818 = vmatprep.subr.mxu0 0.0
    %819 = vmatpush1.msra.mxu0 0.0
    %820 = vmatprep.subr.mxu0 0.0
    %821 = vmatpush1.msra.mxu0 0.0
    %822 = vmatprep.subr.mxu0 0.0
    %823 = vmatpush1.msra.mxu0 0.0
    %824 = vmatprep.subr.mxu0 0.0
    %825 = vmatpush1.msra.mxu0 0.0
    %826 = vmatprep.subr.mxu0 0.0
    %827 = vmatpush1.msra.mxu0 0.0
    %828 = vmatprep.subr.mxu0 0.0
    %829 = vmatpush1.msra.mxu0 0.0
    %830 = vmatprep.subr.mxu0 0.0
    %831 = vmatpush1.msra.mxu0 0.0
    %832 = vmatprep.subr.mxu0 0.0
    %833 = vmatpush1.msra.mxu0 0.0
    %834 = vmatprep.subr.mxu0 0.0
    %835 = vmatpush1.msra.mxu0 0.0
    %836 = vmatprep.subr.mxu0 0.0
    %837 = vmatpush1.msra.mxu0 0.0
    %838 = vmatprep.subr.mxu0 0.0
    %839 = vmatpush1.msra.mxu0 0.0
    %840 = vmatprep.mubr.f32.mxu0 0.0
    %841 = vmatmul.mubr.f32.gmra.mrb[0].mxu0 %v764
    %v842 = vpop.f32.mrb[0].mxu0
    %v843 = vadd.f32 %v736, %v842
    %v844 = vpop.f32.mrb[0].mxu0
    %845 = vmatprep.mubr.f32.mxu0 0.0
    %846 = vmatmul.mubr.f32.gmra.mrb[0].mxu0 %v766
    %v847 = vpop.f32.mrb[0].mxu0
    %v848 = vadd.f32 %v741, %v847
    %v849 = vpop.f32.mrb[0].mxu0
    %850 = vmatprep.mubr.f32.mxu0 0.0
    %851 = vmatmul.mubr.f32.gmra.mrb[0].mxu0 %v768
    %v852 = vpop.f32.mrb[0].mxu0
    %v853 = vadd.f32 %v746, %v852
    %v854 = vpop.f32.mrb[0].mxu0
    %855 = vmatprep.mubr.f32.mxu0 0.0
    %856 = vmatmul.mubr.f32.gmra.mrb[0].mxu0 %v770
    %v857 = vpop.f32.mrb[0].mxu0
    %v858 = vadd.f32 %v751, %v857
    %v859 = vpop.f32.mrb[0].mxu0
    %860 = vmatprep.mubr.f32.mxu0 0.0
    %861 = vmatmul.mubr.f32.gmra.mrb[0].mxu0 %v772
    %v862 = vpop.f32.mrb[0].mxu0
    %v863 = vadd.f32 %v756, %v862
    %v864 = vpop.f32.mrb[0].mxu0
    %865 = vmatprep.mubr.f32.mxu0 0.0
    %866 = vmatmul.mubr.f32.gmra.mrb[0].mxu0 %v774
    %v867 = vpop.f32.mrb[0].mxu0
    %v868 = vadd.f32 %v761, %v867
    %v869 = vpop.f32.mrb[0].mxu0
    %870 = vdwg.mxu0
    %s871 = scalar_lea.vmem [#allocation8], 80
    %v872 = vld [vmem:[%s871] sm:$0xff]
    %v873 = vld [vmem:[%s871 + $0x8] sm:$0xff]
    %v874 = vld [vmem:[%s871 + $0x10] sm:$0xff]
    %v875 = vld [vmem:[%s871 + $0x18] sm:$0xff]
    %v876 = vld [vmem:[%s871 + $0x20] sm:$0xff]
    %v877 = vrot.slane %v626, 2
    %v878 = vrot.slane %v616, 2
    %v879 = vsel %vm184, %v877, %v878
    %v880 = vrot.slane %v627, 2
    %v881 = vsel %vm184, %v878, %v880
    %v882 = vrot.slane %v628, 2
    %v883 = vsel %vm184, %v880, %v882
    %v884 = vrot.slane %v623, 2
    %v885 = vsel %vm184, %v882, %v884
    %v886 = vrot.slane %v629, 2
    %v887 = vsel %vm184, %v884, %v886
    %v888 = vsel %vm656, %v879, 0
    %v890 = vsel %vm656, %v881, 0
    %v892 = vsel %vm656, %v883, 0
    %v894 = vsel %vm656, %v885, 0
    %v896 = vsel %vm656, %v887, 0
    %v898 = vsel %vm656, %v886, 0
    %900 = vmatprep.subr.mxu0 0.0
    %901 = vmatpush1.msra.mxu0 %v872
    %902 = vmatprep.subr.mxu0 0.0
    %903 = vmatpush1.msra.mxu0 %v873
    %904 = vmatprep.subr.mxu0 0.0
    %905 = vmatpush1.msra.mxu0 %v874
    %906 = vmatprep.subr.mxu0 0.0
    %907 = vmatpush1.msra.mxu0 %v875
    %908 = vmatprep.subr.mxu0 0.0
    %909 = vmatpush1.msra.mxu0 %v876
    %910 = vmatprep.subr.mxu0 0.0
    %911 = vmatpush1.msra.mxu0 0.0
    %912 = vmatprep.subr.mxu0 0.0
    %913 = vmatpush1.msra.mxu0 0.0
    %914 = vmatprep.subr.mxu0 0.0
    %915 = vmatpush1.msra.mxu0 0.0
    %916 = vmatprep.subr.mxu0 0.0
    %917 = vmatpush1.msra.mxu0 0.0
    %918 = vmatprep.subr.mxu0 0.0
    %919 = vmatpush1.msra.mxu0 0.0
    %920 = vmatprep.subr.mxu0 0.0
    %921 = vmatpush1.msra.mxu0 0.0
    %922 = vmatprep.subr.mxu0 0.0
    %923 = vmatpush1.msra.mxu0 0.0
    %924 = vmatprep.subr.mxu0 0.0
    %925 = vmatpush1.msra.mxu0 0.0
    %926 = vmatprep.subr.mxu0 0.0
    %927 = vmatpush1.msra.mxu0 0.0
    %928 = vmatprep.subr.mxu0 0.0
    %929 = vmatpush1.msra.mxu0 0.0
    %930 = vmatprep.subr.mxu0 0.0
    %931 = vmatpush1.msra.mxu0 0.0
    %932 = vmatprep.subr.mxu0 0.0
    %933 = vmatpush1.msra.mxu0 0.0
    %934 = vmatprep.subr.mxu0 0.0
    %935 = vmatpush1.msra.mxu0 0.0
    %936 = vmatprep.subr.mxu0 0.0
    %937 = vmatpush1.msra.mxu0 0.0
    %938 = vmatprep.subr.mxu0 0.0
    %939 = vmatpush1.msra.mxu0 0.0
    %940 = vmatprep.subr.mxu0 0.0
    %941 = vmatpush1.msra.mxu0 0.0
    %942 = vmatprep.subr.mxu0 0.0
    %943 = vmatpush1.msra.mxu0 0.0
    %944 = vmatprep.subr.mxu0 0.0
    %945 = vmatpush1.msra.mxu0 0.0
    %946 = vmatprep.subr.mxu0 0.0
    %947 = vmatpush1.msra.mxu0 0.0
    %948 = vmatprep.subr.mxu0 0.0
    %949 = vmatpush1.msra.mxu0 0.0
    %950 = vmatprep.subr.mxu0 0.0
    %951 = vmatpush1.msra.mxu0 0.0
    %952 = vmatprep.subr.mxu0 0.0
    %953 = vmatpush1.msra.mxu0 0.0
    %954 = vmatprep.subr.mxu0 0.0
    %955 = vmatpush1.msra.mxu0 0.0
    %956 = vmatprep.subr.mxu0 0.0
    %957 = vmatpush1.msra.mxu0 0.0
    %958 = vmatprep.subr.mxu0 0.0
    %959 = vmatpush1.msra.mxu0 0.0
    %960 = vmatprep.subr.mxu0 0.0
    %961 = vmatpush1.msra.mxu0 0.0
    %962 = vmatprep.subr.mxu0 0.0
    %963 = vmatpush1.msra.mxu0 0.0
    %964 = vmatprep.mubr.f32.mxu0 0.0
    %965 = vmatmul.mubr.f32.gmra.mrb[0].mxu0 %v888
    %v966 = vpop.f32.mrb[0].mxu0
    %v967 = vadd.f32 0.0, %v966
    %v968 = vpop.f32.mrb[0].mxu0
    %969 = vmatprep.mubr.f32.mxu0 0.0
    %970 = vmatmul.mubr.f32.gmra.mrb[0].mxu0 %v890
    %v971 = vpop.f32.mrb[0].mxu0
    %v972 = vadd.f32 0.0, %v971
    %v973 = vpop.f32.mrb[0].mxu0
    %974 = vmatprep.mubr.f32.mxu0 0.0
    %975 = vmatmul.mubr.f32.gmra.mrb[0].mxu0 %v892
    %v976 = vpop.f32.mrb[0].mxu0
    %v977 = vadd.f32 0.0, %v976
    %v978 = vpop.f32.mrb[0].mxu0
    %979 = vmatprep.mubr.f32.mxu0 0.0
    %980 = vmatmul.mubr.f32.gmra.mrb[0].mxu0 %v894
    %v981 = vpop.f32.mrb[0].mxu0
    %v982 = vadd.f32 0.0, %v981
    %v983 = vpop.f32.mrb[0].mxu0
    %984 = vmatprep.mubr.f32.mxu0 0.0
    %985 = vmatmul.mubr.f32.gmra.mrb[0].mxu0 %v896
    %v986 = vpop.f32.mrb[0].mxu0
    %v987 = vadd.f32 0.0, %v986
    %v988 = vpop.f32.mrb[0].mxu0
    %989 = vmatprep.mubr.f32.mxu0 0.0
    %990 = vmatmul.mubr.f32.gmra.mrb[0].mxu0 %v898
    %v991 = vpop.f32.mrb[0].mxu0
    %v992 = vadd.f32 0.0, %v991
    %v993 = vpop.f32.mrb[0].mxu0
    %994 = vdwg.mxu0
    %v995 = vadd.f32 %v843, %v967
    %v996 = vadd.f32 %v848, %v972
    %v997 = vadd.f32 %v853, %v977
    %v998 = vadd.f32 %v858, %v982
    %v999 = vadd.f32 %v863, %v987
    %v1000 = vadd.f32 %v868, %v992
    %s1001 = scalar_lea.vmem [#allocation8], 120
    %v1002 = vld [vmem:[%s1001] sm:$0xff]
    %v1003 = vld [vmem:[%s1001 + $0x8] sm:$0xff]
    %v1004 = vld [vmem:[%s1001 + $0x10] sm:$0xff]
    %v1005 = vld [vmem:[%s1001 + $0x18] sm:$0xff]
    %v1006 = vld [vmem:[%s1001 + $0x20] sm:$0xff]
    %v1007 = vrot.slane %v626, 3
    %v1008 = vrot.slane %v616, 3
    %v1009 = vsel %vm182, %v1007, %v1008
    %v1010 = vrot.slane %v627, 3
    %v1011 = vsel %vm182, %v1008, %v1010
    %v1012 = vrot.slane %v628, 3
    %v1013 = vsel %vm182, %v1010, %v1012
    %v1014 = vrot.slane %v623, 3
    %v1015 = vsel %vm182, %v1012, %v1014
    %v1016 = vrot.slane %v629, 3
    %v1017 = vsel %vm182, %v1014, %v1016
    %v1018 = vsel %vm656, %v1009, 0
    %v1020 = vsel %vm656, %v1011, 0
    %v1022 = vsel %vm656, %v1013, 0
    %v1024 = vsel %vm656, %v1015, 0
    %v1026 = vsel %vm656, %v1017, 0
    %v1028 = vsel %vm656, %v1016, 0
    %1030 = vmatprep.subr.mxu0 0.0
    %1031 = vmatpush1.msra.mxu0 %v1002
    %1032 = vmatprep.subr.mxu0 0.0
    %1033 = vmatpush1.msra.mxu0 %v1003
    %1034 = vmatprep.subr.mxu0 0.0
    %1035 = vmatpush1.msra.mxu0 %v1004
    %1036 = vmatprep.subr.mxu0 0.0
    %1037 = vmatpush1.msra.mxu0 %v1005
    %1038 = vmatprep.subr.mxu0 0.0
    %1039 = vmatpush1.msra.mxu0 %v1006
    %1040 = vmatprep.subr.mxu0 0.0
    %1041 = vmatpush1.msra.mxu0 0.0
    %1042 = vmatprep.subr.mxu0 0.0
    %1043 = vmatpush1.msra.mxu0 0.0
    %1044 = vmatprep.subr.mxu0 0.0
    %1045 = vmatpush1.msra.mxu0 0.0
    %1046 = vmatprep.subr.mxu0 0.0
    %1047 = vmatpush1.msra.mxu0 0.0
    %1048 = vmatprep.subr.mxu0 0.0
    %1049 = vmatpush1.msra.mxu0 0.0
    %1050 = vmatprep.subr.mxu0 0.0
    %1051 = vmatpush1.msra.mxu0 0.0
    %1052 = vmatprep.subr.mxu0 0.0
    %1053 = vmatpush1.msra.mxu0 0.0
    %1054 = vmatprep.subr.mxu0 0.0
    %1055 = vmatpush1.msra.mxu0 0.0
    %1056 = vmatprep.subr.mxu0 0.0
    %1057 = vmatpush1.msra.mxu0 0.0
    %1058 = vmatprep.subr.mxu0 0.0
    %1059 = vmatpush1.msra.mxu0 0.0
    %1060 = vmatprep.subr.mxu0 0.0
    %1061 = vmatpush1.msra.mxu0 0.0
    %1062 = vmatprep.subr.mxu0 0.0
    %1063 = vmatpush1.msra.mxu0 0.0
    %1064 = vmatprep.subr.mxu0 0.0
    %1065 = vmatpush1.msra.mxu0 0.0
    %1066 = vmatprep.subr.mxu0 0.0
    %1067 = vmatpush1.msra.mxu0 0.0
    %1068 = vmatprep.subr.mxu0 0.0
    %1069 = vmatpush1.msra.mxu0 0.0
    %1070 = vmatprep.subr.mxu0 0.0
    %1071 = vmatpush1.msra.mxu0 0.0
    %1072 = vmatprep.subr.mxu0 0.0
    %1073 = vmatpush1.msra.mxu0 0.0
    %1074 = vmatprep.subr.mxu0 0.0
    %1075 = vmatpush1.msra.mxu0 0.0
    %1076 = vmatprep.subr.mxu0 0.0
    %1077 = vmatpush1.msra.mxu0 0.0
    %1078 = vmatprep.subr.mxu0 0.0
    %1079 = vmatpush1.msra.mxu0 0.0
    %1080 = vmatprep.subr.mxu0 0.0
    %1081 = vmatpush1.msra.mxu0 0.0
    %1082 = vmatprep.subr.mxu0 0.0
    %1083 = vmatpush1.msra.mxu0 0.0
    %1084 = vmatprep.subr.mxu0 0.0
    %1085 = vmatpush1.msra.mxu0 0.0
    %1086 = vmatprep.subr.mxu0 0.0
    %1087 = vmatpush1.msra.mxu0 0.0
    %1088 = vmatprep.subr.mxu0 0.0
    %1089 = vmatpush1.msra.mxu0 0.0
    %1090 = vmatprep.subr.mxu0 0.0
    %1091 = vmatpush1.msra.mxu0 0.0
    %1092 = vmatprep.subr.mxu0 0.0
    %1093 = vmatpush1.msra.mxu0 0.0
    %1094 = vmatprep.mubr.f32.mxu0 0.0
    %1095 = vmatmul.mubr.f32.gmra.mrb[0].mxu0 %v1018
    %v1096 = vpop.f32.mrb[0].mxu0
    %v1097 = vadd.f32 0.0, %v1096
    %v1098 = vpop.f32.mrb[0].mxu0
    %1099 = vmatprep.mubr.f32.mxu0 0.0
    %1100 = vmatmul.mubr.f32.gmra.mrb[0].mxu0 %v1020
    %v1101 = vpop.f32.mrb[0].mxu0
    %v1102 = vadd.f32 0.0, %v1101
    %v1103 = vpop.f32.mrb[0].mxu0
    %1104 = vmatprep.mubr.f32.mxu0 0.0
    %1105 = vmatmul.mubr.f32.gmra.mrb[0].mxu0 %v1022
    %v1106 = vpop.f32.mrb[0].mxu0
    %v1107 = vadd.f32 0.0, %v1106
    %v1108 = vpop.f32.mrb[0].mxu0
    %1109 = vmatprep.mubr.f32.mxu0 0.0
    %1110 = vmatmul.mubr.f32.gmra.mrb[0].mxu0 %v1024
    %v1111 = vpop.f32.mrb[0].mxu0
    %v1112 = vadd.f32 0.0, %v1111
    %v1113 = vpop.f32.mrb[0].mxu0
    %1114 = vmatprep.mubr.f32.mxu0 0.0
    %1115 = vmatmul.mubr.f32.gmra.mrb[0].mxu0 %v1026
    %v1116 = vpop.f32.mrb[0].mxu0
    %v1117 = vadd.f32 0.0, %v1116
    %v1118 = vpop.f32.mrb[0].mxu0
    %1119 = vmatprep.mubr.f32.mxu0 0.0
    %1120 = vmatmul.mubr.f32.gmra.mrb[0].mxu0 %v1028
    %v1121 = vpop.f32.mrb[0].mxu0
    %v1122 = vadd.f32 0.0, %v1121
    %v1123 = vpop.f32.mrb[0].mxu0
    %1124 = vdwg.mxu0
    %v1125 = vadd.f32 %v995, %v1097
    %v1126 = vadd.f32 %v996, %v1102
    %v1127 = vadd.f32 %v997, %v1107
    %v1128 = vadd.f32 %v998, %v1112
    %v1129 = vadd.f32 %v999, %v1117
    %v1130 = vadd.f32 %v1000, %v1122
    %s1131 = scalar_lea.vmem [#allocation8], 160
    %v1132 = vld [vmem:[%s1131] sm:$0xff]
    %v1133 = vld [vmem:[%s1131 + $0x8] sm:$0xff]
    %v1134 = vld [vmem:[%s1131 + $0x10] sm:$0xff]
    %v1135 = vld [vmem:[%s1131 + $0x18] sm:$0xff]
    %v1136 = vld [vmem:[%s1131 + $0x20] sm:$0xff]
    %v1137 = vrot.slane %v626, 4
    %v1138 = vrot.slane %v616, 4
    %v1139 = vsel %vm180, %v1137, %v1138
    %v1140 = vrot.slane %v627, 4
    %v1141 = vsel %vm180, %v1138, %v1140
    %v1142 = vrot.slane %v628, 4
    %v1143 = vsel %vm180, %v1140, %v1142
    %v1144 = vrot.slane %v623, 4
    %v1145 = vsel %vm180, %v1142, %v1144
    %v1146 = vrot.slane %v629, 4
    %v1147 = vsel %vm180, %v1144, %v1146
    %v1148 = vsel %vm656, %v1139, 0
    %v1150 = vsel %vm656, %v1141, 0
    %v1152 = vsel %vm656, %v1143, 0
    %v1154 = vsel %vm656, %v1145, 0
    %v1156 = vsel %vm656, %v1147, 0
    %v1158 = vsel %vm656, %v1146, 0
    %1160 = vmatprep.subr.mxu0 0.0
    %1161 = vmatpush1.msra.mxu0 %v1132
    %1162 = vmatprep.subr.mxu0 0.0
    %1163 = vmatpush1.msra.mxu0 %v1133
    %1164 = vmatprep.subr.mxu0 0.0
    %1165 = vmatpush1.msra.mxu0 %v1134
    %1166 = vmatprep.subr.mxu0 0.0
    %1167 = vmatpush1.msra.mxu0 %v1135
    %1168 = vmatprep.subr.mxu0 0.0
    %1169 = vmatpush1.msra.mxu0 %v1136
    %1170 = vmatprep.subr.mxu0 0.0
    %1171 = vmatpush1.msra.mxu0 0.0
    %1172 = vmatprep.subr.mxu0 0.0
    %1173 = vmatpush1.msra.mxu0 0.0
    %1174 = vmatprep.subr.mxu0 0.0
    %1175 = vmatpush1.msra.mxu0 0.0
    %1176 = vmatprep.subr.mxu0 0.0
    %1177 = vmatpush1.msra.mxu0 0.0
    %1178 = vmatprep.subr.mxu0 0.0
    %1179 = vmatpush1.msra.mxu0 0.0
    %1180 = vmatprep.subr.mxu0 0.0
    %1181 = vmatpush1.msra.mxu0 0.0
    %1182 = vmatprep.subr.mxu0 0.0
    %1183 = vmatpush1.msra.mxu0 0.0
    %1184 = vmatprep.subr.mxu0 0.0
    %1185 = vmatpush1.msra.mxu0 0.0
    %1186 = vmatprep.subr.mxu0 0.0
    %1187 = vmatpush1.msra.mxu0 0.0
    %1188 = vmatprep.subr.mxu0 0.0
    %1189 = vmatpush1.msra.mxu0 0.0
    %1190 = vmatprep.subr.mxu0 0.0
    %1191 = vmatpush1.msra.mxu0 0.0
    %1192 = vmatprep.subr.mxu0 0.0
    %1193 = vmatpush1.msra.mxu0 0.0
    %1194 = vmatprep.subr.mxu0 0.0
    %1195 = vmatpush1.msra.mxu0 0.0
    %1196 = vmatprep.subr.mxu0 0.0
    %1197 = vmatpush1.msra.mxu0 0.0
    %1198 = vmatprep.subr.mxu0 0.0
    %1199 = vmatpush1.msra.mxu0 0.0
    %1200 = vmatprep.subr.mxu0 0.0
    %1201 = vmatpush1.msra.mxu0 0.0
    %1202 = vmatprep.subr.mxu0 0.0
    %1203 = vmatpush1.msra.mxu0 0.0
    %1204 = vmatprep.subr.mxu0 0.0
    %1205 = vmatpush1.msra.mxu0 0.0
    %1206 = vmatprep.subr.mxu0 0.0
    %1207 = vmatpush1.msra.mxu0 0.0
    %1208 = vmatprep.subr.mxu0 0.0
    %1209 = vmatpush1.msra.mxu0 0.0
    %1210 = vmatprep.subr.mxu0 0.0
    %1211 = vmatpush1.msra.mxu0 0.0
    %1212 = vmatprep.subr.mxu0 0.0
    %1213 = vmatpush1.msra.mxu0 0.0
    %1214 = vmatprep.subr.mxu0 0.0
    %1215 = vmatpush1.msra.mxu0 0.0
    %1216 = vmatprep.subr.mxu0 0.0
    %1217 = vmatpush1.msra.mxu0 0.0
    %1218 = vmatprep.subr.mxu0 0.0
    %1219 = vmatpush1.msra.mxu0 0.0
    %1220 = vmatprep.subr.mxu0 0.0
    %1221 = vmatpush1.msra.mxu0 0.0
    %1222 = vmatprep.subr.mxu0 0.0
    %1223 = vmatpush1.msra.mxu0 0.0
    %1224 = vmatprep.mubr.f32.mxu0 0.0
    %1225 = vmatmul.mubr.f32.gmra.mrb[0].mxu0 %v1148
    %v1226 = vpop.f32.mrb[0].mxu0
    %v1227 = vadd.f32 0.0, %v1226
    %v1228 = vpop.f32.mrb[0].mxu0
    %1229 = vmatprep.mubr.f32.mxu0 0.0
    %1230 = vmatmul.mubr.f32.gmra.mrb[0].mxu0 %v1150
    %v1231 = vpop.f32.mrb[0].mxu0
    %v1232 = vadd.f32 0.0, %v1231
    %v1233 = vpop.f32.mrb[0].mxu0
    %1234 = vmatprep.mubr.f32.mxu0 0.0
    %1235 = vmatmul.mubr.f32.gmra.mrb[0].mxu0 %v1152
    %v1236 = vpop.f32.mrb[0].mxu0
    %v1237 = vadd.f32 0.0, %v1236
    %v1238 = vpop.f32.mrb[0].mxu0
    %1239 = vmatprep.mubr.f32.mxu0 0.0
    %1240 = vmatmul.mubr.f32.gmra.mrb[0].mxu0 %v1154
    %v1241 = vpop.f32.mrb[0].mxu0
    %v1242 = vadd.f32 0.0, %v1241
    %v1243 = vpop.f32.mrb[0].mxu0
    %1244 = vmatprep.mubr.f32.mxu0 0.0
    %1245 = vmatmul.mubr.f32.gmra.mrb[0].mxu0 %v1156
    %v1246 = vpop.f32.mrb[0].mxu0
    %v1247 = vadd.f32 0.0, %v1246
    %v1248 = vpop.f32.mrb[0].mxu0
    %1249 = vmatprep.mubr.f32.mxu0 0.0
    %1250 = vmatmul.mubr.f32.gmra.mrb[0].mxu0 %v1158
    %v1251 = vpop.f32.mrb[0].mxu0
    %v1252 = vadd.f32 0.0, %v1251
    %v1253 = vpop.f32.mrb[0].mxu0
    %1254 = vdwg.mxu0
    %v1255 = vadd.f32 %v1125, %v1227
    %v1256 = vadd.f32 %v1126, %v1232
    %v1257 = vadd.f32 %v1127, %v1237
    %v1258 = vadd.f32 %v1128, %v1242
    %v1259 = vadd.f32 %v1129, %v1247
    %v1260 = vadd.f32 %v1130, %v1252
    %v1261 = vld [vmem:[%s5] sm:$0x1]
    %v1263 = vlaneseq
    %v1264 = vshrl.u32 %v1263, 7
    %v1265 = vsub.s32 0, %v1264
    %v1266 = vrot.slane %v1261, %v1265
    %v1268 = vadd.f32 %v1255, %v1266
    %v1269 = vadd.f32 %v1256, %v1266
    %v1270 = vadd.f32 %v1257, %v1266
    %v1271 = vadd.f32 %v1258, %v1266
    %v1272 = vadd.f32 %v1259, %v1266
    %v1273 = vadd.f32 %v1260, %v1266
    %v1274 = vtanh.pop %v1268
    %v1275 = vtanh.pop %v1269
    %v1276 = vtanh.pop %v1270
    %v1277 = vtanh.pop %v1271
    %v1278 = vtanh.pop %v1272
    %v1279 = vtanh.pop %v1273
    %v1280 = vmul.f32 %v1274, %v1274
    %v1281 = vmul.f32 %v1275, %v1275
    %v1282 = vsel %vm346, %v1280, 0.0
    %1283 = vadd.xlane.f32.xlu0 %v1282
    %v1284 = vpop.xlane.xlu0 %1283
    %v1285 = vsel %vm346, %v1281, 0.0
    %1286 = vadd.xlane.f32.xlu0 %v1285
    %v1287 = vpop.xlane.xlu0 %1286
    %v1288 = vmul.f32 %v1276, %v1276
    %1292 = vrot.lane.b32.xlu0 %v1280, 108
    %v1293 = vpop.permute.xlu0 %1292
    %1294 = vrot.lane.b32.xlu0 %v1281, 108
    %v1295 = vpop.permute.xlu0 %1294
    %1296 = vrot.lane.b32.xlu0 %v1288, 108
    %v1297 = vpop.permute.xlu0 %1296
    %v1301 = vsel %vm346, %v1293, 0.0
    %1302 = vadd.xlane.f32.xlu0 %v1301
    %v1303 = vpop.xlane.xlu0 %1302
    %v1304 = vsel %vm346, %v1295, 0.0
    %1305 = vadd.xlane.f32.xlu0 %v1304
    %v1306 = vpop.xlane.xlu0 %1305
    %vm1307 = vcmask 158720
    %v1308 = vsel %vm1307, %v1297, 0.0
    %1309 = vadd.xlane.f32.xlu0 %v1308
    %v1310 = vpop.xlane.xlu0 %1309
    %v1311 = vmul.f32 %v1274, -2.0
    %v1312 = vmul.f32 %v1275, -2.0
    %v1313 = vsel %vm346, %v1311, %v1284
    %v1314 = vsel %vm346, %v1312, %v1287
    %vm1315 = vcmask 171008
    %v1316 = vsel %vm1315, %v1313, 1.0
    %v1317 = vsel %vm1315, %v1314, 1.0
    %1321 = vrot.lane.b32.xlu0 %v1274, 108
    %v1322 = vpop.permute.xlu0 %1321
    %1323 = vrot.lane.b32.xlu0 %v1275, 108
    %v1324 = vpop.permute.xlu0 %1323
    %1325 = vrot.lane.b32.xlu0 %v1276, 108
    %v1326 = vpop.permute.xlu0 %1325
    %v1330 = vsel %vm346, %v1322, 1.0
    %v1331 = vsel %vm346, %v1324, 1.0
    %v1332 = vsel %vm346, %v1326, 1.0
    %v1333 = vsel %vm1315, %v1330, %v1303
    %v1334 = vsel %vm1315, %v1331, %v1306
    %v1335 = vsel %vm1315, %v1332, %v1310
    %vm1336 = vcmask 179200
    %v1338 = vsel %vm1336, %v1316, 0
    %v1341 = vsel %vm1336, %v1317, 0
    %v1344 = vsel %vm1336, %v1333, 0
    %v1347 = vsel %vm1336, %v1334, 0
    %v1350 = vsel %vm1336, %v1335, 0
    %1352 = vmatprep.subr.mxu0 0.0
    %1353 = vmatpush1.xpose.msra.mxu0 %v1344
    %1354 = vmatprep.subr.mxu0 0.0
    %1355 = vmatpush1.xpose.msra.mxu0 %v1347
    %1356 = vmatprep.subr.mxu0 0.0
    %1357 = vmatpush1.xpose.msra.mxu0 %v1350
    %1358 = vmatprep.subr.mxu0 0.0
    %1359 = vmatpush1.xpose.msra.mxu0 0.0
    %1360 = vmatprep.subr.mxu0 0.0
    %1361 = vmatpush1.xpose.msra.mxu0 0.0
    %1362 = vmatprep.subr.mxu0 0.0
    %1363 = vmatpush1.xpose.msra.mxu0 0.0
    %1364 = vmatprep.subr.mxu0 0.0
    %1365 = vmatpush1.xpose.msra.mxu0 0.0
    %1366 = vmatprep.subr.mxu0 0.0
    %1367 = vmatpush1.xpose.msra.mxu0 0.0
    %1368 = vmatprep.subr.mxu0 0.0
    %1369 = vmatpush1.xpose.msra.mxu0 0.0
    %1370 = vmatprep.subr.mxu0 0.0
    %1371 = vmatpush1.xpose.msra.mxu0 0.0
    %1372 = vmatprep.subr.mxu0 0.0
    %1373 = vmatpush1.xpose.msra.mxu0 0.0
    %1374 = vmatprep.subr.mxu0 0.0
    %1375 = vmatpush1.xpose.msra.mxu0 0.0
    %1376 = vmatprep.subr.mxu0 0.0
    %1377 = vmatpush1.xpose.msra.mxu0 0.0
    %1378 = vmatprep.subr.mxu0 0.0
    %1379 = vmatpush1.xpose.msra.mxu0 0.0
    %1380 = vmatprep.subr.mxu0 0.0
    %1381 = vmatpush1.xpose.msra.mxu0 0.0
    %1382 = vmatprep.subr.mxu0 0.0
    %1383 = vmatpush1.xpose.msra.mxu0 0.0
    %1384 = vmatprep.subr.mxu0 0.0
    %1385 = vmatpush1.xpose.msra.mxu0 0.0
    %1386 = vmatprep.subr.mxu0 0.0
    %1387 = vmatpush1.xpose.msra.mxu0 0.0
    %1388 = vmatprep.subr.mxu0 0.0
    %1389 = vmatpush1.xpose.msra.mxu0 0.0
    %1390 = vmatprep.subr.mxu0 0.0
    %1391 = vmatpush1.xpose.msra.mxu0 0.0
    %1392 = vmatprep.subr.mxu0 0.0
    %1393 = vmatpush1.xpose.msra.mxu0 0.0
    %1394 = vmatprep.subr.mxu0 0.0
    %1395 = vmatpush1.xpose.msra.mxu0 0.0
    %1396 = vmatprep.subr.mxu0 0.0
    %1397 = vmatpush1.xpose.msra.mxu0 0.0
    %1398 = vmatprep.subr.mxu0 0.0
    %1399 = vmatpush1.xpose.msra.mxu0 0.0
    %1400 = vmatprep.subr.mxu0 0.0
    %1401 = vmatpush1.xpose.msra.mxu0 0.0
    %1402 = vmatprep.subr.mxu0 0.0
    %1403 = vmatpush1.xpose.msra.mxu0 0.0
    %1404 = vmatprep.subr.mxu0 0.0
    %1405 = vmatpush1.xpose.msra.mxu0 0.0
    %1406 = vmatprep.subr.mxu0 0.0
    %1407 = vmatpush1.xpose.msra.mxu0 0.0
    %1408 = vmatprep.subr.mxu0 0.0
    %1409 = vmatpush1.xpose.msra.mxu0 0.0
    %1410 = vmatprep.subr.mxu0 0.0
    %1411 = vmatpush1.xpose.msra.mxu0 0.0
    %1412 = vmatprep.subr.mxu0 0.0
    %1413 = vmatpush1.xpose.msra.mxu0 0.0
    %1414 = vmatprep.subr.mxu0 0.0
    %1415 = vmatpush1.xpose.msra.mxu0 0.0
    %1416 = vmatprep.mubr.f32.mxu0 0.0
    %1417 = vmatmul.mubr.f32.gmra.mrb[0].mxu0 %v1338
    %v1418 = vpop.f32.mrb[0].mxu0
    %v1419 = vadd.f32 0.0, %v1418
    %v1420 = vpop.f32.mrb[0].mxu0
    %1421 = vmatprep.mubr.f32.mxu0 0.0
    %1422 = vmatmul.mubr.f32.gmra.mrb[0].mxu0 %v1341
    %v1423 = vpop.f32.mrb[0].mxu0
    %v1424 = vadd.f32 0.0, %v1423
    %v1425 = vpop.f32.mrb[0].mxu0
    %1426 = vdwg.mxu0
    %v1427 = vmul.f32 %v1276, -2.0
    %1431 = vrot.lane.b32.xlu0 %v1311, 108
    %v1432 = vpop.permute.xlu0 %1431
    %1433 = vrot.lane.b32.xlu0 %v1312, 108
    %v1434 = vpop.permute.xlu0 %1433
    %1435 = vrot.lane.b32.xlu0 %v1427, 108
    %v1436 = vpop.permute.xlu0 %1435
    %v1440 = vsel %vm346, %v1432, %v1303
    %v1441 = vsel %vm346, %v1434, %v1306
    %v1442 = vsel %vm346, %v1436, %v1310
    %v1443 = vsel %vm1315, %v1440, 1.0
    %v1444 = vsel %vm1315, %v1441, 1.0
    %v1445 = vsel %vm1315, %v1442, 1.0
    %v1446 = vsel %vm346, %v1274, 1.0
    %v1447 = vsel %vm346, %v1275, 1.0
    %v1448 = vsel %vm1315, %v1446, %v1284
    %v1449 = vsel %vm1315, %v1447, %v1287
    %v1451 = vsel %vm1336, %v1443, 0
    %v1454 = vsel %vm1336, %v1444, 0
    %v1457 = vsel %vm1336, %v1445, 0
    %v1460 = vsel %vm1336, %v1448, 0
    %v1463 = vsel %vm1336, %v1449, 0
    %1465 = vmatprep.subr.mxu0 0.0
    %1466 = vmatpush1.xpose.msra.mxu0 %v1460
    %1467 = vmatprep.subr.mxu0 0.0
    %1468 = vmatpush1.xpose.msra.mxu0 %v1463
    %1469 = vmatprep.subr.mxu0 0.0
    %1470 = vmatpush1.xpose.msra.mxu0 0.0
    %1471 = vmatprep.subr.mxu0 0.0
    %1472 = vmatpush1.xpose.msra.mxu0 0.0
    %1473 = vmatprep.subr.mxu0 0.0
    %1474 = vmatpush1.xpose.msra.mxu0 0.0
    %1475 = vmatprep.subr.mxu0 0.0
    %1476 = vmatpush1.xpose.msra.mxu0 0.0
    %1477 = vmatprep.subr.mxu0 0.0
    %1478 = vmatpush1.xpose.msra.mxu0 0.0
    %1479 = vmatprep.subr.mxu0 0.0
    %1480 = vmatpush1.xpose.msra.mxu0 0.0
    %1481 = vmatprep.subr.mxu0 0.0
    %1482 = vmatpush1.xpose.msra.mxu0 0.0
    %1483 = vmatprep.subr.mxu0 0.0
    %1484 = vmatpush1.xpose.msra.mxu0 0.0
    %1485 = vmatprep.subr.mxu0 0.0
    %1486 = vmatpush1.xpose.msra.mxu0 0.0
    %1487 = vmatprep.subr.mxu0 0.0
    %1488 = vmatpush1.xpose.msra.mxu0 0.0
    %1489 = vmatprep.subr.mxu0 0.0
    %1490 = vmatpush1.xpose.msra.mxu0 0.0
    %1491 = vmatprep.subr.mxu0 0.0
    %1492 = vmatpush1.xpose.msra.mxu0 0.0
    %1493 = vmatprep.subr.mxu0 0.0
    %1494 = vmatpush1.xpose.msra.mxu0 0.0
    %1495 = vmatprep.subr.mxu0 0.0
    %1496 = vmatpush1.xpose.msra.mxu0 0.0
    %1497 = vmatprep.subr.mxu0 0.0
    %1498 = vmatpush1.xpose.msra.mxu0 0.0
    %1499 = vmatprep.subr.mxu0 0.0
    %1500 = vmatpush1.xpose.msra.mxu0 0.0
    %1501 = vmatprep.subr.mxu0 0.0
    %1502 = vmatpush1.xpose.msra.mxu0 0.0
    %1503 = vmatprep.subr.mxu0 0.0
    %1504 = vmatpush1.xpose.msra.mxu0 0.0
    %1505 = vmatprep.subr.mxu0 0.0
    %1506 = vmatpush1.xpose.msra.mxu0 0.0
    %1507 = vmatprep.subr.mxu0 0.0
    %1508 = vmatpush1.xpose.msra.mxu0 0.0
    %1509 = vmatprep.subr.mxu0 0.0
    %1510 = vmatpush1.xpose.msra.mxu0 0.0
    %1511 = vmatprep.subr.mxu0 0.0
    %1512 = vmatpush1.xpose.msra.mxu0 0.0
    %1513 = vmatprep.subr.mxu0 0.0
    %1514 = vmatpush1.xpose.msra.mxu0 0.0
    %1515 = vmatprep.subr.mxu0 0.0
    %1516 = vmatpush1.xpose.msra.mxu0 0.0
    %1517 = vmatprep.subr.mxu0 0.0
    %1518 = vmatpush1.xpose.msra.mxu0 0.0
    %1519 = vmatprep.subr.mxu0 0.0
    %1520 = vmatpush1.xpose.msra.mxu0 0.0
    %1521 = vmatprep.subr.mxu0 0.0
    %1522 = vmatpush1.xpose.msra.mxu0 0.0
    %1523 = vmatprep.subr.mxu0 0.0
    %1524 = vmatpush1.xpose.msra.mxu0 0.0
    %1525 = vmatprep.subr.mxu0 0.0
    %1526 = vmatpush1.xpose.msra.mxu0 0.0
    %1527 = vmatprep.subr.mxu0 0.0
    %1528 = vmatpush1.xpose.msra.mxu0 0.0
    %1529 = vmatprep.mubr.f32.mxu0 0.0
    %1530 = vmatmul.mubr.f32.gmra.mrb[0].mxu0 %v1451
    %v1531 = vpop.f32.mrb[0].mxu0
    %v1532 = vadd.f32 0.0, %v1531
    %v1533 = vpop.f32.mrb[0].mxu0
    %1534 = vmatprep.mubr.f32.mxu0 0.0
    %1535 = vmatmul.mubr.f32.gmra.mrb[0].mxu0 %v1454
    %v1536 = vpop.f32.mrb[0].mxu0
    %v1537 = vadd.f32 0.0, %v1536
    %v1538 = vpop.f32.mrb[0].mxu0
    %1539 = vmatprep.mubr.f32.mxu0 0.0
    %1540 = vmatmul.mubr.f32.gmra.mrb[0].mxu0 %v1457
    %v1541 = vpop.f32.mrb[0].mxu0
    %v1542 = vadd.f32 0.0, %v1541
    %v1543 = vpop.f32.mrb[0].mxu0
    %1544 = vdwg.mxu0
    %v1545 = vmax.f32 %v1419, 0.0
    %v1546 = vmax.f32 %v1424, 0.0
    %v1547 = vrsqrt.pop %v1545
    %v1548 = vmul.f32 %v1545, %v1547
    %vm1549 = vcmp.eq.f32.partialorder %v1545, inf
    %v1550 = vsel %vm1549, %v1545, %v1548
    %vm1551 = vcmp.eq.f32.partialorder %v1545, 0.0
    %v1552 = vand.u32 %v1545, 2147483648
    %v1553 = vsel %vm1551, %v1552, %v1550
    %v1554 = vrsqrt.pop %v1546
    %v1555 = vmul.f32 %v1546, %v1554
    %vm1556 = vcmp.eq.f32.partialorder %v1546, inf
    %v1557 = vsel %vm1556, %v1546, %v1555
    %vm1558 = vcmp.eq.f32.partialorder %v1546, 0.0
    %v1559 = vand.u32 %v1546, 2147483648
    %v1560 = vsel %vm1558, %v1559, %v1557
    %v1561 = vadd.f32 %v1553, 1.0
    %v1562 = vadd.f32 %v1560, 1.0
    %v1563 = vrcp.pop %v1561
    %v1564 = vrcp.pop %v1562
    %v1565 = vmax.f32 %v1532, 0.0
    %v1566 = vmax.f32 %v1537, 0.0
    %v1567 = vmax.f32 %v1542, 0.0
    %v1568 = vrsqrt.pop %v1565
    %v1569 = vmul.f32 %v1565, %v1568
    %vm1570 = vcmp.eq.f32.partialorder %v1565, inf
    %v1571 = vsel %vm1570, %v1565, %v1569
    %vm1572 = vcmp.eq.f32.partialorder %v1565, 0.0
    %v1573 = vand.u32 %v1565, 2147483648
    %v1574 = vsel %vm1572, %v1573, %v1571
    %v1575 = vrsqrt.pop %v1566
    %v1576 = vmul.f32 %v1566, %v1575
    %vm1577 = vcmp.eq.f32.partialorder %v1566, inf
    %v1578 = vsel %vm1577, %v1566, %v1576
    %vm1579 = vcmp.eq.f32.partialorder %v1566, 0.0
    %v1580 = vand.u32 %v1566, 2147483648
    %v1581 = vsel %vm1579, %v1580, %v1578
    %v1582 = vrsqrt.pop %v1567
    %v1583 = vmul.f32 %v1567, %v1582
    %vm1584 = vcmp.eq.f32.partialorder %v1567, inf
    %v1585 = vsel %vm1584, %v1567, %v1583
    %vm1586 = vcmp.eq.f32.partialorder %v1567, 0.0
    %v1587 = vand.u32 %v1567, 2147483648
    %v1588 = vsel %vm1586, %v1587, %v1585
    %v1589 = vadd.f32 %v1574, 1.0
    %v1590 = vadd.f32 %v1581, 1.0
    %v1591 = vadd.f32 %v1588, 1.0
    %v1592 = vrcp.pop %v1589
    %v1593 = vrcp.pop %v1590
    %v1594 = vrcp.pop %v1591
    %v1595 = vsel %vm346, %v1563, 0.0
    %1596 = vadd.xlane.f32.xlu0 %v1595
    %v1597 = vpop.xlane.xlu0 %1596
    %v1598 = vsel %vm346, %v1564, 0.0
    %1599 = vadd.xlane.f32.xlu0 %v1598
    %v1600 = vpop.xlane.xlu0 %1599
    %vm1601 = vcmask 130048
    %v1602 = vsel %vm1601, %v1592, 0.0
    %1603 = vadd.xlane.f32.xlu0 %v1602
    %v1604 = vpop.xlane.xlu0 %1603
    %v1605 = vsel %vm1601, %v1593, 0.0
    %1606 = vadd.xlane.f32.xlu0 %v1605
    %v1607 = vpop.xlane.xlu0 %1606
    %vm1608 = vcmask 125952
    %v1609 = vsel %vm1608, %v1594, 0.0
    %1610 = vadd.xlane.f32.xlu0 %v1609
    %v1611 = vpop.xlane.xlu0 %1610
    %v1612 = vld [vmem:[%s6] sm:$0xff]
    %v1613 = vld [vmem:[%s6 + $0x8] sm:$0xf]
    %v1614 = vmul.f32 %v1274, %v1597
    %v1615 = vmul.f32 %v1275, %v1600
    %v1617 = vsel %vm1601, %v1612, 0
    %v1620 = vsel %vm1601, %v1613, 0
    %1622 = vmatprep.subr.mxu0 0.0
    %1623 = vmatpush1.msra.mxu0 %v1614
    %1624 = vmatprep.subr.mxu0 0.0
    %1625 = vmatpush1.msra.mxu0 %v1615
    %1626 = vmatprep.subr.mxu0 0.0
    %1627 = vmatpush1.msra.mxu0 0.0
    %1628 = vmatprep.subr.mxu0 0.0
    %1629 = vmatpush1.msra.mxu0 0.0
    %1630 = vmatprep.subr.mxu0 0.0
    %1631 = vmatpush1.msra.mxu0 0.0
    %1632 = vmatprep.subr.mxu0 0.0
    %1633 = vmatpush1.msra.mxu0 0.0
    %1634 = vmatprep.subr.mxu0 0.0
    %1635 = vmatpush1.msra.mxu0 0.0
    %1636 = vmatprep.subr.mxu0 0.0
    %1637 = vmatpush1.msra.mxu0 0.0
    %1638 = vmatprep.subr.mxu0 0.0
    %1639 = vmatpush1.msra.mxu0 0.0
    %1640 = vmatprep.subr.mxu0 0.0
    %1641 = vmatpush1.msra.mxu0 0.0
    %1642 = vmatprep.subr.mxu0 0.0
    %1643 = vmatpush1.msra.mxu0 0.0
    %1644 = vmatprep.subr.mxu0 0.0
    %1645 = vmatpush1.msra.mxu0 0.0
    %1646 = vmatprep.subr.mxu0 0.0
    %1647 = vmatpush1.msra.mxu0 0.0
    %1648 = vmatprep.subr.mxu0 0.0
    %1649 = vmatpush1.msra.mxu0 0.0
    %1650 = vmatprep.subr.mxu0 0.0
    %1651 = vmatpush1.msra.mxu0 0.0
    %1652 = vmatprep.subr.mxu0 0.0
    %1653 = vmatpush1.msra.mxu0 0.0
    %1654 = vmatprep.subr.mxu0 0.0
    %1655 = vmatpush1.msra.mxu0 0.0
    %1656 = vmatprep.subr.mxu0 0.0
    %1657 = vmatpush1.msra.mxu0 0.0
    %1658 = vmatprep.subr.mxu0 0.0
    %1659 = vmatpush1.msra.mxu0 0.0
    %1660 = vmatprep.subr.mxu0 0.0
    %1661 = vmatpush1.msra.mxu0 0.0
    %1662 = vmatprep.subr.mxu0 0.0
    %1663 = vmatpush1.msra.mxu0 0.0
    %1664 = vmatprep.subr.mxu0 0.0
    %1665 = vmatpush1.msra.mxu0 0.0
    %1666 = vmatprep.subr.mxu0 0.0
    %1667 = vmatpush1.msra.mxu0 0.0
    %1668 = vmatprep.subr.mxu0 0.0
    %1669 = vmatpush1.msra.mxu0 0.0
    %1670 = vmatprep.subr.mxu0 0.0
    %1671 = vmatpush1.msra.mxu0 0.0
    %1672 = vmatprep.subr.mxu0 0.0
    %1673 = vmatpush1.msra.mxu0 0.0
    %1674 = vmatprep.subr.mxu0 0.0
    %1675 = vmatpush1.msra.mxu0 0.0
    %1676 = vmatprep.subr.mxu0 0.0
    %1677 = vmatpush1.msra.mxu0 0.0
    %1678 = vmatprep.subr.mxu0 0.0
    %1679 = vmatpush1.msra.mxu0 0.0
    %1680 = vmatprep.subr.mxu0 0.0
    %1681 = vmatpush1.msra.mxu0 0.0
    %1682 = vmatprep.subr.mxu0 0.0
    %1683 = vmatpush1.msra.mxu0 0.0
    %1684 = vmatprep.subr.mxu0 0.0
    %1685 = vmatpush1.msra.mxu0 0.0
    %1686 = vmatprep.mubr.f32.mxu0 0.0
    %1687 = vmatmul.mubr.f32.gmra.mrb[0].mxu0 %v1617
    %v1688 = vpop.f32.mrb[0].mxu0
    %v1689 = vadd.f32 0.0, %v1688
    %v1690 = vpop.f32.mrb[0].mxu0
    %1691 = vmatprep.mubr.f32.mxu0 0.0
    %1692 = vmatmul.mubr.f32.gmra.mrb[0].mxu0 %v1620
    %v1693 = vpop.f32.mrb[0].mxu0
    %v1694 = vadd.f32 0.0, %v1693
    %v1695 = vpop.f32.mrb[0].mxu0
    %1696 = vdwg.mxu0
    %v1697 = vld [vmem:[%s7] sm:$0xff]
    %v1698 = vld [vmem:[%s7 + $0x8] sm:$0xff]
    %v1699 = vmul.f32 %v1274, %v1604
    %v1700 = vmul.f32 %v1275, %v1607
    %v1701 = vmul.f32 %v1276, %v1611
    %1705 = vrot.lane.b32.xlu0 %v1699, 108
    %v1706 = vpop.permute.xlu0 %1705
    %1707 = vrot.lane.b32.xlu0 %v1700, 108
    %v1708 = vpop.permute.xlu0 %1707
    %1709 = vrot.lane.b32.xlu0 %v1701, 108
    %v1710 = vpop.permute.xlu0 %1709
    %v1714 = vsel %vm346, %v1697, 0
    %v1717 = vsel %vm346, %v1698, 0
    %v1719 = vsel %vm180, %v1710, 0
    %1721 = vmatprep.subr.mxu0 0.0
    %1722 = vmatpush1.msra.mxu0 %v1706
    %1723 = vmatprep.subr.mxu0 0.0
    %1724 = vmatpush1.msra.mxu0 %v1708
    %1725 = vmatprep.subr.mxu0 0.0
    %1726 = vmatpush1.msra.mxu0 %v1719
    %1727 = vmatprep.subr.mxu0 0.0
    %1728 = vmatpush1.msra.mxu0 0.0
    %1729 = vmatprep.subr.mxu0 0.0
    %1730 = vmatpush1.msra.mxu0 0.0
    %1731 = vmatprep.subr.mxu0 0.0
    %1732 = vmatpush1.msra.mxu0 0.0
    %1733 = vmatprep.subr.mxu0 0.0
    %1734 = vmatpush1.msra.mxu0 0.0
    %1735 = vmatprep.subr.mxu0 0.0
    %1736 = vmatpush1.msra.mxu0 0.0
    %1737 = vmatprep.subr.mxu0 0.0
    %1738 = vmatpush1.msra.mxu0 0.0
    %1739 = vmatprep.subr.mxu0 0.0
    %1740 = vmatpush1.msra.mxu0 0.0
    %1741 = vmatprep.subr.mxu0 0.0
    %1742 = vmatpush1.msra.mxu0 0.0
    %1743 = vmatprep.subr.mxu0 0.0
    %1744 = vmatpush1.msra.mxu0 0.0
    %1745 = vmatprep.subr.mxu0 0.0
    %1746 = vmatpush1.msra.mxu0 0.0
    %1747 = vmatprep.subr.mxu0 0.0
    %1748 = vmatpush1.msra.mxu0 0.0
    %1749 = vmatprep.subr.mxu0 0.0
    %1750 = vmatpush1.msra.mxu0 0.0
    %1751 = vmatprep.subr.mxu0 0.0
    %1752 = vmatpush1.msra.mxu0 0.0
    %1753 = vmatprep.subr.mxu0 0.0
    %1754 = vmatpush1.msra.mxu0 0.0
    %1755 = vmatprep.subr.mxu0 0.0
    %1756 = vmatpush1.msra.mxu0 0.0
    %1757 = vmatprep.subr.mxu0 0.0
    %1758 = vmatpush1.msra.mxu0 0.0
    %1759 = vmatprep.subr.mxu0 0.0
    %1760 = vmatpush1.msra.mxu0 0.0
    %1761 = vmatprep.subr.mxu0 0.0
    %1762 = vmatpush1.msra.mxu0 0.0
    %1763 = vmatprep.subr.mxu0 0.0
    %1764 = vmatpush1.msra.mxu0 0.0
    %1765 = vmatprep.subr.mxu0 0.0
    %1766 = vmatpush1.msra.mxu0 0.0
    %1767 = vmatprep.subr.mxu0 0.0
    %1768 = vmatpush1.msra.mxu0 0.0
    %1769 = vmatprep.subr.mxu0 0.0
    %1770 = vmatpush1.msra.mxu0 0.0
    %1771 = vmatprep.subr.mxu0 0.0
    %1772 = vmatpush1.msra.mxu0 0.0
    %1773 = vmatprep.subr.mxu0 0.0
    %1774 = vmatpush1.msra.mxu0 0.0
    %1775 = vmatprep.subr.mxu0 0.0
    %1776 = vmatpush1.msra.mxu0 0.0
    %1777 = vmatprep.subr.mxu0 0.0
    %1778 = vmatpush1.msra.mxu0 0.0
    %1779 = vmatprep.subr.mxu0 0.0
    %1780 = vmatpush1.msra.mxu0 0.0
    %1781 = vmatprep.subr.mxu0 0.0
    %1782 = vmatpush1.msra.mxu0 0.0
    %1783 = vmatprep.subr.mxu0 0.0
    %1784 = vmatpush1.msra.mxu0 0.0
    %1785 = vmatprep.mubr.f32.mxu0 0.0
    %1786 = vmatmul.mubr.f32.gmra.mrb[0].mxu0 %v1714
    %v1787 = vpop.f32.mrb[0].mxu0
    %v1788 = vadd.f32 0.0, %v1787
    %v1789 = vpop.f32.mrb[0].mxu0
    %1790 = vmatprep.mubr.f32.mxu0 0.0
    %1791 = vmatmul.mubr.f32.gmra.mrb[0].mxu0 %v1717
    %v1792 = vpop.f32.mrb[0].mxu0
    %v1793 = vadd.f32 0.0, %v1792
    %v1794 = vpop.f32.mrb[0].mxu0
    %1795 = vdwg.mxu0
    %v1796 = vsel %vm346, %v1689, 0.0
    %v1797 = vsel %vm1307, %v1694, 0.0
    %v1798 = vadd.f32 %v1796, %v1797
    %v1799 = vrot.slane %v1798, 4
    %v1800 = vadd.f32 %v1798, %v1799
    %v1801 = vrot.slane %v1800, 2
    %v1802 = vadd.f32 %v1800, %v1801
    %v1803 = vrot.slane %v1802, 1
    %v1804 = vadd.f32 %v1802, %v1803
    %v1805 = vrcp.pop 12.0
    %v1806 = vmul.f32 %v1804, %v1805
    %v1807 = vsel %vm346, %v1788, 0.0
    %v1808 = vsel %vm346, %v1793, 0.0
    %v1809 = vadd.f32 %v1807, %v1808
    %v1810 = vrot.slane %v1809, 4
    %v1811 = vadd.f32 %v1809, %v1810
    %v1812 = vrot.slane %v1811, 2
    %v1813 = vadd.f32 %v1811, %v1812
    %v1814 = vrot.slane %v1813, 1
    %v1815 = vadd.f32 %v1813, %v1814
    %v1816 = vrcp.pop 16.0
    %v1817 = vmul.f32 %v1815, %v1816
    %v1818 = vmul.f32 %v1277, %v1277
    %v1819 = vmul.f32 %v1278, %v1278
    %v1820 = vsel %vm346, %v1818, 0.0
    %1821 = vadd.xlane.f32.xlu0 %v1820
    %v1822 = vpop.xlane.xlu0 %1821
    %v1823 = vsel %vm346, %v1819, 0.0
    %1824 = vadd.xlane.f32.xlu0 %v1823
    %v1825 = vpop.xlane.xlu0 %1824
    %v1826 = vmul.f32 %v1279, %v1279
    %1830 = vrot.lane.b32.xlu0 %v1818, 108
    %v1831 = vpop.permute.xlu0 %1830
    %1832 = vrot.lane.b32.xlu0 %v1819, 108
    %v1833 = vpop.permute.xlu0 %1832
    %1834 = vrot.lane.b32.xlu0 %v1826, 108
    %v1835 = vpop.permute.xlu0 %1834
    %v1839 = vsel %vm346, %v1831, 0.0
    %1840 = vadd.xlane.f32.xlu0 %v1839
    %v1841 = vpop.xlane.xlu0 %1840
    %v1842 = vsel %vm346, %v1833, 0.0
    %1843 = vadd.xlane.f32.xlu0 %v1842
    %v1844 = vpop.xlane.xlu0 %1843
    %v1845 = vsel %vm1307, %v1835, 0.0
    %1846 = vadd.xlane.f32.xlu0 %v1845
    %v1847 = vpop.xlane.xlu0 %1846
    %v1848 = vmul.f32 %v1277, -2.0
    %v1849 = vmul.f32 %v1278, -2.0
    %v1850 = vsel %vm346, %v1848, %v1822
    %v1851 = vsel %vm346, %v1849, %v1825
    %v1852 = vsel %vm1315, %v1850, 1.0
    %v1853 = vsel %vm1315, %v1851, 1.0
    %1857 = vrot.lane.b32.xlu0 %v1277, 108
    %v1858 = vpop.permute.xlu0 %1857
    %1859 = vrot.lane.b32.xlu0 %v1278, 108
    %v1860 = vpop.permute.xlu0 %1859
    %1861 = vrot.lane.b32.xlu0 %v1279, 108
    %v1862 = vpop.permute.xlu0 %1861
    %v1866 = vsel %vm346, %v1858, 1.0
    %v1867 = vsel %vm346, %v1860, 1.0
    %v1868 = vsel %vm346, %v1862, 1.0
    %v1869 = vsel %vm1315, %v1866, %v1841
    %v1870 = vsel %vm1315, %v1867, %v1844
    %v1871 = vsel %vm1315, %v1868, %v1847
    %v1873 = vsel %vm1336, %v1852, 0
    %v1876 = vsel %vm1336, %v1853, 0
    %v1879 = vsel %vm1336, %v1869, 0
    %v1882 = vsel %vm1336, %v1870, 0
    %v1885 = vsel %vm1336, %v1871, 0
    %1887 = vmatprep.subr.mxu0 0.0
    %1888 = vmatpush1.xpose.msra.mxu0 %v1879
    %1889 = vmatprep.subr.mxu0 0.0
    %1890 = vmatpush1.xpose.msra.mxu0 %v1882
    %1891 = vmatprep.subr.mxu0 0.0
    %1892 = vmatpush1.xpose.msra.mxu0 %v1885
    %1893 = vmatprep.subr.mxu0 0.0
    %1894 = vmatpush1.xpose.msra.mxu0 0.0
    %1895 = vmatprep.subr.mxu0 0.0
    %1896 = vmatpush1.xpose.msra.mxu0 0.0
    %1897 = vmatprep.subr.mxu0 0.0
    %1898 = vmatpush1.xpose.msra.mxu0 0.0
    %1899 = vmatprep.subr.mxu0 0.0
    %1900 = vmatpush1.xpose.msra.mxu0 0.0
    %1901 = vmatprep.subr.mxu0 0.0
    %1902 = vmatpush1.xpose.msra.mxu0 0.0
    %1903 = vmatprep.subr.mxu0 0.0
    %1904 = vmatpush1.xpose.msra.mxu0 0.0
    %1905 = vmatprep.subr.mxu0 0.0
    %1906 = vmatpush1.xpose.msra.mxu0 0.0
    %1907 = vmatprep.subr.mxu0 0.0
    %1908 = vmatpush1.xpose.msra.mxu0 0.0
    %1909 = vmatprep.subr.mxu0 0.0
    %1910 = vmatpush1.xpose.msra.mxu0 0.0
    %1911 = vmatprep.subr.mxu0 0.0
    %1912 = vmatpush1.xpose.msra.mxu0 0.0
    %1913 = vmatprep.subr.mxu0 0.0
    %1914 = vmatpush1.xpose.msra.mxu0 0.0
    %1915 = vmatprep.subr.mxu0 0.0
    %1916 = vmatpush1.xpose.msra.mxu0 0.0
    %1917 = vmatprep.subr.mxu0 0.0
    %1918 = vmatpush1.xpose.msra.mxu0 0.0
    %1919 = vmatprep.subr.mxu0 0.0
    %1920 = vmatpush1.xpose.msra.mxu0 0.0
    %1921 = vmatprep.subr.mxu0 0.0
    %1922 = vmatpush1.xpose.msra.mxu0 0.0
    %1923 = vmatprep.subr.mxu0 0.0
    %1924 = vmatpush1.xpose.msra.mxu0 0.0
    %1925 = vmatprep.subr.mxu0 0.0
    %1926 = vmatpush1.xpose.msra.mxu0 0.0
    %1927 = vmatprep.subr.mxu0 0.0
    %1928 = vmatpush1.xpose.msra.mxu0 0.0
    %1929 = vmatprep.subr.mxu0 0.0
    %1930 = vmatpush1.xpose.msra.mxu0 0.0
    %1931 = vmatprep.subr.mxu0 0.0
    %1932 = vmatpush1.xpose.msra.mxu0 0.0
    %1933 = vmatprep.subr.mxu0 0.0
    %1934 = vmatpush1.xpose.msra.mxu0 0.0
    %1935 = vmatprep.subr.mxu0 0.0
    %1936 = vmatpush1.xpose.msra.mxu0 0.0
    %1937 = vmatprep.subr.mxu0 0.0
    %1938 = vmatpush1.xpose.msra.mxu0 0.0
    %1939 = vmatprep.subr.mxu0 0.0
    %1940 = vmatpush1.xpose.msra.mxu0 0.0
    %1941 = vmatprep.subr.mxu0 0.0
    %1942 = vmatpush1.xpose.msra.mxu0 0.0
    %1943 = vmatprep.subr.mxu0 0.0
    %1944 = vmatpush1.xpose.msra.mxu0 0.0
    %1945 = vmatprep.subr.mxu0 0.0
    %1946 = vmatpush1.xpose.msra.mxu0 0.0
    %1947 = vmatprep.subr.mxu0 0.0
    %1948 = vmatpush1.xpose.msra.mxu0 0.0
    %1949 = vmatprep.subr.mxu0 0.0
    %1950 = vmatpush1.xpose.msra.mxu0 0.0
    %1951 = vmatprep.mubr.f32.mxu0 0.0
    %1952 = vmatmul.mubr.f32.gmra.mrb[0].mxu0 %v1873
    %v1953 = vpop.f32.mrb[0].mxu0
    %v1954 = vadd.f32 0.0, %v1953
    %v1955 = vpop.f32.mrb[0].mxu0
    %1956 = vmatprep.mubr.f32.mxu0 0.0
    %1957 = vmatmul.mubr.f32.gmra.mrb[0].mxu0 %v1876
    %v1958 = vpop.f32.mrb[0].mxu0
    %v1959 = vadd.f32 0.0, %v1958
    %v1960 = vpop.f32.mrb[0].mxu0
    %1961 = vdwg.mxu0
    %v1962 = vmul.f32 %v1279, -2.0
    %1966 = vrot.lane.b32.xlu0 %v1848, 108
    %v1967 = vpop.permute.xlu0 %1966
    %1968 = vrot.lane.b32.xlu0 %v1849, 108
    %v1969 = vpop.permute.xlu0 %1968
    %1970 = vrot.lane.b32.xlu0 %v1962, 108
    %v1971 = vpop.permute.xlu0 %1970
    %v1975 = vsel %vm346, %v1967, %v1841
    %v1976 = vsel %vm346, %v1969, %v1844
    %v1977 = vsel %vm346, %v1971, %v1847
    %v1978 = vsel %vm1315, %v1975, 1.0
    %v1979 = vsel %vm1315, %v1976, 1.0
    %v1980 = vsel %vm1315, %v1977, 1.0
    %v1981 = vsel %vm346, %v1277, 1.0
    %v1982 = vsel %vm346, %v1278, 1.0
    %v1983 = vsel %vm1315, %v1981, %v1822
    %v1984 = vsel %vm1315, %v1982, %v1825
    %v1986 = vsel %vm1336, %v1978, 0
    %v1989 = vsel %vm1336, %v1979, 0
    %v1992 = vsel %vm1336, %v1980, 0
    %v1995 = vsel %vm1336, %v1983, 0
    %v1998 = vsel %vm1336, %v1984, 0
    %2000 = vmatprep.subr.mxu0 0.0
    %2001 = vmatpush1.xpose.msra.mxu0 %v1995
    %2002 = vmatprep.subr.mxu0 0.0
    %2003 = vmatpush1.xpose.msra.mxu0 %v1998
    %2004 = vmatprep.subr.mxu0 0.0
    %2005 = vmatpush1.xpose.msra.mxu0 0.0
    %2006 = vmatprep.subr.mxu0 0.0
    %2007 = vmatpush1.xpose.msra.mxu0 0.0
    %2008 = vmatprep.subr.mxu0 0.0
    %2009 = vmatpush1.xpose.msra.mxu0 0.0
    %2010 = vmatprep.subr.mxu0 0.0
    %2011 = vmatpush1.xpose.msra.mxu0 0.0
    %2012 = vmatprep.subr.mxu0 0.0
    %2013 = vmatpush1.xpose.msra.mxu0 0.0
    %2014 = vmatprep.subr.mxu0 0.0
    %2015 = vmatpush1.xpose.msra.mxu0 0.0
    %2016 = vmatprep.subr.mxu0 0.0
    %2017 = vmatpush1.xpose.msra.mxu0 0.0
    %2018 = vmatprep.subr.mxu0 0.0
    %2019 = vmatpush1.xpose.msra.mxu0 0.0
    %2020 = vmatprep.subr.mxu0 0.0
    %2021 = vmatpush1.xpose.msra.mxu0 0.0
    %2022 = vmatprep.subr.mxu0 0.0
    %2023 = vmatpush1.xpose.msra.mxu0 0.0
    %2024 = vmatprep.subr.mxu0 0.0
    %2025 = vmatpush1.xpose.msra.mxu0 0.0
    %2026 = vmatprep.subr.mxu0 0.0
    %2027 = vmatpush1.xpose.msra.mxu0 0.0
    %2028 = vmatprep.subr.mxu0 0.0
    %2029 = vmatpush1.xpose.msra.mxu0 0.0
    %2030 = vmatprep.subr.mxu0 0.0
    %2031 = vmatpush1.xpose.msra.mxu0 0.0
    %2032 = vmatprep.subr.mxu0 0.0
    %2033 = vmatpush1.xpose.msra.mxu0 0.0
    %2034 = vmatprep.subr.mxu0 0.0
    %2035 = vmatpush1.xpose.msra.mxu0 0.0
    %2036 = vmatprep.subr.mxu0 0.0
    %2037 = vmatpush1.xpose.msra.mxu0 0.0
    %2038 = vmatprep.subr.mxu0 0.0
    %2039 = vmatpush1.xpose.msra.mxu0 0.0
    %2040 = vmatprep.subr.mxu0 0.0
    %2041 = vmatpush1.xpose.msra.mxu0 0.0
    %2042 = vmatprep.subr.mxu0 0.0
    %2043 = vmatpush1.xpose.msra.mxu0 0.0
    %2044 = vmatprep.subr.mxu0 0.0
    %2045 = vmatpush1.xpose.msra.mxu0 0.0
    %2046 = vmatprep.subr.mxu0 0.0
    %2047 = vmatpush1.xpose.msra.mxu0 0.0
    %2048 = vmatprep.subr.mxu0 0.0
    %2049 = vmatpush1.xpose.msra.mxu0 0.0
    %2050 = vmatprep.subr.mxu0 0.0
    %2051 = vmatpush1.xpose.msra.mxu0 0.0
    %2052 = vmatprep.subr.mxu0 0.0
    %2053 = vmatpush1.xpose.msra.mxu0 0.0
    %2054 = vmatprep.subr.mxu0 0.0
    %2055 = vmatpush1.xpose.msra.mxu0 0.0
    %2056 = vmatprep.subr.mxu0 0.0
    %2057 = vmatpush1.xpose.msra.mxu0 0.0
    %2058 = vmatprep.subr.mxu0 0.0
    %2059 = vmatpush1.xpose.msra.mxu0 0.0
    %2060 = vmatprep.subr.mxu0 0.0
    %2061 = vmatpush1.xpose.msra.mxu0 0.0
    %2062 = vmatprep.subr.mxu0 0.0
    %2063 = vmatpush1.xpose.msra.mxu0 0.0
    %2064 = vmatprep.mubr.f32.mxu0 0.0
    %2065 = vmatmul.mubr.f32.gmra.mrb[0].mxu0 %v1986
    %v2066 = vpop.f32.mrb[0].mxu0
    %v2067 = vadd.f32 0.0, %v2066
    %v2068 = vpop.f32.mrb[0].mxu0
    %2069 = vmatprep.mubr.f32.mxu0 0.0
    %2070 = vmatmul.mubr.f32.gmra.mrb[0].mxu0 %v1989
    %v2071 = vpop.f32.mrb[0].mxu0
    %v2072 = vadd.f32 0.0, %v2071
    %v2073 = vpop.f32.mrb[0].mxu0
    %2074 = vmatprep.mubr.f32.mxu0 0.0
    %2075 = vmatmul.mubr.f32.gmra.mrb[0].mxu0 %v1992
    %v2076 = vpop.f32.mrb[0].mxu0
    %v2077 = vadd.f32 0.0, %v2076
    %v2078 = vpop.f32.mrb[0].mxu0
    %2079 = vdwg.mxu0
    %v2080 = vmax.f32 %v1954, 0.0
    %v2081 = vmax.f32 %v1959, 0.0
    %v2082 = vrsqrt.pop %v2080
    %v2083 = vmul.f32 %v2080, %v2082
    %vm2084 = vcmp.eq.f32.partialorder %v2080, inf
    %v2085 = vsel %vm2084, %v2080, %v2083
    %vm2086 = vcmp.eq.f32.partialorder %v2080, 0.0
    %v2087 = vand.u32 %v2080, 2147483648
    %v2088 = vsel %vm2086, %v2087, %v2085
    %v2089 = vrsqrt.pop %v2081
    %v2090 = vmul.f32 %v2081, %v2089
    %vm2091 = vcmp.eq.f32.partialorder %v2081, inf
    %v2092 = vsel %vm2091, %v2081, %v2090
    %vm2093 = vcmp.eq.f32.partialorder %v2081, 0.0
    %v2094 = vand.u32 %v2081, 2147483648
    %v2095 = vsel %vm2093, %v2094, %v2092
    %v2096 = vadd.f32 %v2088, 1.0
    %v2097 = vadd.f32 %v2095, 1.0
    %v2098 = vrcp.pop %v2096
    %v2099 = vrcp.pop %v2097
    %v2100 = vmax.f32 %v2067, 0.0
    %v2101 = vmax.f32 %v2072, 0.0
    %v2102 = vmax.f32 %v2077, 0.0
    %v2103 = vrsqrt.pop %v2100
    %v2104 = vmul.f32 %v2100, %v2103
    %vm2105 = vcmp.eq.f32.partialorder %v2100, inf
    %v2106 = vsel %vm2105, %v2100, %v2104
    %vm2107 = vcmp.eq.f32.partialorder %v2100, 0.0
    %v2108 = vand.u32 %v2100, 2147483648
    %v2109 = vsel %vm2107, %v2108, %v2106
    %v2110 = vrsqrt.pop %v2101
    %v2111 = vmul.f32 %v2101, %v2110
    %vm2112 = vcmp.eq.f32.partialorder %v2101, inf
    %v2113 = vsel %vm2112, %v2101, %v2111
    %vm2114 = vcmp.eq.f32.partialorder %v2101, 0.0
    %v2115 = vand.u32 %v2101, 2147483648
    %v2116 = vsel %vm2114, %v2115, %v2113
    %v2117 = vrsqrt.pop %v2102
    %v2118 = vmul.f32 %v2102, %v2117
    %vm2119 = vcmp.eq.f32.partialorder %v2102, inf
    %v2120 = vsel %vm2119, %v2102, %v2118
    %vm2121 = vcmp.eq.f32.partialorder %v2102, 0.0
    %v2122 = vand.u32 %v2102, 2147483648
    %v2123 = vsel %vm2121, %v2122, %v2120
    %v2124 = vadd.f32 %v2109, 1.0
    %v2125 = vadd.f32 %v2116, 1.0
    %v2126 = vadd.f32 %v2123, 1.0
    %v2127 = vrcp.pop %v2124
    %v2128 = vrcp.pop %v2125
    %v2129 = vrcp.pop %v2126
    %v2130 = vsel %vm346, %v2098, 0.0
    %2131 = vadd.xlane.f32.xlu0 %v2130
    %v2132 = vpop.xlane.xlu0 %2131
    %v2133 = vsel %vm346, %v2099, 0.0
    %2134 = vadd.xlane.f32.xlu0 %v2133
    %v2135 = vpop.xlane.xlu0 %2134
    %v2136 = vsel %vm1601, %v2127, 0.0
    %2137 = vadd.xlane.f32.xlu0 %v2136
    %v2138 = vpop.xlane.xlu0 %2137
    %v2139 = vsel %vm1601, %v2128, 0.0
    %2140 = vadd.xlane.f32.xlu0 %v2139
    %v2141 = vpop.xlane.xlu0 %2140
    %v2142 = vsel %vm1608, %v2129, 0.0
    %2143 = vadd.xlane.f32.xlu0 %v2142
    %v2144 = vpop.xlane.xlu0 %2143
    %v2145 = vmul.f32 %v1277, %v2132
    %v2146 = vmul.f32 %v1278, %v2135
    %2147 = vmatprep.subr.mxu0 0.0
    %2148 = vmatpush1.msra.mxu0 %v2145
    %2149 = vmatprep.subr.mxu0 0.0
    %2150 = vmatpush1.msra.mxu0 %v2146
    %2151 = vmatprep.subr.mxu0 0.0
    %2152 = vmatpush1.msra.mxu0 0.0
    %2153 = vmatprep.subr.mxu0 0.0
    %2154 = vmatpush1.msra.mxu0 0.0
    %2155 = vmatprep.subr.mxu0 0.0
    %2156 = vmatpush1.msra.mxu0 0.0
    %2157 = vmatprep.subr.mxu0 0.0
    %2158 = vmatpush1.msra.mxu0 0.0
    %2159 = vmatprep.subr.mxu0 0.0
    %2160 = vmatpush1.msra.mxu0 0.0
    %2161 = vmatprep.subr.mxu0 0.0
    %2162 = vmatpush1.msra.mxu0 0.0
    %2163 = vmatprep.subr.mxu0 0.0
    %2164 = vmatpush1.msra.mxu0 0.0
    %2165 = vmatprep.subr.mxu0 0.0
    %2166 = vmatpush1.msra.mxu0 0.0
    %2167 = vmatprep.subr.mxu0 0.0
    %2168 = vmatpush1.msra.mxu0 0.0
    %2169 = vmatprep.subr.mxu0 0.0
    %2170 = vmatpush1.msra.mxu0 0.0
    %2171 = vmatprep.subr.mxu0 0.0
    %2172 = vmatpush1.msra.mxu0 0.0
    %2173 = vmatprep.subr.mxu0 0.0
    %2174 = vmatpush1.msra.mxu0 0.0
    %2175 = vmatprep.subr.mxu0 0.0
    %2176 = vmatpush1.msra.mxu0 0.0
    %2177 = vmatprep.subr.mxu0 0.0
    %2178 = vmatpush1.msra.mxu0 0.0
    %2179 = vmatprep.subr.mxu0 0.0
    %2180 = vmatpush1.msra.mxu0 0.0
    %2181 = vmatprep.subr.mxu0 0.0
    %2182 = vmatpush1.msra.mxu0 0.0
    %2183 = vmatprep.subr.mxu0 0.0
    %2184 = vmatpush1.msra.mxu0 0.0
    %2185 = vmatprep.subr.mxu0 0.0
    %2186 = vmatpush1.msra.mxu0 0.0
    %2187 = vmatprep.subr.mxu0 0.0
    %2188 = vmatpush1.msra.mxu0 0.0
    %2189 = vmatprep.subr.mxu0 0.0
    %2190 = vmatpush1.msra.mxu0 0.0
    %2191 = vmatprep.subr.mxu0 0.0
    %2192 = vmatpush1.msra.mxu0 0.0
    %2193 = vmatprep.subr.mxu0 0.0
    %2194 = vmatpush1.msra.mxu0 0.0
    %2195 = vmatprep.subr.mxu0 0.0
    %2196 = vmatpush1.msra.mxu0 0.0
    %2197 = vmatprep.subr.mxu0 0.0
    %2198 = vmatpush1.msra.mxu0 0.0
    %2199 = vmatprep.subr.mxu0 0.0
    %2200 = vmatpush1.msra.mxu0 0.0
    %2201 = vmatprep.subr.mxu0 0.0
    %2202 = vmatpush1.msra.mxu0 0.0
    %2203 = vmatprep.subr.mxu0 0.0
    %2204 = vmatpush1.msra.mxu0 0.0
    %2205 = vmatprep.subr.mxu0 0.0
    %2206 = vmatpush1.msra.mxu0 0.0
    %2207 = vmatprep.subr.mxu0 0.0
    %2208 = vmatpush1.msra.mxu0 0.0
    %2209 = vmatprep.subr.mxu0 0.0
    %2210 = vmatpush1.msra.mxu0 0.0
    %2211 = vmatprep.mubr.f32.mxu0 0.0
    %2212 = vmatmul.mubr.f32.gmra.mrb[0].mxu0 %v1617
    %v2213 = vpop.f32.mrb[0].mxu0
    %v2214 = vadd.f32 0.0, %v2213
    %v2215 = vpop.f32.mrb[0].mxu0
    %2216 = vmatprep.mubr.f32.mxu0 0.0
    %2217 = vmatmul.mubr.f32.gmra.mrb[0].mxu0 %v1620
    %v2218 = vpop.f32.mrb[0].mxu0
    %v2219 = vadd.f32 0.0, %v2218
    %v2220 = vpop.f32.mrb[0].mxu0
    %2221 = vdwg.mxu0
    %v2222 = vmul.f32 %v1277, %v2138
    %v2223 = vmul.f32 %v1278, %v2141
    %v2224 = vmul.f32 %v1279, %v2144
    %2228 = vrot.lane.b32.xlu0 %v2222, 108
    %v2229 = vpop.permute.xlu0 %2228
    %2230 = vrot.lane.b32.xlu0 %v2223, 108
    %v2231 = vpop.permute.xlu0 %2230
    %2232 = vrot.lane.b32.xlu0 %v2224, 108
    %v2233 = vpop.permute.xlu0 %2232
    %v2236 = vsel %vm180, %v2233, 0
    %2238 = vmatprep.subr.mxu0 0.0
    %2239 = vmatpush1.msra.mxu0 %v2229
    %2240 = vmatprep.subr.mxu0 0.0
    %2241 = vmatpush1.msra.mxu0 %v2231
    %2242 = vmatprep.subr.mxu0 0.0
    %2243 = vmatpush1.msra.mxu0 %v2236
    %2244 = vmatprep.subr.mxu0 0.0
    %2245 = vmatpush1.msra.mxu0 0.0
    %2246 = vmatprep.subr.mxu0 0.0
    %2247 = vmatpush1.msra.mxu0 0.0
    %2248 = vmatprep.subr.mxu0 0.0
    %2249 = vmatpush1.msra.mxu0 0.0
    %2250 = vmatprep.subr.mxu0 0.0
    %2251 = vmatpush1.msra.mxu0 0.0
    %2252 = vmatprep.subr.mxu0 0.0
    %2253 = vmatpush1.msra.mxu0 0.0
    %2254 = vmatprep.subr.mxu0 0.0
    %2255 = vmatpush1.msra.mxu0 0.0
    %2256 = vmatprep.subr.mxu0 0.0
    %2257 = vmatpush1.msra.mxu0 0.0
    %2258 = vmatprep.subr.mxu0 0.0
    %2259 = vmatpush1.msra.mxu0 0.0
    %2260 = vmatprep.subr.mxu0 0.0
    %2261 = vmatpush1.msra.mxu0 0.0
    %2262 = vmatprep.subr.mxu0 0.0
    %2263 = vmatpush1.msra.mxu0 0.0
    %2264 = vmatprep.subr.mxu0 0.0
    %2265 = vmatpush1.msra.mxu0 0.0
    %2266 = vmatprep.subr.mxu0 0.0
    %2267 = vmatpush1.msra.mxu0 0.0
    %2268 = vmatprep.subr.mxu0 0.0
    %2269 = vmatpush1.msra.mxu0 0.0
    %2270 = vmatprep.subr.mxu0 0.0
    %2271 = vmatpush1.msra.mxu0 0.0
    %2272 = vmatprep.subr.mxu0 0.0
    %2273 = vmatpush1.msra.mxu0 0.0
    %2274 = vmatprep.subr.mxu0 0.0
    %2275 = vmatpush1.msra.mxu0 0.0
    %2276 = vmatprep.subr.mxu0 0.0
    %2277 = vmatpush1.msra.mxu0 0.0
    %2278 = vmatprep.subr.mxu0 0.0
    %2279 = vmatpush1.msra.mxu0 0.0
    %2280 = vmatprep.subr.mxu0 0.0
    %2281 = vmatpush1.msra.mxu0 0.0
    %2282 = vmatprep.subr.mxu0 0.0
    %2283 = vmatpush1.msra.mxu0 0.0
    %2284 = vmatprep.subr.mxu0 0.0
    %2285 = vmatpush1.msra.mxu0 0.0
    %2286 = vmatprep.subr.mxu0 0.0
    %2287 = vmatpush1.msra.mxu0 0.0
    %2288 = vmatprep.subr.mxu0 0.0
    %2289 = vmatpush1.msra.mxu0 0.0
    %2290 = vmatprep.subr.mxu0 0.0
    %2291 = vmatpush1.msra.mxu0 0.0
    %2292 = vmatprep.subr.mxu0 0.0
    %2293 = vmatpush1.msra.mxu0 0.0
    %2294 = vmatprep.subr.mxu0 0.0
    %2295 = vmatpush1.msra.mxu0 0.0
    %2296 = vmatprep.subr.mxu0 0.0
    %2297 = vmatpush1.msra.mxu0 0.0
    %2298 = vmatprep.subr.mxu0 0.0
    %2299 = vmatpush1.msra.mxu0 0.0
    %2300 = vmatprep.subr.mxu0 0.0
    %2301 = vmatpush1.msra.mxu0 0.0
    %2302 = vmatprep.mubr.f32.mxu0 0.0
    %2303 = vmatmul.mubr.f32.gmra.mrb[0].mxu0 %v1714
    %v2304 = vpop.f32.mrb[0].mxu0
    %v2305 = vadd.f32 0.0, %v2304
    %v2306 = vpop.f32.mrb[0].mxu0
    %2307 = vmatprep.mubr.f32.mxu0 0.0
    %2308 = vmatmul.mubr.f32.gmra.mrb[0].mxu0 %v1717
    %v2309 = vpop.f32.mrb[0].mxu0
    %v2310 = vadd.f32 0.0, %v2309
    %v2311 = vpop.f32.mrb[0].mxu0
    %2312 = vdwg.mxu0
    %v2313 = vsel %vm346, %v2214, 0.0
    %v2314 = vsel %vm1307, %v2219, 0.0
    %v2315 = vadd.f32 %v2313, %v2314
    %v2316 = vrot.slane %v2315, 4
    %v2317 = vadd.f32 %v2315, %v2316
    %v2318 = vrot.slane %v2317, 2
    %v2319 = vadd.f32 %v2317, %v2318
    %v2320 = vrot.slane %v2319, 1
    %v2321 = vadd.f32 %v2319, %v2320
    %v2322 = vmul.f32 %v2321, %v1805
    %v2323 = vsel %vm346, %v2305, 0.0
    %v2324 = vsel %vm346, %v2310, 0.0
    %v2325 = vadd.f32 %v2323, %v2324
    %v2326 = vrot.slane %v2325, 4
    %v2327 = vadd.f32 %v2325, %v2326
    %v2328 = vrot.slane %v2327, 2
    %v2329 = vadd.f32 %v2327, %v2328
    %v2330 = vrot.slane %v2329, 1
    %v2331 = vadd.f32 %v2329, %v2330
    %v2332 = vmul.f32 %v2331, %v1816
    %v2333 = vsel %vm174, %v1806, %v2322
    %v2334 = vsel %vm174, %v1817, %v2332
    %v2335 = vld [vmem:[%s8] sm:$0xff]
    %v2336 = vld [vmem:[%s8 + $0x8] sm:$0xff]
    %v2337 = vld [vmem:[%s8 + $0x10] sm:$0xf]
    %v2338 = vld [vmem:[%s9] sm:$0xff]
    %v2339 = vld [vmem:[%s9 + $0x8] sm:$0xff]
    %v2340 = vld [vmem:[%s9 + $0x10] sm:$0xf]
    %v2342 = vsel %vm346, %v2334, 0
    %v2345 = vsel %vm180, %v2340, 0
    %2347 = vmatprep.subr.mxu0 0.0
    %2348 = vmatpush1.msra.mxu0 %v2338
    %2349 = vmatprep.subr.mxu0 0.0
    %2350 = vmatpush1.msra.mxu0 %v2339
    %2351 = vmatprep.subr.mxu0 0.0
    %2352 = vmatpush1.msra.mxu0 %v2345
    %2353 = vmatprep.subr.mxu0 0.0
    %2354 = vmatpush1.msra.mxu0 0.0
    %2355 = vmatprep.subr.mxu0 0.0
    %2356 = vmatpush1.msra.mxu0 0.0
    %2357 = vmatprep.subr.mxu0 0.0
    %2358 = vmatpush1.msra.mxu0 0.0
    %2359 = vmatprep.subr.mxu0 0.0
    %2360 = vmatpush1.msra.mxu0 0.0
    %2361 = vmatprep.subr.mxu0 0.0
    %2362 = vmatpush1.msra.mxu0 0.0
    %2363 = vmatprep.subr.mxu0 0.0
    %2364 = vmatpush1.msra.mxu0 0.0
    %2365 = vmatprep.subr.mxu0 0.0
    %2366 = vmatpush1.msra.mxu0 0.0
    %2367 = vmatprep.subr.mxu0 0.0
    %2368 = vmatpush1.msra.mxu0 0.0
    %2369 = vmatprep.subr.mxu0 0.0
    %2370 = vmatpush1.msra.mxu0 0.0
    %2371 = vmatprep.subr.mxu0 0.0
    %2372 = vmatpush1.msra.mxu0 0.0
    %2373 = vmatprep.subr.mxu0 0.0
    %2374 = vmatpush1.msra.mxu0 0.0
    %2375 = vmatprep.subr.mxu0 0.0
    %2376 = vmatpush1.msra.mxu0 0.0
    %2377 = vmatprep.subr.mxu0 0.0
    %2378 = vmatpush1.msra.mxu0 0.0
    %2379 = vmatprep.subr.mxu0 0.0
    %2380 = vmatpush1.msra.mxu0 0.0
    %2381 = vmatprep.subr.mxu0 0.0
    %2382 = vmatpush1.msra.mxu0 0.0
    %2383 = vmatprep.subr.mxu0 0.0
    %2384 = vmatpush1.msra.mxu0 0.0
    %2385 = vmatprep.subr.mxu0 0.0
    %2386 = vmatpush1.msra.mxu0 0.0
    %2387 = vmatprep.subr.mxu0 0.0
    %2388 = vmatpush1.msra.mxu0 0.0
    %2389 = vmatprep.subr.mxu0 0.0
    %2390 = vmatpush1.msra.mxu0 0.0
    %2391 = vmatprep.subr.mxu0 0.0
    %2392 = vmatpush1.msra.mxu0 0.0
    %2393 = vmatprep.subr.mxu0 0.0
    %2394 = vmatpush1.msra.mxu0 0.0
    %2395 = vmatprep.subr.mxu0 0.0
    %2396 = vmatpush1.msra.mxu0 0.0
    %2397 = vmatprep.subr.mxu0 0.0
    %2398 = vmatpush1.msra.mxu0 0.0
    %2399 = vmatprep.subr.mxu0 0.0
    %2400 = vmatpush1.msra.mxu0 0.0
    %2401 = vmatprep.subr.mxu0 0.0
    %2402 = vmatpush1.msra.mxu0 0.0
    %2403 = vmatprep.subr.mxu0 0.0
    %2404 = vmatpush1.msra.mxu0 0.0
    %2405 = vmatprep.subr.mxu0 0.0
    %2406 = vmatpush1.msra.mxu0 0.0
    %2407 = vmatprep.subr.mxu0 0.0
    %2408 = vmatpush1.msra.mxu0 0.0
    %2409 = vmatprep.subr.mxu0 0.0
    %2410 = vmatpush1.msra.mxu0 0.0
    %2411 = vmatprep.mubr.f32.mxu0 0.0
    %2412 = vmatmul.mubr.f32.gmra.mrb[0].mxu0 %v2342
    %v2413 = vpop.f32.mrb[0].mxu0
    %v2414 = vadd.f32 0.0, %v2413
    %v2415 = vpop.f32.mrb[0].mxu0
    %2416 = vdwg.mxu0
    %v2418 = vsel %vm346, %v2333, 0
    %v2421 = vsel %vm180, %v2337, 0
    %2423 = vmatprep.subr.mxu0 0.0
    %2424 = vmatpush1.msra.mxu0 %v2335
    %2425 = vmatprep.subr.mxu0 0.0
    %2426 = vmatpush1.msra.mxu0 %v2336
    %2427 = vmatprep.subr.mxu0 0.0
    %2428 = vmatpush1.msra.mxu0 %v2421
    %2429 = vmatprep.subr.mxu0 0.0
    %2430 = vmatpush1.msra.mxu0 0.0
    %2431 = vmatprep.subr.mxu0 0.0
    %2432 = vmatpush1.msra.mxu0 0.0
    %2433 = vmatprep.subr.mxu0 0.0
    %2434 = vmatpush1.msra.mxu0 0.0
    %2435 = vmatprep.subr.mxu0 0.0
    %2436 = vmatpush1.msra.mxu0 0.0
    %2437 = vmatprep.subr.mxu0 0.0
    %2438 = vmatpush1.msra.mxu0 0.0
    %2439 = vmatprep.subr.mxu0 0.0
    %2440 = vmatpush1.msra.mxu0 0.0
    %2441 = vmatprep.subr.mxu0 0.0
    %2442 = vmatpush1.msra.mxu0 0.0
    %2443 = vmatprep.subr.mxu0 0.0
    %2444 = vmatpush1.msra.mxu0 0.0
    %2445 = vmatprep.subr.mxu0 0.0
    %2446 = vmatpush1.msra.mxu0 0.0
    %2447 = vmatprep.subr.mxu0 0.0
    %2448 = vmatpush1.msra.mxu0 0.0
    %2449 = vmatprep.subr.mxu0 0.0
    %2450 = vmatpush1.msra.mxu0 0.0
    %2451 = vmatprep.subr.mxu0 0.0
    %2452 = vmatpush1.msra.mxu0 0.0
    %2453 = vmatprep.subr.mxu0 0.0
    %2454 = vmatpush1.msra.mxu0 0.0
    %2455 = vmatprep.subr.mxu0 0.0
    %2456 = vmatpush1.msra.mxu0 0.0
    %2457 = vmatprep.subr.mxu0 0.0
    %2458 = vmatpush1.msra.mxu0 0.0
    %2459 = vmatprep.subr.mxu0 0.0
    %2460 = vmatpush1.msra.mxu0 0.0
    %2461 = vmatprep.subr.mxu0 0.0
    %2462 = vmatpush1.msra.mxu0 0.0
    %2463 = vmatprep.subr.mxu0 0.0
    %2464 = vmatpush1.msra.mxu0 0.0
    %2465 = vmatprep.subr.mxu0 0.0
    %2466 = vmatpush1.msra.mxu0 0.0
    %2467 = vmatprep.subr.mxu0 0.0
    %2468 = vmatpush1.msra.mxu0 0.0
    %2469 = vmatprep.subr.mxu0 0.0
    %2470 = vmatpush1.msra.mxu0 0.0
    %2471 = vmatprep.subr.mxu0 0.0
    %2472 = vmatpush1.msra.mxu0 0.0
    %2473 = vmatprep.subr.mxu0 0.0
    %2474 = vmatpush1.msra.mxu0 0.0
    %2475 = vmatprep.subr.mxu0 0.0
    %2476 = vmatpush1.msra.mxu0 0.0
    %2477 = vmatprep.subr.mxu0 0.0
    %2478 = vmatpush1.msra.mxu0 0.0
    %2479 = vmatprep.subr.mxu0 0.0
    %2480 = vmatpush1.msra.mxu0 0.0
    %2481 = vmatprep.subr.mxu0 0.0
    %2482 = vmatpush1.msra.mxu0 0.0
    %2483 = vmatprep.subr.mxu0 0.0
    %2484 = vmatpush1.msra.mxu0 0.0
    %2485 = vmatprep.subr.mxu0 0.0
    %2486 = vmatpush1.msra.mxu0 0.0
    %2487 = vmatprep.mubr.f32.mxu0 0.0
    %2488 = vmatmul.mubr.f32.gmra.mrb[0].mxu0 %v2418
    %v2489 = vpop.f32.mrb[0].mxu0
    %v2490 = vadd.f32 %v2414, %v2489
    %v2491 = vpop.f32.mrb[0].mxu0
    %2492 = vdwg.mxu0
    %v2493 = vld [vmem:[%s10] sm:$0x1]
    %v2495 = vlaneseq
    %v2496 = vshrl.u32 %v2495, 7
    %v2497 = vsub.s32 0, %v2496
    %v2498 = vrot.slane %v2493, %v2497
    %v2500 = vadd.f32 %v2490, %v2498
    %vm2501 = vcmask 9216
    %2502 = vst.msk [vmem:[#allocation9] sm:$0x3] %vm2501, %v2500
    // Predicated region
    $region58: #{tpu_custom_call.1} parent=1 // pred_check
      _
    $region59: #{tpu_custom_call.1} parent=1 // pred_check_branch
      %2504 = sbr.rel (0) target = $region61
    $region60: #{tpu_custom_call.1} parent=1 // pred_region
      %s2506 = ssub.s32 32, 32
      %2507 = vsyncadd [#allocation4], %s2506
      %s2509 = sshll.u32 [#allocation9], 4
      %s2510 = int_to_ptr.vmem [resolvable:$true] %s2509
      %2512 = dma.vmem_to_hbm [thread:$0]  %s2510, 32, %s11, [#allocation4]
    $region61: #{tpu_custom_call.1} parent=1 // pred_fallthru
      _
    // Predicated region
    $region62: #{tpu_custom_call.1} parent=1 // pred_check
      _
    $region63: #{tpu_custom_call.1} parent=1 // pred_check_branch
      %2514 = sbr.rel (0) target = $region65
    $region64: #{tpu_custom_call.1} parent=1 // pred_region
      %2515 = dma.done [#allocation4], 32
    $region65: #{tpu_custom_call.1} parent=1 // pred_fallthru
      _
    %2516 = vsyncpa [#allocation3], 1
    %2517 = vsyncpa [#allocation4], 1
    %2518 = vsyncpa [#allocation5], 1
    %2519 = vsyncpa [#allocation7], 1

</llo_original>
